<compile_context>
chip_gen: v6e
topology: v6e:2x2x1
jax: 0.10.0
libtpu: 0.0.40
codegen_flags: <defaults>
</compile_context>

<pallas_src>
import functools

import jax
import jax.numpy as jnp
from jax import lax
from jax.experimental import pallas as pl
from jax.experimental.pallas import tpu as pltpu


# ------------------------------- kernel --------------------------------------


def bottleneck_kernel(x_ref, xtop_ref, xbot_ref,
                      w1_ref, b1_ref, w2_ref, b2_ref, w3_ref, b3_ref,
                      out_ref, halo_ref, *, TH, W, Cin, width, Cout):
    t = pl.program_id(1)
    last = pl.num_programs(1) - 1

    w1 = w1_ref[...]                                   # (Cin, width) bf16, BN scale folded
    b1 = b1_ref[...]                                   # (1, width) f32

    # ---- conv1 (1x1) + bn1 + relu on the main rows; cast to bf16 once ---------------
    x_main = x_ref[0].reshape(TH * W, Cin)             # bf16 straight from HBM
    h1_main = jnp.maximum(
        jnp.dot(x_main, w1, preferred_element_type=jnp.float32) + b1, 0.0)
    h1_main = h1_main.astype(jnp.bfloat16).reshape(TH, W, width)

    # ---- conv1 on the halo rows, only where they lie inside the image ---------------
    @pl.when(t > 0)
    def _():
        h = jnp.dot(xtop_ref[0, 0], w1, preferred_element_type=jnp.float32) + b1
        halo_ref[0] = jnp.maximum(h, 0.0).astype(jnp.bfloat16)

    @pl.when(t == 0)
    def _():
        halo_ref[0] = jnp.zeros((W, width), jnp.bfloat16)

    @pl.when(t < last)
    def _():
        h = jnp.dot(xbot_ref[0, 0], w1, preferred_element_type=jnp.float32) + b1
        halo_ref[1] = jnp.maximum(h, 0.0).astype(jnp.bfloat16)

    @pl.when(t == last)
    def _():
        halo_ref[1] = jnp.zeros((W, width), jnp.bfloat16)

    # ---- conv2 (3x3, stride 1, pad 1) + bn2 + relu as 9 accumulated MXU matmuls -----
    halos = halo_ref[...]                                                # (2, W, width) bf16
    h1_rows = jnp.concatenate([halos[0:1], h1_main, halos[1:2]], axis=0)  # (TH+2, W, width)
    zcol = jnp.zeros((TH + 2, 1, width), jnp.bfloat16)
    h1_pad = jnp.concatenate([zcol, h1_rows, zcol], axis=1)              # (TH+2, W+2, width)

    acc = jnp.zeros((TH * W, width), jnp.float32)
    for ky in range(3):
        for kx in range(3):
            patch = h1_pad[ky:ky + TH, kx:kx + W, :].reshape(TH * W, width)
            acc = acc + jnp.dot(patch, w2_ref[ky * 3 + kx],
                                preferred_element_type=jnp.float32)
    h2 = jnp.maximum(acc + b2_ref[...], 0.0)                             # (TH*W, width) f32

    # ---- conv3 (1x1) + bn3 -----------------------------------------------------------
    h3 = jnp.dot(h2.astype(jnp.bfloat16), w3_ref[...],
                 preferred_element_type=jnp.float32) + b3_ref[...]       # (TH*W, Cout) f32

    # ---- residual add (f32) + relu; store bf16 ---------------------------------------
    x_res = x_ref[0].reshape(TH * W, Cout).astype(jnp.float32)           # identity: Cin == Cout
    out = jnp.maximum(h3 + x_res, 0.0)
    out_ref[0] = out.reshape(TH, W, Cout).astype(out_ref.dtype)


# ------------------------------ tile sizing -----------------------------------


def _vmem_capacity_bytes():
    try:
        return int(pltpu.get_tpu_info().vmem_capacity_bytes)
    except Exception:
        return 64 << 20   # conservative fallback (v7x per-TensorCore VMEM)


def _tile_vmem_estimate(TH, W, Cin, width, Cout):
    # Rough per-step working set: double-buffered bf16 x/out tiles + halo rows,
    # f32/bf16 h1/h2/h3 temporaries, a few live bf16 conv2 slices, resident weights.
    act = TH * W * (4 * Cin + 16 * Cout + 32 * width)
    weights = 4 * (Cin * width + 9 * width * width + width * Cout)
    return act + weights + (2 << 20)


def _pick_block_rows(N, H, W, Cin, width, Cout, vmem_cap):
    budget = int(0.5 * vmem_cap)
    candidates = [d for d in range(1, H + 1)
                  if H % d == 0 and _tile_vmem_estimate(d, W, Cin, width, Cout) <= budget]
    if not candidates:
        return 1

    def score(d):
        n_tiles = H // d
        sublane_ok = (d * W) % 8 == 0            # keep (TH*W, C) reshapes cheap
        parallel_ok = (N * n_tiles) % 2 == 0     # keep both v7x TensorCores busy
        return (sublane_ok, parallel_ok, d)      # then the biggest tile that fits

    return max(candidates, key=score)


# ------------------------------- wrapper --------------------------------------


def bottleneck_forward_nhwc(x_nhwc, params, block_rows=None):
    """x_nhwc: (N, H, W, Cin) bfloat16. Returns (N, H, W, Cout) bfloat16."""
    N, H, W, Cin = x_nhwc.shape
    w1, b1, w2, b2, w3, b3 = params
    width = w1.shape[1]
    Cout = w3.shape[1]
    assert Cin == Cout, "downsample is None => inplanes must equal planes*4"

    vmem_cap = _vmem_capacity_bytes()
    TH = (_pick_block_rows(N, H, W, Cin, width, Cout, vmem_cap)
          if block_rows is None else block_rows)
    assert H % TH == 0
    n_tiles = H // TH

    est = _tile_vmem_estimate(TH, W, Cin, width, Cout)
    vmem_limit = int(min(0.9 * vmem_cap, max(2 * est, 64 << 20)))

    def full(a):
        return pl.BlockSpec(a.shape, lambda n, t: (0,) * a.ndim)

    kernel = functools.partial(bottleneck_kernel, TH=TH, W=W,
                               Cin=Cin, width=width, Cout=Cout)

    return pl.pallas_call(
        kernel,
        out_shape=jax.ShapeDtypeStruct((N, H, W, Cout), jnp.bfloat16),
        grid_spec=pltpu.PrefetchScalarGridSpec(
            num_scalar_prefetch=0,
            grid=(N, n_tiles),
            in_specs=[
                # main row tile of x
                pl.BlockSpec((1, TH, W, Cin), lambda n, t: (n, t, 0, 0)),
                # top / bottom halo rows (clamped at the image border, masked in-kernel)
                pl.BlockSpec((1, 1, W, Cin),
                             lambda n, t: (n, jnp.maximum(t * TH - 1, 0), 0, 0)),
                pl.BlockSpec((1, 1, W, Cin),
                             lambda n, t: (n, jnp.minimum((t + 1) * TH, H - 1), 0, 0)),
                # weights / biases: resident across the grid (constant block index)
                full(w1), full(b1), full(w2), full(b2), full(w3), full(b3),
            ],
            out_specs=pl.BlockSpec((1, TH, W, Cout), lambda n, t: (n, t, 0, 0)),
            scratch_shapes=[pltpu.VMEM((2, W, width), jnp.bfloat16)],
        ),
        compiler_params=pltpu.CompilerParams(
            dimension_semantics=("parallel", "parallel"),
            vmem_limit_bytes=vmem_limit),
    )(x_nhwc, x_nhwc, x_nhwc, w1, b1, w2, b2, w3, b3)


# ---------------- parameter construction (deterministic) ----------------


def make_bn_fold(key, c, eps=1e-5):
    k1, k2, k3, k4 = jax.random.split(key, 4)
    gamma = jax.random.uniform(k1, (c,), jnp.float32, 0.5, 1.5)
    beta = jax.random.uniform(k2, (c,), jnp.float32, -0.1, 0.1)
    mean = jax.random.uniform(k3, (c,), jnp.float32, -0.1, 0.1)
    var = jax.random.uniform(k4, (c,), jnp.float32, 0.5, 1.5)
    scale = gamma / jnp.sqrt(var + eps)
    bias = beta - mean * scale
    return scale, bias, (gamma, beta, mean, var)


def make_params(key, inplanes, planes, base_width=64, groups=1):
    expansion = 4
    width = int(planes * (base_width / 64.0)) * groups
    cout = planes * expansion
    keys = jax.random.split(key, 6)
    # PyTorch conv weight layout is OIHW; build there, re-layout for the kernel.
    w1_oihw = 0.1 * jax.random.normal(keys[0], (width, inplanes, 1, 1), jnp.float32)
    w2_oihw = 0.1 * jax.random.normal(keys[1], (width, width, 3, 3), jnp.float32)
    w3_oihw = 0.1 * jax.random.normal(keys[2], (cout, width, 1, 1), jnp.float32)
    s1, b1, bn1_raw = make_bn_fold(keys[3], width)
    s2, b2, bn2_raw = make_bn_fold(keys[4], width)
    s3, b3, bn3_raw = make_bn_fold(keys[5], cout)

    # kernel layouts: BN scale folded into output-channel columns; bf16 for the MXU
    w1 = (jnp.transpose(w1_oihw[:, :, 0, 0], (1, 0)) * s1[None, :]).astype(jnp.bfloat16)
    w2_hwio = jnp.transpose(w2_oihw, (2, 3, 1, 0))                       # (3, 3, in, out)
    w2 = (w2_hwio * s2[None, None, None, :]).reshape(9, width, width).astype(jnp.bfloat16)
    w3 = (jnp.transpose(w3_oihw[:, :, 0, 0], (1, 0)) * s3[None, :]).astype(jnp.bfloat16)

    kernel_params = (w1, b1.reshape(1, -1), w2, b2.reshape(1, -1), w3, b3.reshape(1, -1))
    ref_params = (w1_oihw, bn1_raw, w2_oihw, bn2_raw, w3_oihw, bn3_raw)
    return kernel_params, ref_params


# ---------------- pure-JAX reference (mirrors PyTorch NCHW, f32) --------------


def bn_ref(x, raw, eps=1e-5):
    gamma, beta, mean, var = raw
    g = gamma.reshape(1, -1, 1, 1)
    b = beta.reshape(1, -1, 1, 1)
    m = mean.reshape(1, -1, 1, 1)
    v = var.reshape(1, -1, 1, 1)
    return (x - m) / jnp.sqrt(v + eps) * g + b


def bottleneck_ref(x, ref_params):
    w1, bn1, w2, bn2, w3, bn3 = ref_params
    dn = ('NCHW', 'OIHW', 'NCHW')
    out = lax.conv_general_dilated(x, w1, (1, 1), 'VALID', dimension_numbers=dn)
    out = jnp.maximum(bn_ref(out, bn1), 0.0)
    out = lax.conv_general_dilated(out, w2, (1, 1), ((1, 1), (1, 1)),
                                   dimension_numbers=dn)
    out = jnp.maximum(bn_ref(out, bn2), 0.0)
    out = lax.conv_general_dilated(out, w3, (1, 1), 'VALID', dimension_numbers=dn)
    out = bn_ref(out, bn3)
    return jnp.maximum(out + x, 0.0)


if __name__ == "__main__":
    # small shapes: inplanes=16, planes=4 -> width=4, out_channels=16, H=W=16
    N, inplanes, planes, H, W = 2, 16, 4, 16, 16

    key = jax.random.PRNGKey(0)
    kx_, kp = jax.random.split(key)
    x = jax.random.normal(kx_, (N, inplanes, H, W), jnp.float32)   # NCHW like the module

    kernel_params, ref_params = make_params(kp, inplanes, planes)

    # boundary transpose + bf16 cast only for the test; a real NHWC/bf16 pipeline
    # would feed the kernel directly.
    x_nhwc = jnp.transpose(x, (0, 2, 3, 1)).astype(jnp.bfloat16)
    out_nhwc = bottleneck_forward_nhwc(x_nhwc, kernel_params)
    out = jnp.transpose(out_nhwc.astype(jnp.float32), (0, 3, 1, 2))
    out = jax.block_until_ready(out)

    ref = jax.block_until_ready(bottleneck_ref(x, ref_params))
    assert out.shape == ref.shape == (N, planes * 4, H, W)
    # bf16 activations/weights with f32 accumulation -> bf16-appropriate tolerance
    max_err = jnp.max(jnp.abs(out - ref))
    assert jnp.allclose(out, ref, rtol=5e-2, atol=5e-2), f"max abs err {max_err}"

    print("KERNEL_OK")
</pallas_src>

<mosaic_0001>
module attributes {stable_mosaic.version = 11 : i64} {
  func.func @bottleneck_kernel(%arg0: i32, %arg1: i32, %arg2: memref<1x16x16x16xbf16, #tpu.memory_space<vmem>>, %arg3: memref<1x1x16x16xbf16, #tpu.memory_space<vmem>>, %arg4: memref<1x1x16x16xbf16, #tpu.memory_space<vmem>>, %arg5: memref<16x4xbf16, #tpu.memory_space<vmem>>, %arg6: memref<1x4xf32, #tpu.memory_space<vmem>>, %arg7: memref<9x4x4xbf16, #tpu.memory_space<vmem>>, %arg8: memref<1x4xf32, #tpu.memory_space<vmem>>, %arg9: memref<4x16xbf16, #tpu.memory_space<vmem>>, %arg10: memref<1x16xf32, #tpu.memory_space<vmem>>, %arg11: memref<1x16x16x16xbf16, #tpu.memory_space<vmem>>, %arg12: memref<2x16x4xbf16, #tpu.memory_space<vmem>>) attributes {dimension_semantics = [#tpu.dimension_semantics<parallel>, #tpu.dimension_semantics<parallel>], iteration_bounds = array<i64: 2, 1>, scalar_prefetch = 0 : i64, scratch_operands = 1 : i64, tpu.core_type = #tpu.core_type<tc>, window_params = [{transform_indices = @transform_0, window_bounds = array<i64: 1, 16, 16, 16>}, {transform_indices = @transform_1, window_bounds = array<i64: 1, 1, 16, 16>}, {transform_indices = @transform_2, window_bounds = array<i64: 1, 1, 16, 16>}, {pipeline_mode = #tpu.pipeline_mode<synchronous>, transform_indices = @transform_3, window_bounds = array<i64: 16, 4>}, {pipeline_mode = #tpu.pipeline_mode<synchronous>, transform_indices = @transform_4, window_bounds = array<i64: 1, 4>}, {pipeline_mode = #tpu.pipeline_mode<synchronous>, transform_indices = @transform_5, window_bounds = array<i64: 9, 4, 4>}, {pipeline_mode = #tpu.pipeline_mode<synchronous>, transform_indices = @transform_6, window_bounds = array<i64: 1, 4>}, {pipeline_mode = #tpu.pipeline_mode<synchronous>, transform_indices = @transform_7, window_bounds = array<i64: 4, 16>}, {pipeline_mode = #tpu.pipeline_mode<synchronous>, transform_indices = @transform_8, window_bounds = array<i64: 1, 16>}, {transform_indices = @transform_9, window_bounds = array<i64: 1, 16, 16, 16>}]} {
    %c0 = arith.constant 0 : index
    %c0_0 = arith.constant 0 : index
    %0 = vector.load %arg5[%c0, %c0_0] : memref<16x4xbf16, #tpu.memory_space<vmem>>, vector<16x4xbf16>
    %c0_1 = arith.constant 0 : index
    %c0_2 = arith.constant 0 : index
    %1 = vector.load %arg6[%c0_1, %c0_2] : memref<1x4xf32, #tpu.memory_space<vmem>>, vector<1x4xf32>
    %c0_3 = arith.constant 0 : index
    %c0_4 = arith.constant 0 : index
    %c0_5 = arith.constant 0 : index
    %c0_6 = arith.constant 0 : index
    %2 = vector.load %arg2[%c0_3, %c0_4, %c0_5, %c0_6] : memref<1x16x16x16xbf16, #tpu.memory_space<vmem>>, vector<1x16x16x16xbf16>
    %3 = vector.shape_cast %2 : vector<1x16x16x16xbf16> to vector<16x16x16xbf16>
    %4 = vector.shape_cast %3 : vector<16x16x16xbf16> to vector<256x16xbf16>
    %cst = arith.constant dense<0.000000e+00> : vector<256x4xf32>
    %5 = tpu.matmul %4, %0, %cst {dimension_numbers = #tpu.dot_dimension_numbers<[1], [0], [0], [1], [0, 0, 1, 1], [], []>} : vector<256x16xbf16>, vector<16x4xbf16>, vector<256x4xf32> -> vector<256x4xf32>
    %6 = vector.broadcast %1 : vector<1x4xf32> to vector<256x4xf32>
    %7 = arith.addf %5, %6 : vector<256x4xf32>
    %cst_7 = arith.constant 0.000000e+00 : f32
    %8 = vector.broadcast %cst_7 : f32 to vector<256x4xf32>
    %9 = arith.maximumf %7, %8 : vector<256x4xf32>
    %10 = arith.truncf %9 : vector<256x4xf32> to vector<256x4xbf16>
    %11 = vector.shape_cast %10 : vector<256x4xbf16> to vector<16x16x4xbf16>
    %c0_i32 = arith.constant 0 : i32
    %12 = arith.cmpi sgt, %arg1, %c0_i32 : i32
    %13 = arith.extui %12 : i1 to i32
    %c0_i32_8 = arith.constant 0 : i32
    %14 = arith.cmpi ne, %13, %c0_i32_8 : i32
    scf.if %14 {
      %c0_65 = arith.constant 0 : index
      %c0_66 = arith.constant 0 : index
      %c0_67 = arith.constant 0 : index
      %c0_68 = arith.constant 0 : index
      %108 = vector.load %arg3[%c0_65, %c0_66, %c0_67, %c0_68] : memref<1x1x16x16xbf16, #tpu.memory_space<vmem>>, vector<1x1x16x16xbf16>
      %109 = vector.shape_cast %108 : vector<1x1x16x16xbf16> to vector<16x16xbf16>
      %cst_69 = arith.constant dense<0.000000e+00> : vector<16x4xf32>
      %110 = tpu.matmul %109, %0, %cst_69 {dimension_numbers = #tpu.dot_dimension_numbers<[1], [0], [0], [1], [0, 0, 1, 1], [], []>} : vector<16x16xbf16>, vector<16x4xbf16>, vector<16x4xf32> -> vector<16x4xf32>
      %111 = vector.broadcast %1 : vector<1x4xf32> to vector<16x4xf32>
      %112 = arith.addf %110, %111 : vector<16x4xf32>
      %cst_70 = arith.constant 0.000000e+00 : f32
      %113 = vector.broadcast %cst_70 : f32 to vector<16x4xf32>
      %114 = arith.maximumf %112, %113 : vector<16x4xf32>
      %115 = arith.truncf %114 : vector<16x4xf32> to vector<16x4xbf16>
      %c0_71 = arith.constant 0 : index
      %c0_72 = arith.constant 0 : index
      %c0_73 = arith.constant 0 : index
      %116 = vector.load %arg12[%c0_71, %c0_72, %c0_73] : memref<2x16x4xbf16, #tpu.memory_space<vmem>>, vector<1x16x4xbf16>
      %117 = vector.shape_cast %116 : vector<1x16x4xbf16> to vector<16x4xbf16>
      %118 = vector.shape_cast %115 : vector<16x4xbf16> to vector<1x16x4xbf16>
      tpu.vector_store %arg12[%c0_71, %c0_72, %c0_73], %118 {strides = array<i32>} : memref<2x16x4xbf16, #tpu.memory_space<vmem>>, vector<1x16x4xbf16>,
    } else {
    }
    %c0_i32_9 = arith.constant 0 : i32
    %15 = arith.cmpi eq, %arg1, %c0_i32_9 : i32
    %16 = arith.extui %15 : i1 to i32
    %c0_i32_10 = arith.constant 0 : i32
    %17 = arith.cmpi ne, %16, %c0_i32_10 : i32
    scf.if %17 {
      %cst_65 = arith.constant 0.000000e+00 : bf16
      %108 = vector.broadcast %cst_65 : bf16 to vector<16x4xbf16>
      %c0_66 = arith.constant 0 : index
      %c0_67 = arith.constant 0 : index
      %c0_68 = arith.constant 0 : index
      %109 = vector.load %arg12[%c0_66, %c0_67, %c0_68] : memref<2x16x4xbf16, #tpu.memory_space<vmem>>, vector<1x16x4xbf16>
      %110 = vector.shape_cast %109 : vector<1x16x4xbf16> to vector<16x4xbf16>
      %111 = vector.shape_cast %108 : vector<16x4xbf16> to vector<1x16x4xbf16>
      tpu.vector_store %arg12[%c0_66, %c0_67, %c0_68], %111 {strides = array<i32>} : memref<2x16x4xbf16, #tpu.memory_space<vmem>>, vector<1x16x4xbf16>,
    } else {
    }
    %c0_i32_11 = arith.constant 0 : i32
    %18 = arith.cmpi slt, %arg1, %c0_i32_11 : i32
    %19 = arith.extui %18 : i1 to i32
    %c0_i32_12 = arith.constant 0 : i32
    %20 = arith.cmpi ne, %19, %c0_i32_12 : i32
    scf.if %20 {
      %c0_65 = arith.constant 0 : index
      %c0_66 = arith.constant 0 : index
      %c0_67 = arith.constant 0 : index
      %c0_68 = arith.constant 0 : index
      %108 = vector.load %arg4[%c0_65, %c0_66, %c0_67, %c0_68] : memref<1x1x16x16xbf16, #tpu.memory_space<vmem>>, vector<1x1x16x16xbf16>
      %109 = vector.shape_cast %108 : vector<1x1x16x16xbf16> to vector<16x16xbf16>
      %cst_69 = arith.constant dense<0.000000e+00> : vector<16x4xf32>
      %110 = tpu.matmul %109, %0, %cst_69 {dimension_numbers = #tpu.dot_dimension_numbers<[1], [0], [0], [1], [0, 0, 1, 1], [], []>} : vector<16x16xbf16>, vector<16x4xbf16>, vector<16x4xf32> -> vector<16x4xf32>
      %111 = vector.broadcast %1 : vector<1x4xf32> to vector<16x4xf32>
      %112 = arith.addf %110, %111 : vector<16x4xf32>
      %cst_70 = arith.constant 0.000000e+00 : f32
      %113 = vector.broadcast %cst_70 : f32 to vector<16x4xf32>
      %114 = arith.maximumf %112, %113 : vector<16x4xf32>
      %115 = arith.truncf %114 : vector<16x4xf32> to vector<16x4xbf16>
      %c1_71 = arith.constant 1 : index
      %c0_72 = arith.constant 0 : index
      %c0_73 = arith.constant 0 : index
      %116 = vector.load %arg12[%c1_71, %c0_72, %c0_73] : memref<2x16x4xbf16, #tpu.memory_space<vmem>>, vector<1x16x4xbf16>
      %117 = vector.shape_cast %116 : vector<1x16x4xbf16> to vector<16x4xbf16>
      %118 = vector.shape_cast %115 : vector<16x4xbf16> to vector<1x16x4xbf16>
      tpu.vector_store %arg12[%c1_71, %c0_72, %c0_73], %118 {strides = array<i32>} : memref<2x16x4xbf16, #tpu.memory_space<vmem>>, vector<1x16x4xbf16>,
    } else {
    }
    %c0_i32_13 = arith.constant 0 : i32
    %21 = arith.cmpi eq, %arg1, %c0_i32_13 : i32
    %22 = arith.extui %21 : i1 to i32
    %c0_i32_14 = arith.constant 0 : i32
    %23 = arith.cmpi ne, %22, %c0_i32_14 : i32
    scf.if %23 {
      %cst_65 = arith.constant 0.000000e+00 : bf16
      %108 = vector.broadcast %cst_65 : bf16 to vector<16x4xbf16>
      %c1_66 = arith.constant 1 : index
      %c0_67 = arith.constant 0 : index
      %c0_68 = arith.constant 0 : index
      %109 = vector.load %arg12[%c1_66, %c0_67, %c0_68] : memref<2x16x4xbf16, #tpu.memory_space<vmem>>, vector<1x16x4xbf16>
      %110 = vector.shape_cast %109 : vector<1x16x4xbf16> to vector<16x4xbf16>
      %111 = vector.shape_cast %108 : vector<16x4xbf16> to vector<1x16x4xbf16>
      tpu.vector_store %arg12[%c1_66, %c0_67, %c0_68], %111 {strides = array<i32>} : memref<2x16x4xbf16, #tpu.memory_space<vmem>>, vector<1x16x4xbf16>,
    } else {
    }
    %c0_15 = arith.constant 0 : index
    %c0_16 = arith.constant 0 : index
    %c0_17 = arith.constant 0 : index
    %24 = vector.load %arg12[%c0_15, %c0_16, %c0_17] : memref<2x16x4xbf16, #tpu.memory_space<vmem>>, vector<2x16x4xbf16>
    %25 = vector.extract_strided_slice %24 {offsets = [0, 0, 0], sizes = [1, 16, 4], strides = [1, 1, 1]} : vector<2x16x4xbf16> to vector<1x16x4xbf16>
    %26 = vector.extract_strided_slice %24 {offsets = [1, 0, 0], sizes = [1, 16, 4], strides = [1, 1, 1]} : vector<2x16x4xbf16> to vector<1x16x4xbf16>
    %27 = tpu.concatenate %25, %11, %26 in 0 : vector<1x16x4xbf16>, vector<16x16x4xbf16>, vector<1x16x4xbf16> -> vector<18x16x4xbf16>
    %cst_18 = arith.constant 0.000000e+00 : bf16
    %28 = vector.broadcast %cst_18 : bf16 to vector<18x1x4xbf16>
    %29 = tpu.concatenate %28, %27, %28 in 1 : vector<18x1x4xbf16>, vector<18x16x4xbf16>, vector<18x1x4xbf16> -> vector<18x18x4xbf16>
    %cst_19 = arith.constant 0.000000e+00 : f32
    %30 = vector.broadcast %cst_19 : f32 to vector<256x4xf32>
    %31 = vector.extract_strided_slice %29 {offsets = [0, 0, 0], sizes = [16, 16, 4], strides = [1, 1, 1]} : vector<18x18x4xbf16> to vector<16x16x4xbf16>
    %32 = vector.shape_cast %31 : vector<16x16x4xbf16> to vector<256x4xbf16>
    %c0_20 = arith.constant 0 : index
    %c0_21 = arith.constant 0 : index
    %c0_22 = arith.constant 0 : index
    %33 = vector.load %arg7[%c0_20, %c0_21, %c0_22] : memref<9x4x4xbf16, #tpu.memory_space<vmem>>, vector<1x4x4xbf16>
    %34 = vector.shape_cast %33 : vector<1x4x4xbf16> to vector<4x4xbf16>
    %cst_23 = arith.constant dense<0.000000e+00> : vector<256x4xf32>
    %35 = tpu.matmul %32, %34, %cst_23 {dimension_numbers = #tpu.dot_dimension_numbers<[1], [0], [0], [1], [0, 0, 1, 1], [], []>} : vector<256x4xbf16>, vector<4x4xbf16>, vector<256x4xf32> -> vector<256x4xf32>
    %36 = arith.addf %30, %35 : vector<256x4xf32>
    %37 = vector.extract_strided_slice %29 {offsets = [0, 1, 0], sizes = [16, 16, 4], strides = [1, 1, 1]} : vector<18x18x4xbf16> to vector<16x16x4xbf16>
    %38 = vector.shape_cast %37 : vector<16x16x4xbf16> to vector<256x4xbf16>
    %c1 = arith.constant 1 : index
    %c0_24 = arith.constant 0 : index
    %c0_25 = arith.constant 0 : index
    %39 = vector.load %arg7[%c1, %c0_24, %c0_25] : memref<9x4x4xbf16, #tpu.memory_space<vmem>>, vector<1x4x4xbf16>
    %40 = vector.shape_cast %39 : vector<1x4x4xbf16> to vector<4x4xbf16>
    %cst_26 = arith.constant dense<0.000000e+00> : vector<256x4xf32>
    %41 = tpu.matmul %38, %40, %cst_26 {dimension_numbers = #tpu.dot_dimension_numbers<[1], [0], [0], [1], [0, 0, 1, 1], [], []>} : vector<256x4xbf16>, vector<4x4xbf16>, vector<256x4xf32> -> vector<256x4xf32>
    %42 = arith.addf %36, %41 : vector<256x4xf32>
    %43 = vector.extract_strided_slice %29 {offsets = [0, 2, 0], sizes = [16, 16, 4], strides = [1, 1, 1]} : vector<18x18x4xbf16> to vector<16x16x4xbf16>
    %44 = vector.shape_cast %43 : vector<16x16x4xbf16> to vector<256x4xbf16>
    %c2 = arith.constant 2 : index
    %c0_27 = arith.constant 0 : index
    %c0_28 = arith.constant 0 : index
    %45 = vector.load %arg7[%c2, %c0_27, %c0_28] : memref<9x4x4xbf16, #tpu.memory_space<vmem>>, vector<1x4x4xbf16>
    %46 = vector.shape_cast %45 : vector<1x4x4xbf16> to vector<4x4xbf16>
    %cst_29 = arith.constant dense<0.000000e+00> : vector<256x4xf32>
    %47 = tpu.matmul %44, %46, %cst_29 {dimension_numbers = #tpu.dot_dimension_numbers<[1], [0], [0], [1], [0, 0, 1, 1], [], []>} : vector<256x4xbf16>, vector<4x4xbf16>, vector<256x4xf32> -> vector<256x4xf32>
    %48 = arith.addf %42, %47 : vector<256x4xf32>
    %49 = vector.extract_strided_slice %29 {offsets = [1, 0, 0], sizes = [16, 16, 4], strides = [1, 1, 1]} : vector<18x18x4xbf16> to vector<16x16x4xbf16>
    %50 = vector.shape_cast %49 : vector<16x16x4xbf16> to vector<256x4xbf16>
    %c3 = arith.constant 3 : index
    %c0_30 = arith.constant 0 : index
    %c0_31 = arith.constant 0 : index
    %51 = vector.load %arg7[%c3, %c0_30, %c0_31] : memref<9x4x4xbf16, #tpu.memory_space<vmem>>, vector<1x4x4xbf16>
    %52 = vector.shape_cast %51 : vector<1x4x4xbf16> to vector<4x4xbf16>
    %cst_32 = arith.constant dense<0.000000e+00> : vector<256x4xf32>
    %53 = tpu.matmul %50, %52, %cst_32 {dimension_numbers = #tpu.dot_dimension_numbers<[1], [0], [0], [1], [0, 0, 1, 1], [], []>} : vector<256x4xbf16>, vector<4x4xbf16>, vector<256x4xf32> -> vector<256x4xf32>
    %54 = arith.addf %48, %53 : vector<256x4xf32>
    %55 = vector.extract_strided_slice %29 {offsets = [1, 1, 0], sizes = [16, 16, 4], strides = [1, 1, 1]} : vector<18x18x4xbf16> to vector<16x16x4xbf16>
    %56 = vector.shape_cast %55 : vector<16x16x4xbf16> to vector<256x4xbf16>
    %c4 = arith.constant 4 : index
    %c0_33 = arith.constant 0 : index
    %c0_34 = arith.constant 0 : index
    %57 = vector.load %arg7[%c4, %c0_33, %c0_34] : memref<9x4x4xbf16, #tpu.memory_space<vmem>>, vector<1x4x4xbf16>
    %58 = vector.shape_cast %57 : vector<1x4x4xbf16> to vector<4x4xbf16>
    %cst_35 = arith.constant dense<0.000000e+00> : vector<256x4xf32>
    %59 = tpu.matmul %56, %58, %cst_35 {dimension_numbers = #tpu.dot_dimension_numbers<[1], [0], [0], [1], [0, 0, 1, 1], [], []>} : vector<256x4xbf16>, vector<4x4xbf16>, vector<256x4xf32> -> vector<256x4xf32>
    %60 = arith.addf %54, %59 : vector<256x4xf32>
    %61 = vector.extract_strided_slice %29 {offsets = [1, 2, 0], sizes = [16, 16, 4], strides = [1, 1, 1]} : vector<18x18x4xbf16> to vector<16x16x4xbf16>
    %62 = vector.shape_cast %61 : vector<16x16x4xbf16> to vector<256x4xbf16>
    %c5 = arith.constant 5 : index
    %c0_36 = arith.constant 0 : index
    %c0_37 = arith.constant 0 : index
    %63 = vector.load %arg7[%c5, %c0_36, %c0_37] : memref<9x4x4xbf16, #tpu.memory_space<vmem>>, vector<1x4x4xbf16>
    %64 = vector.shape_cast %63 : vector<1x4x4xbf16> to vector<4x4xbf16>
    %cst_38 = arith.constant dense<0.000000e+00> : vector<256x4xf32>
    %65 = tpu.matmul %62, %64, %cst_38 {dimension_numbers = #tpu.dot_dimension_numbers<[1], [0], [0], [1], [0, 0, 1, 1], [], []>} : vector<256x4xbf16>, vector<4x4xbf16>, vector<256x4xf32> -> vector<256x4xf32>
    %66 = arith.addf %60, %65 : vector<256x4xf32>
    %67 = vector.extract_strided_slice %29 {offsets = [2, 0, 0], sizes = [16, 16, 4], strides = [1, 1, 1]} : vector<18x18x4xbf16> to vector<16x16x4xbf16>
    %68 = vector.shape_cast %67 : vector<16x16x4xbf16> to vector<256x4xbf16>
    %c6 = arith.constant 6 : index
    %c0_39 = arith.constant 0 : index
    %c0_40 = arith.constant 0 : index
    %69 = vector.load %arg7[%c6, %c0_39, %c0_40] : memref<9x4x4xbf16, #tpu.memory_space<vmem>>, vector<1x4x4xbf16>
    %70 = vector.shape_cast %69 : vector<1x4x4xbf16> to vector<4x4xbf16>
    %cst_41 = arith.constant dense<0.000000e+00> : vector<256x4xf32>
    %71 = tpu.matmul %68, %70, %cst_41 {dimension_numbers = #tpu.dot_dimension_numbers<[1], [0], [0], [1], [0, 0, 1, 1], [], []>} : vector<256x4xbf16>, vector<4x4xbf16>, vector<256x4xf32> -> vector<256x4xf32>
    %72 = arith.addf %66, %71 : vector<256x4xf32>
    %73 = vector.extract_strided_slice %29 {offsets = [2, 1, 0], sizes = [16, 16, 4], strides = [1, 1, 1]} : vector<18x18x4xbf16> to vector<16x16x4xbf16>
    %74 = vector.shape_cast %73 : vector<16x16x4xbf16> to vector<256x4xbf16>
    %c7 = arith.constant 7 : index
    %c0_42 = arith.constant 0 : index
    %c0_43 = arith.constant 0 : index
    %75 = vector.load %arg7[%c7, %c0_42, %c0_43] : memref<9x4x4xbf16, #tpu.memory_space<vmem>>, vector<1x4x4xbf16>
    %76 = vector.shape_cast %75 : vector<1x4x4xbf16> to vector<4x4xbf16>
    %cst_44 = arith.constant dense<0.000000e+00> : vector<256x4xf32>
    %77 = tpu.matmul %74, %76, %cst_44 {dimension_numbers = #tpu.dot_dimension_numbers<[1], [0], [0], [1], [0, 0, 1, 1], [], []>} : vector<256x4xbf16>, vector<4x4xbf16>, vector<256x4xf32> -> vector<256x4xf32>
    %78 = arith.addf %72, %77 : vector<256x4xf32>
    %79 = vector.extract_strided_slice %29 {offsets = [2, 2, 0], sizes = [16, 16, 4], strides = [1, 1, 1]} : vector<18x18x4xbf16> to vector<16x16x4xbf16>
    %80 = vector.shape_cast %79 : vector<16x16x4xbf16> to vector<256x4xbf16>
    %c8 = arith.constant 8 : index
    %c0_45 = arith.constant 0 : index
    %c0_46 = arith.constant 0 : index
    %81 = vector.load %arg7[%c8, %c0_45, %c0_46] : memref<9x4x4xbf16, #tpu.memory_space<vmem>>, vector<1x4x4xbf16>
    %82 = vector.shape_cast %81 : vector<1x4x4xbf16> to vector<4x4xbf16>
    %cst_47 = arith.constant dense<0.000000e+00> : vector<256x4xf32>
    %83 = tpu.matmul %80, %82, %cst_47 {dimension_numbers = #tpu.dot_dimension_numbers<[1], [0], [0], [1], [0, 0, 1, 1], [], []>} : vector<256x4xbf16>, vector<4x4xbf16>, vector<256x4xf32> -> vector<256x4xf32>
    %84 = arith.addf %78, %83 : vector<256x4xf32>
    %c0_48 = arith.constant 0 : index
    %c0_49 = arith.constant 0 : index
    %85 = vector.load %arg8[%c0_48, %c0_49] : memref<1x4xf32, #tpu.memory_space<vmem>>, vector<1x4xf32>
    %86 = vector.broadcast %85 : vector<1x4xf32> to vector<256x4xf32>
    %87 = arith.addf %84, %86 : vector<256x4xf32>
    %cst_50 = arith.constant 0.000000e+00 : f32
    %88 = vector.broadcast %cst_50 : f32 to vector<256x4xf32>
    %89 = arith.maximumf %87, %88 : vector<256x4xf32>
    %90 = arith.truncf %89 : vector<256x4xf32> to vector<256x4xbf16>
    %c0_51 = arith.constant 0 : index
    %c0_52 = arith.constant 0 : index
    %91 = vector.load %arg9[%c0_51, %c0_52] : memref<4x16xbf16, #tpu.memory_space<vmem>>, vector<4x16xbf16>
    %cst_53 = arith.constant dense<0.000000e+00> : vector<256x16xf32>
    %92 = tpu.matmul %90, %91, %cst_53 {dimension_numbers = #tpu.dot_dimension_numbers<[1], [0], [0], [1], [0, 0, 1, 1], [], []>} : vector<256x4xbf16>, vector<4x16xbf16>, vector<256x16xf32> -> vector<256x16xf32>
    %c0_54 = arith.constant 0 : index
    %c0_55 = arith.constant 0 : index
    %93 = vector.load %arg10[%c0_54, %c0_55] : memref<1x16xf32, #tpu.memory_space<vmem>>, vector<1x16xf32>
    %94 = vector.broadcast %93 : vector<1x16xf32> to vector<256x16xf32>
    %95 = arith.addf %92, %94 : vector<256x16xf32>
    %c0_56 = arith.constant 0 : index
    %c0_57 = arith.constant 0 : index
    %c0_58 = arith.constant 0 : index
    %c0_59 = arith.constant 0 : index
    %96 = vector.load %arg2[%c0_56, %c0_57, %c0_58, %c0_59] : memref<1x16x16x16xbf16, #tpu.memory_space<vmem>>, vector<1x16x16x16xbf16>
    %97 = vector.shape_cast %96 : vector<1x16x16x16xbf16> to vector<16x16x16xbf16>
    %98 = vector.shape_cast %97 : vector<16x16x16xbf16> to vector<256x16xbf16>
    %99 = arith.extf %98 : vector<256x16xbf16> to vector<256x16xf32>
    %100 = arith.addf %95, %99 : vector<256x16xf32>
    %cst_60 = arith.constant 0.000000e+00 : f32
    %101 = vector.broadcast %cst_60 : f32 to vector<256x16xf32>
    %102 = arith.maximumf %100, %101 : vector<256x16xf32>
    %103 = vector.shape_cast %102 : vector<256x16xf32> to vector<16x16x16xf32>
    %104 = arith.truncf %103 : vector<16x16x16xf32> to vector<16x16x16xbf16>
    %c0_61 = arith.constant 0 : index
    %c0_62 = arith.constant 0 : index
    %c0_63 = arith.constant 0 : index
    %c0_64 = arith.constant 0 : index
    %105 = vector.load %arg11[%c0_61, %c0_62, %c0_63, %c0_64] : memref<1x16x16x16xbf16, #tpu.memory_space<vmem>>, vector<1x16x16x16xbf16>
    %106 = vector.shape_cast %105 : vector<1x16x16x16xbf16> to vector<16x16x16xbf16>
    %107 = vector.shape_cast %104 : vector<16x16x16xbf16> to vector<1x16x16x16xbf16>
    tpu.vector_store %arg11[%c0_61, %c0_62, %c0_63, %c0_64], %107 {strides = array<i32>} : memref<1x16x16x16xbf16, #tpu.memory_space<vmem>>, vector<1x16x16x16xbf16>,
    return
  }
  func.func @transform_0(%arg0: i32, %arg1: i32) -> (i32, i32, i32, i32) {
    %c0_i32 = arith.constant 0 : i32
    %c0_i32_0 = arith.constant 0 : i32
    %c0_i32_1 = arith.constant 0 : i32
    return %arg0, %arg1, %c0_i32, %c0_i32_0 : i32, i32, i32, i32
  }
  func.func @transform_1(%arg0: i32, %arg1: i32) -> (i32, i32, i32, i32) {
    %c16_i32 = arith.constant 16 : i32
    %0 = arith.muli %arg1, %c16_i32 : i32
    %c1_i32 = arith.constant 1 : i32
    %1 = arith.subi %0, %c1_i32 : i32
    %c0_i32 = arith.constant 0 : i32
    %2 = arith.maxsi %1, %c0_i32 : i32
    %c0_i32_0 = arith.constant 0 : i32
    %c0_i32_1 = arith.constant 0 : i32
    %c0_i32_2 = arith.constant 0 : i32
    return %arg0, %2, %c0_i32_0, %c0_i32_1 : i32, i32, i32, i32
  }
  func.func @transform_2(%arg0: i32, %arg1: i32) -> (i32, i32, i32, i32) {
    %c1_i32 = arith.constant 1 : i32
    %0 = arith.addi %arg1, %c1_i32 : i32
    %c16_i32 = arith.constant 16 : i32
    %1 = arith.muli %0, %c16_i32 : i32
    %c15_i32 = arith.constant 15 : i32
    %2 = arith.minsi %1, %c15_i32 : i32
    %c0_i32 = arith.constant 0 : i32
    %c0_i32_0 = arith.constant 0 : i32
    %c0_i32_1 = arith.constant 0 : i32
    return %arg0, %2, %c0_i32, %c0_i32_0 : i32, i32, i32, i32
  }
  func.func @transform_3(%arg0: i32, %arg1: i32) -> (i32, i32) {
    %c0_i32 = arith.constant 0 : i32
    %c0_i32_0 = arith.constant 0 : i32
    %c0_i32_1 = arith.constant 0 : i32
    return %c0_i32, %c0_i32_0 : i32, i32
  }
  func.func @transform_4(%arg0: i32, %arg1: i32) -> (i32, i32) {
    %c0_i32 = arith.constant 0 : i32
    %c0_i32_0 = arith.constant 0 : i32
    %c0_i32_1 = arith.constant 0 : i32
    return %c0_i32, %c0_i32_0 : i32, i32
  }
  func.func @transform_5(%arg0: i32, %arg1: i32) -> (i32, i32, i32) {
    %c0_i32 = arith.constant 0 : i32
    %c0_i32_0 = arith.constant 0 : i32
    %c0_i32_1 = arith.constant 0 : i32
    %c0_i32_2 = arith.constant 0 : i32
    return %c0_i32, %c0_i32_0, %c0_i32_1 : i32, i32, i32
  }
  func.func @transform_6(%arg0: i32, %arg1: i32) -> (i32, i32) {
    %c0_i32 = arith.constant 0 : i32
    %c0_i32_0 = arith.constant 0 : i32
    %c0_i32_1 = arith.constant 0 : i32
    return %c0_i32, %c0_i32_0 : i32, i32
  }
  func.func @transform_7(%arg0: i32, %arg1: i32) -> (i32, i32) {
    %c0_i32 = arith.constant 0 : i32
    %c0_i32_0 = arith.constant 0 : i32
    %c0_i32_1 = arith.constant 0 : i32
    return %c0_i32, %c0_i32_0 : i32, i32
  }
  func.func @transform_8(%arg0: i32, %arg1: i32) -> (i32, i32) {
    %c0_i32 = arith.constant 0 : i32
    %c0_i32_0 = arith.constant 0 : i32
    %c0_i32_1 = arith.constant 0 : i32
    return %c0_i32, %c0_i32_0 : i32, i32
  }
  func.func @transform_9(%arg0: i32, %arg1: i32) -> (i32, i32, i32, i32) {
    %c0_i32 = arith.constant 0 : i32
    %c0_i32_0 = arith.constant 0 : i32
    %c0_i32_1 = arith.constant 0 : i32
    return %arg0, %arg1, %c0_i32, %c0_i32_0 : i32, i32, i32, i32
  }
}

</mosaic_0001>

<llo_original>
// kernel: tpu_custom_call.1
$region0: #{tpu_custom_call.1}
  #allocation0 [shape = 'u32[]', space=smem, size = 0x4, offset = 0x4, fixed_abs, tag = 'smem constant byte address 0x4 - core index']
  #allocation1 [shape = 'u32[144,128]{1,0:T(1,128)}', space=vmem, size = 0x12000, scoped, tag = 'internal scratch']
  #allocation2 [shape = 'bf16[2,16,4]{2,1,0:T(8,128)(2,1)}', space=vmem, size = 0x2000, scoped, tag = 'scratch operand']
  %s0 = inlined_call_operand.hbm [shape: bf16[2,16,16,16], index: 0, kind: input, shape index: {}]
  %s1 = inlined_call_operand.hbm [shape: bf16[2,16,16,16], index: 1, kind: input, shape index: {}]
  %s2 = inlined_call_operand.hbm [shape: bf16[2,16,16,16], index: 2, kind: input, shape index: {}]
  %s3 = inlined_call_operand.vmem [shape: bf16[16,4], index: 3, kind: input, shape index: {}]
  %s4 = inlined_call_operand.vmem [shape: f32[1,4], index: 4, kind: input, shape index: {}]
  %s5 = inlined_call_operand.vmem [shape: bf16[9,4,4], index: 5, kind: input, shape index: {}]
  %s6 = inlined_call_operand.vmem [shape: f32[1,4], index: 6, kind: input, shape index: {}]
  %s7 = inlined_call_operand.vmem [shape: bf16[4,16], index: 7, kind: input, shape index: {}]
  %s8 = inlined_call_operand.vmem [shape: f32[1,16], index: 8, kind: input, shape index: {}]
  %s9 = inlined_call_operand.hbm [shape: bf16[2,16,16,16], index: 9, kind: output, shape index: {}]
  %s10 = sld [smem:[#allocation0]]
  $region97: #{tpu_custom_call.1} parent=0
    _
  %s12 = ssub.s32 1, %s10
  %s13 = scalar_select 0, %s12, %s10
  $region1: #{tpu_custom_call.1} parent=0
    #allocation3 [shape = 'u8[131072]{0}', space=vmem, size = 0x20000, scoped, tag = 'input window, operand 0']
    #allocation4 [shape = 's32[2]{0}', space=sflag, size = 0x8, scoped, tag = 'scoped memory for tpu_custom_call.1']
    #allocation5 [shape = 's32[2]{0}', space=sflag, size = 0x8, scoped, tag = 'scoped memory for tpu_custom_call.1']
    #allocation6 [shape = 'u8[8192]{0}', space=vmem, size = 0x2000, scoped, tag = 'input window, operand 1']
    #allocation7 [shape = 's32[2]{0}', space=sflag, size = 0x8, scoped, tag = 'scoped memory for tpu_custom_call.1']
    #allocation8 [shape = 'u8[8192]{0}', space=vmem, size = 0x2000, scoped, tag = 'input window, operand 2']
    #allocation9 [shape = 'u8[131072]{0}', space=vmem, size = 0x20000, scoped, tag = 'output window, operand 0']
    %14 = vsyncpa [#allocation4], 0
    %s15 = scalar_lea.sflag [#allocation4], 1
    %16 = vsyncpa %s15, 0
    %17 = vsyncpa [#allocation7], 0
    %s18 = scalar_lea.sflag [#allocation7], 1
    %19 = vsyncpa %s18, 0
    %20 = vsyncpa [#allocation5], 0
    %s21 = scalar_lea.sflag [#allocation5], 1
    %22 = vsyncpa %s21, 0
    loop: start=0, step=1, limit=4
    $region2: #{tpu_custom_call.1} parent=1 // loop_pre_header
      _
    $region3: #{tpu_custom_call.1} parent=1 // loop_header
      %s24 = sphi 0, %s28
      %p25 = scmp.ge.s32.totalorder %s24, 4
      %s31 = sphi 0, %s43
      %s32 = sphi 0, %s39
      %s33 = sphi 0, %s31
      %s34 = sphi 0, %s32
      %s35 = sphi 0, %s33
      %s36 = sphi 0, %s34
      %s48 = sphi 0, %s50
      %s51 = sphi 0, %s48
      %s52 = sphi 0, %s51
      %s68 = sphi 0, %s52
      %s84 = sphi 0, %s86
      %s87 = sphi 0, %s84
      %s88 = sphi 0, %s87
      %s104 = sphi 0, %s88
      %s120 = sphi 0, %s122
      %s123 = sphi 0, %s120
      %s124 = sphi 0, %s123
      %s140 = sphi 0, %s124
      %s144 = sphi 0, %s144
      %s146 = sphi 0, %s144
      %s147 = sphi 0, %s146
      %s161 = sphi 0, %s147
      %s165 = sphi 0, %s165
      %s167 = sphi 0, %s165
      %s168 = sphi 0, %s167
      %s182 = sphi 0, %s168
      %s186 = sphi 0, %s186
      %s188 = sphi 0, %s186
      %s189 = sphi 0, %s188
      %s203 = sphi 0, %s189
      %s207 = sphi 0, %s207
      %s209 = sphi 0, %s207
      %s210 = sphi 0, %s209
      %s224 = sphi 0, %s210
      %s228 = sphi 0, %s228
      %s230 = sphi 0, %s228
      %s231 = sphi 0, %s230
      %s245 = sphi 0, %s231
      %s249 = sphi 0, %s249
      %s251 = sphi 0, %s249
      %s252 = sphi 0, %s251
      %s266 = sphi 0, %s252
      %s274 = sphi 0, %s276
      %s277 = sphi 0, %s274
      %s278 = sphi 0, %s277
      %s294 = sphi 0, %s278
    $region4: #{tpu_custom_call.1} parent=1 // loop_header_branch
      %27 = sbr.rel (%p25) target = $region8
    $region5: #{tpu_custom_call.1} parent=1 // loop_body
      %s29 = ssub.s32 %s24, 1
      %s30 = ssub.s32 %s24, 2
      %s37 = sadd.s32 1, %s32
      %p38 = scmp.ge.s32.totalorder %s37, 1
      %s39 = scalar_select %p38, 0, %s37
      %s40 = sadd.s32 1, %s31
      %s41 = scalar_select %p38, %s40, %s31
      %p42 = scmp.ge.s32.totalorder %s41, 2
      %s43 = scalar_select %p42, 0, %s41
      %s44 = ssub.s32 %s31, %s43
      %s45 = ssub.s32 %s32, %s39
      %s46 = sor.u32 %s44, %s45
      %p47 = scmp.eq.s32.totalorder %s46, 0
      %s49 = sadd.s32 %s48, 1
      %s50 = scalar_select %p47, %s48, %s49
      %p53 = pneg %p47
      %p54 = scmp.eq.s32.totalorder %s24, 1
      %p55 = por %p53, %p54
      %p56 = scmp.ne.s32.totalorder %s48, %s51
      %p57 = scmp.eq.s32.totalorder %s24, 0
      %p58 = por %p56, %p57
      %p59 = scmp.ne.s32.totalorder %s48, %s51
      %p60 = scmp.eq.s32.totalorder %s29, 1
      %p61 = por %p59, %p60
      %p62 = scmp.ne.s32.totalorder %s51, %s52
      %p63 = scmp.eq.s32.totalorder %s29, 0
      %p64 = por %p62, %p63
      %p65 = scmp.ne.s32.totalorder %s51, %s52
      %p66 = scmp.eq.s32.totalorder %s30, 1
      %p67 = por %p65, %p66
      %p69 = scmp.ne.s32.totalorder %s52, %s68
      %p70 = scmp.eq.s32.totalorder %s30, 0
      %p71 = por %p69, %p70
      %s72 = smul.u32 %s32, 16
      %s73 = ssub.s32 %s72, 1
      %p74 = scmp.gt.s32.totalorder %s73, 0
      %s75 = scalar_select %p74, %s73, 0
      %s76 = smul.u32 %s39, 16
      %s77 = ssub.s32 %s76, 1
      %p78 = scmp.gt.s32.totalorder %s77, 0
      %s79 = scalar_select %p78, %s77, 0
      %s80 = ssub.s32 %s31, %s43
      %s81 = ssub.s32 %s75, %s79
      %s82 = sor.u32 %s80, %s81
      %p83 = scmp.eq.s32.totalorder %s82, 0
      %s85 = sadd.s32 %s84, 1
      %s86 = scalar_select %p83, %s84, %s85
      %p89 = pneg %p83
      %p90 = scmp.eq.s32.totalorder %s24, 1
      %p91 = por %p89, %p90
      %p92 = scmp.ne.s32.totalorder %s84, %s87
      %p93 = scmp.eq.s32.totalorder %s24, 0
      %p94 = por %p92, %p93
      %p95 = scmp.ne.s32.totalorder %s84, %s87
      %p96 = scmp.eq.s32.totalorder %s29, 1
      %p97 = por %p95, %p96
      %p98 = scmp.ne.s32.totalorder %s87, %s88
      %p99 = scmp.eq.s32.totalorder %s29, 0
      %p100 = por %p98, %p99
      %p101 = scmp.ne.s32.totalorder %s87, %s88
      %p102 = scmp.eq.s32.totalorder %s30, 1
      %p103 = por %p101, %p102
      %p105 = scmp.ne.s32.totalorder %s88, %s104
      %p106 = scmp.eq.s32.totalorder %s30, 0
      %p107 = por %p105, %p106
      %s108 = sadd.s32 %s32, 1
      %s109 = smul.u32 %s108, 16
      %p110 = scmp.lt.s32.totalorder %s109, 15
      %s111 = scalar_select %p110, %s109, 15
      %s112 = sadd.s32 %s39, 1
      %s113 = smul.u32 %s112, 16
      %p114 = scmp.lt.s32.totalorder %s113, 15
      %s115 = scalar_select %p114, %s113, 15
      %s116 = ssub.s32 %s31, %s43
      %s117 = ssub.s32 %s111, %s115
      %s118 = sor.u32 %s116, %s117
      %p119 = scmp.eq.s32.totalorder %s118, 0
      %s121 = sadd.s32 %s120, 1
      %s122 = scalar_select %p119, %s120, %s121
      %p125 = pneg %p119
      %p126 = scmp.eq.s32.totalorder %s24, 1
      %p127 = por %p125, %p126
      %p128 = scmp.ne.s32.totalorder %s120, %s123
      %p129 = scmp.eq.s32.totalorder %s24, 0
      %p130 = por %p128, %p129
      %p131 = scmp.ne.s32.totalorder %s120, %s123
      %p132 = scmp.eq.s32.totalorder %s29, 1
      %p133 = por %p131, %p132
      %p134 = scmp.ne.s32.totalorder %s123, %s124
      %p135 = scmp.eq.s32.totalorder %s29, 0
      %p136 = por %p134, %p135
      %p137 = scmp.ne.s32.totalorder %s123, %s124
      %p138 = scmp.eq.s32.totalorder %s30, 1
      %p139 = por %p137, %p138
      %p141 = scmp.ne.s32.totalorder %s124, %s140
      %p142 = scmp.eq.s32.totalorder %s30, 0
      %p143 = por %p141, %p142
      %s145 = sadd.s32 %s144, 1
      %p148 = scmp.eq.s32.totalorder %s24, 1
      %p149 = scmp.ne.s32.totalorder %s144, %s146
      %p150 = scmp.eq.s32.totalorder %s24, 0
      %p151 = por %p149, %p150
      %p152 = scmp.ne.s32.totalorder %s144, %s146
      %p153 = scmp.eq.s32.totalorder %s29, 1
      %p154 = por %p152, %p153
      %p155 = scmp.ne.s32.totalorder %s146, %s147
      %p156 = scmp.eq.s32.totalorder %s29, 0
      %p157 = por %p155, %p156
      %p158 = scmp.ne.s32.totalorder %s146, %s147
      %p159 = scmp.eq.s32.totalorder %s30, 1
      %p160 = por %p158, %p159
      %p162 = scmp.ne.s32.totalorder %s147, %s161
      %p163 = scmp.eq.s32.totalorder %s30, 0
      %p164 = por %p162, %p163
      %s166 = sadd.s32 %s165, 1
      %p169 = scmp.eq.s32.totalorder %s24, 1
      %p170 = scmp.ne.s32.totalorder %s165, %s167
      %p171 = scmp.eq.s32.totalorder %s24, 0
      %p172 = por %p170, %p171
      %p173 = scmp.ne.s32.totalorder %s165, %s167
      %p174 = scmp.eq.s32.totalorder %s29, 1
      %p175 = por %p173, %p174
      %p176 = scmp.ne.s32.totalorder %s167, %s168
      %p177 = scmp.eq.s32.totalorder %s29, 0
      %p178 = por %p176, %p177
      %p179 = scmp.ne.s32.totalorder %s167, %s168
      %p180 = scmp.eq.s32.totalorder %s30, 1
      %p181 = por %p179, %p180
      %p183 = scmp.ne.s32.totalorder %s168, %s182
      %p184 = scmp.eq.s32.totalorder %s30, 0
      %p185 = por %p183, %p184
      %s187 = sadd.s32 %s186, 1
      %p190 = scmp.eq.s32.totalorder %s24, 1
      %p191 = scmp.ne.s32.totalorder %s186, %s188
      %p192 = scmp.eq.s32.totalorder %s24, 0
      %p193 = por %p191, %p192
      %p194 = scmp.ne.s32.totalorder %s186, %s188
      %p195 = scmp.eq.s32.totalorder %s29, 1
      %p196 = por %p194, %p195
      %p197 = scmp.ne.s32.totalorder %s188, %s189
      %p198 = scmp.eq.s32.totalorder %s29, 0
      %p199 = por %p197, %p198
      %p200 = scmp.ne.s32.totalorder %s188, %s189
      %p201 = scmp.eq.s32.totalorder %s30, 1
      %p202 = por %p200, %p201
      %p204 = scmp.ne.s32.totalorder %s189, %s203
      %p205 = scmp.eq.s32.totalorder %s30, 0
      %p206 = por %p204, %p205
      %s208 = sadd.s32 %s207, 1
      %p211 = scmp.eq.s32.totalorder %s24, 1
      %p212 = scmp.ne.s32.totalorder %s207, %s209
      %p213 = scmp.eq.s32.totalorder %s24, 0
      %p214 = por %p212, %p213
      %p215 = scmp.ne.s32.totalorder %s207, %s209
      %p216 = scmp.eq.s32.totalorder %s29, 1
      %p217 = por %p215, %p216
      %p218 = scmp.ne.s32.totalorder %s209, %s210
      %p219 = scmp.eq.s32.totalorder %s29, 0
      %p220 = por %p218, %p219
      %p221 = scmp.ne.s32.totalorder %s209, %s210
      %p222 = scmp.eq.s32.totalorder %s30, 1
      %p223 = por %p221, %p222
      %p225 = scmp.ne.s32.totalorder %s210, %s224
      %p226 = scmp.eq.s32.totalorder %s30, 0
      %p227 = por %p225, %p226
      %s229 = sadd.s32 %s228, 1
      %p232 = scmp.eq.s32.totalorder %s24, 1
      %p233 = scmp.ne.s32.totalorder %s228, %s230
      %p234 = scmp.eq.s32.totalorder %s24, 0
      %p235 = por %p233, %p234
      %p236 = scmp.ne.s32.totalorder %s228, %s230
      %p237 = scmp.eq.s32.totalorder %s29, 1
      %p238 = por %p236, %p237
      %p239 = scmp.ne.s32.totalorder %s230, %s231
      %p240 = scmp.eq.s32.totalorder %s29, 0
      %p241 = por %p239, %p240
      %p242 = scmp.ne.s32.totalorder %s230, %s231
      %p243 = scmp.eq.s32.totalorder %s30, 1
      %p244 = por %p242, %p243
      %p246 = scmp.ne.s32.totalorder %s231, %s245
      %p247 = scmp.eq.s32.totalorder %s30, 0
      %p248 = por %p246, %p247
      %s250 = sadd.s32 %s249, 1
      %p253 = scmp.eq.s32.totalorder %s24, 1
      %p254 = scmp.ne.s32.totalorder %s249, %s251
      %p255 = scmp.eq.s32.totalorder %s24, 0
      %p256 = por %p254, %p255
      %p257 = scmp.ne.s32.totalorder %s249, %s251
      %p258 = scmp.eq.s32.totalorder %s29, 1
      %p259 = por %p257, %p258
      %p260 = scmp.ne.s32.totalorder %s251, %s252
      %p261 = scmp.eq.s32.totalorder %s29, 0
      %p262 = por %p260, %p261
      %p263 = scmp.ne.s32.totalorder %s251, %s252
      %p264 = scmp.eq.s32.totalorder %s30, 1
      %p265 = por %p263, %p264
      %p267 = scmp.ne.s32.totalorder %s252, %s266
      %p268 = scmp.eq.s32.totalorder %s30, 0
      %p269 = por %p267, %p268
      %s270 = ssub.s32 %s31, %s43
      %s271 = ssub.s32 %s32, %s39
      %s272 = sor.u32 %s270, %s271
      %p273 = scmp.eq.s32.totalorder %s272, 0
      %s275 = sadd.s32 %s274, 1
      %s276 = scalar_select %p273, %s274, %s275
      %p279 = pneg %p273
      %p280 = scmp.eq.s32.totalorder %s24, 1
      %p281 = por %p279, %p280
      %p282 = scmp.ne.s32.totalorder %s274, %s277
      %p283 = scmp.eq.s32.totalorder %s24, 0
      %p284 = por %p282, %p283
      %p285 = scmp.ne.s32.totalorder %s274, %s277
      %p286 = scmp.eq.s32.totalorder %s29, 1
      %p287 = por %p285, %p286
      %p288 = scmp.ne.s32.totalorder %s277, %s278
      %p289 = scmp.eq.s32.totalorder %s29, 0
      %p290 = por %p288, %p289
      %p291 = scmp.ne.s32.totalorder %s277, %s278
      %p292 = scmp.eq.s32.totalorder %s30, 1
      %p293 = por %p291, %p292
      %p295 = scmp.ne.s32.totalorder %s278, %s294
      %p296 = scmp.eq.s32.totalorder %s30, 0
      %p297 = por %p295, %p296
      %p298 = scmp.le.s32.totalorder 1, %s24
      %p299 = scmp.lt.s32.totalorder %s24, 3
      %p300 = pnand %p298, %p299
      %p301 = pneg %p300
      // Predicated region
      $region9: #{tpu_custom_call.1} parent=5 // pred_check
        _
      $region10: #{tpu_custom_call.1} parent=5 // pred_check_branch
        %303 = sbr.rel (%p300) target = $region12
      $region11: #{tpu_custom_call.1} parent=5 // pred_region
        %s304 = ssub.s32 %s24, 1
        // Predicated region
        $region13: #{tpu_custom_call.1} parent=11 // pred_check
          %p305 = pneg %p157
        $region14: #{tpu_custom_call.1} parent=11 // pred_check_branch
          %307 = sbr.rel (%p305) target = $region16
        $region15: #{tpu_custom_call.1} parent=11 // pred_region
          _
        $region16: #{tpu_custom_call.1} parent=11 // pred_fallthru
          _
        // Predicated region
        $region17: #{tpu_custom_call.1} parent=11 // pred_check
          %p308 = pneg %p178
        $region18: #{tpu_custom_call.1} parent=11 // pred_check_branch
          %310 = sbr.rel (%p308) target = $region20
        $region19: #{tpu_custom_call.1} parent=11 // pred_region
          _
        $region20: #{tpu_custom_call.1} parent=11 // pred_fallthru
          _
        // Predicated region
        $region21: #{tpu_custom_call.1} parent=11 // pred_check
          %p311 = pneg %p199
        $region22: #{tpu_custom_call.1} parent=11 // pred_check_branch
          %313 = sbr.rel (%p311) target = $region24
        $region23: #{tpu_custom_call.1} parent=11 // pred_region
          _
        $region24: #{tpu_custom_call.1} parent=11 // pred_fallthru
          _
        // Predicated region
        $region25: #{tpu_custom_call.1} parent=11 // pred_check
          %p314 = pneg %p220
        $region26: #{tpu_custom_call.1} parent=11 // pred_check_branch
          %316 = sbr.rel (%p314) target = $region28
        $region27: #{tpu_custom_call.1} parent=11 // pred_region
          _
        $region28: #{tpu_custom_call.1} parent=11 // pred_fallthru
          _
        // Predicated region
        $region29: #{tpu_custom_call.1} parent=11 // pred_check
          %p317 = pneg %p241
        $region30: #{tpu_custom_call.1} parent=11 // pred_check_branch
          %319 = sbr.rel (%p317) target = $region32
        $region31: #{tpu_custom_call.1} parent=11 // pred_region
          _
        $region32: #{tpu_custom_call.1} parent=11 // pred_fallthru
          _
        // Predicated region
        $region33: #{tpu_custom_call.1} parent=11 // pred_check
          %p320 = pneg %p262
        $region34: #{tpu_custom_call.1} parent=11 // pred_check_branch
          %322 = sbr.rel (%p320) target = $region36
        $region35: #{tpu_custom_call.1} parent=11 // pred_region
          _
        $region36: #{tpu_custom_call.1} parent=11 // pred_fallthru
          _
      $region12: #{tpu_custom_call.1} parent=5 // pred_fallthru
        _
      %p323 = scmp.lt.s32.totalorder %s24, 2
      // Predicated region
      $region37: #{tpu_custom_call.1} parent=5 // pred_check
        %p324 = pneg %p323
      $region38: #{tpu_custom_call.1} parent=5 // pred_check_branch
        %326 = sbr.rel (%p324) target = $region40
      $region39: #{tpu_custom_call.1} parent=5 // pred_region
        // Predicated region
        $region41: #{tpu_custom_call.1} parent=39 // pred_check
          %p327 = pneg %p58
        $region42: #{tpu_custom_call.1} parent=39 // pred_check_branch
          %329 = sbr.rel (%p327) target = $region44
        $region43: #{tpu_custom_call.1} parent=39 // pred_region
          %s330 = sand.u32 %s48, 1
          %s331 = scalar_lea.sflag [#allocation4], %s330
          %s332 = sand.u32 %s48, 1
          %s333 = smul.addr %s332, 128
          %s334 = scalar_lea.vmem [#allocation3], %s333
          %s335 = smul.u32 16, %s32
          %s337 = ssub.s32 2048, 2048
          %338 = vsyncadd %s331, %s337
          %s339 = smul.addr %s335, 2
          %s340 = smul.addr %s31, 32
          %s341 = sadd.s32 %s339, %s340
          %s342 = smul.addr %s341, 64
          %s343 = scalar_lea.hbm %s0, %s342
          %s344 = sshll.u32 %s334, 4
          %s345 = int_to_ptr.vmem [resolvable:$true] %s344
          %350 = dma.hbm_to_vmem [thread:$0]  %s343, 2048, %s345, %s331, 64, 64, 4
        $region44: #{tpu_custom_call.1} parent=39 // pred_fallthru
          _
        // Predicated region
        $region45: #{tpu_custom_call.1} parent=39 // pred_check
          %p351 = pneg %p94
        $region46: #{tpu_custom_call.1} parent=39 // pred_check_branch
          %353 = sbr.rel (%p351) target = $region48
        $region47: #{tpu_custom_call.1} parent=39 // pred_region
          %s354 = sand.u32 %s24, 1
          %s355 = scalar_lea.sflag [#allocation7], %s354
          %s356 = sand.u32 %s84, 1
          %s357 = smul.addr %s356, 8
          %s358 = scalar_lea.vmem [#allocation6], %s357
          %s359 = smul.u32 %s32, 16
          %s360 = ssub.s32 %s359, 1
          %p361 = scmp.gt.s32.totalorder %s360, 0
          %s362 = scalar_select %p361, %s360, 0
          %s364 = ssub.s32 128, 128
          %365 = vsyncadd %s355, %s364
          %s366 = smul.addr %s362, 2
          %s367 = smul.addr %s31, 32
          %s368 = sadd.s32 %s366, %s367
          %s369 = smul.addr %s368, 64
          %s370 = scalar_lea.hbm %s1, %s369
          %s371 = sshll.u32 %s358, 4
          %s372 = int_to_ptr.vmem [resolvable:$true] %s371
          %377 = dma.hbm_to_vmem [thread:$0]  %s370, 128, %s372, %s355, 64, 64, 4
        $region48: #{tpu_custom_call.1} parent=39 // pred_fallthru
          _
        // Predicated region
        $region49: #{tpu_custom_call.1} parent=39 // pred_check
          %p378 = pneg %p130
        $region50: #{tpu_custom_call.1} parent=39 // pred_check_branch
          %380 = sbr.rel (%p378) target = $region52
        $region51: #{tpu_custom_call.1} parent=39 // pred_region
          %s381 = sand.u32 %s24, 1
          %s382 = scalar_lea.sflag [#allocation7], %s381
          %s383 = sand.u32 %s120, 1
          %s384 = smul.addr %s383, 8
          %s385 = scalar_lea.vmem [#allocation8], %s384
          %s386 = sadd.s32 %s32, 1
          %s387 = smul.u32 %s386, 16
          %p388 = scmp.lt.s32.totalorder %s387, 15
          %s389 = scalar_select %p388, %s387, 15
          %s391 = ssub.s32 128, 128
          %392 = vsyncadd %s382, %s391
          %s393 = smul.addr %s389, 2
          %s394 = smul.addr %s31, 32
          %s395 = sadd.s32 %s393, %s394
          %s396 = smul.addr %s395, 64
          %s397 = scalar_lea.hbm %s2, %s396
          %s398 = sshll.u32 %s385, 4
          %s399 = int_to_ptr.vmem [resolvable:$true] %s398
          %404 = dma.hbm_to_vmem [thread:$0]  %s397, 128, %s399, %s382, 64, 64, 4
        $region52: #{tpu_custom_call.1} parent=39 // pred_fallthru
          _
      $region40: #{tpu_custom_call.1} parent=5 // pred_fallthru
        _
      %p405 = scmp.le.s32.totalorder 1, %s24
      %p406 = scmp.lt.s32.totalorder %s24, 3
      %p407 = pnand %p405, %p406
      %p408 = pneg %p407
      // Predicated region
      $region53: #{tpu_custom_call.1} parent=5 // pred_check
        _
      $region54: #{tpu_custom_call.1} parent=5 // pred_check_branch
        %410 = sbr.rel (%p407) target = $region56
      $region55: #{tpu_custom_call.1} parent=5 // pred_region
        %s411 = ssub.s32 %s24, 1
        %s412 = sand.u32 %s51, 1
        %s413 = scalar_lea.sflag [#allocation4], %s412
        %s414 = sand.u32 %s51, 1
        %s415 = smul.addr %s414, 128
        %s416 = scalar_lea.vmem [#allocation3], %s415
        // Predicated region
        $region57: #{tpu_custom_call.1} parent=55 // pred_check
          %p417 = pneg %p64
        $region58: #{tpu_custom_call.1} parent=55 // pred_check_branch
          %419 = sbr.rel (%p417) target = $region60
        $region59: #{tpu_custom_call.1} parent=55 // pred_region
          %420 = dma.done %s413, 2048
        $region60: #{tpu_custom_call.1} parent=55 // pred_fallthru
          _
        %s421 = sand.u32 %s29, 1
        %s422 = scalar_lea.sflag [#allocation7], %s421
        %s423 = sand.u32 %s87, 1
        %s424 = smul.addr %s423, 8
        %s425 = scalar_lea.vmem [#allocation6], %s424
        // Predicated region
        $region61: #{tpu_custom_call.1} parent=55 // pred_check
          %p426 = pneg %p100
        $region62: #{tpu_custom_call.1} parent=55 // pred_check_branch
          %428 = sbr.rel (%p426) target = $region64
        $region63: #{tpu_custom_call.1} parent=55 // pred_region
          %429 = dma.done %s422, 128
        $region64: #{tpu_custom_call.1} parent=55 // pred_fallthru
          _
        %s430 = sand.u32 %s29, 1
        %s431 = scalar_lea.sflag [#allocation7], %s430
        %s432 = sand.u32 %s123, 1
        %s433 = smul.addr %s432, 8
        %s434 = scalar_lea.vmem [#allocation8], %s433
        // Predicated region
        $region65: #{tpu_custom_call.1} parent=55 // pred_check
          %p435 = pneg %p136
        $region66: #{tpu_custom_call.1} parent=55 // pred_check_branch
          %437 = sbr.rel (%p435) target = $region68
        $region67: #{tpu_custom_call.1} parent=55 // pred_region
          %438 = dma.done %s431, 128
        $region68: #{tpu_custom_call.1} parent=55 // pred_fallthru
          _
        %s439 = sand.u32 %s51, 1
        %s440 = scalar_lea.sflag [#allocation4], %s439
        %s441 = sand.u32 %s51, 1
        %s442 = smul.addr %s441, 128
        %s443 = scalar_lea.vmem [#allocation3], %s442
        %p444 = pneg %p64
        %p445 = pneg %p61
        %s446 = sand.u32 %s29, 1
        %s447 = scalar_lea.sflag [#allocation7], %s446
        %s448 = sand.u32 %s87, 1
        %s449 = smul.addr %s448, 8
        %s450 = scalar_lea.vmem [#allocation6], %s449
        %p451 = pneg %p100
        %p452 = pneg %p97
        %s453 = sand.u32 %s29, 1
        %s454 = scalar_lea.sflag [#allocation7], %s453
        %s455 = sand.u32 %s123, 1
        %s456 = smul.addr %s455, 8
        %s457 = scalar_lea.vmem [#allocation8], %s456
        %p458 = pneg %p136
        %p459 = pneg %p133
        %p460 = pneg %p157
        %p461 = pneg %p154
        %p462 = pneg %p178
        %p463 = pneg %p175
        %p464 = pneg %p199
        %p465 = pneg %p196
        %p466 = pneg %p220
        %p467 = pneg %p217
        %p468 = pneg %p241
        %p469 = pneg %p238
        %p470 = pneg %p262
        %p471 = pneg %p259
        %p472 = pneg %p290
        %p473 = pneg %p287
        %s474 = sand.u32 %s277, 1
        %s475 = scalar_lea.sflag [#allocation5], %s474
        %s476 = sand.u32 %s277, 1
        %s477 = smul.addr %s476, 128
        %s478 = scalar_lea.vmem [#allocation9], %s477
        %s479 = smul.u32 16, %s34
        %s480 = smul.u32 %s34, 16
        %s481 = ssub.s32 %s480, 1
        %p482 = scmp.gt.s32.totalorder %s481, 0
        %s483 = scalar_select %p482, %s481, 0
        %s484 = sadd.s32 %s34, 1
        %s485 = smul.u32 %s484, 16
        %p486 = scmp.lt.s32.totalorder %s485, 15
        %s487 = scalar_select %p486, %s485, 15
        %s488 = smul.u32 16, %s34
        %v490 = vld [vmem:[%s3] sm:$0xf]
        %v491 = vld [vmem:[%s3 + $0x4] sm:$0xf]
        %v492 = vld [vmem:[%s4] sm:$0x1]
        %v493 = vld [vmem:[%s416] sm:$0xf]
        %v494 = vld [vmem:[%s416 + $0x4] sm:$0xf]
        %v495 = vld [vmem:[%s416 + $0x8] sm:$0xf]
        %v496 = vld [vmem:[%s416 + $0xc] sm:$0xf]
        %v497 = vld [vmem:[%s416 + $0x10] sm:$0xf]
        %v498 = vld [vmem:[%s416 + $0x14] sm:$0xf]
        %v499 = vld [vmem:[%s416 + $0x18] sm:$0xf]
        %v500 = vld [vmem:[%s416 + $0x1c] sm:$0xf]
        %v501 = vld [vmem:[%s416 + $0x20] sm:$0xf]
        %v502 = vld [vmem:[%s416 + $0x24] sm:$0xf]
        %v503 = vld [vmem:[%s416 + $0x28] sm:$0xf]
        %v504 = vld [vmem:[%s416 + $0x2c] sm:$0xf]
        %v505 = vld [vmem:[%s416 + $0x30] sm:$0xf]
        %v506 = vld [vmem:[%s416 + $0x34] sm:$0xf]
        %v507 = vld [vmem:[%s416 + $0x38] sm:$0xf]
        %v508 = vld [vmem:[%s416 + $0x3c] sm:$0xf]
        %v509 = vld [vmem:[%s416 + $0x40] sm:$0xf]
        %v510 = vld [vmem:[%s416 + $0x44] sm:$0xf]
        %v511 = vld [vmem:[%s416 + $0x48] sm:$0xf]
        %v512 = vld [vmem:[%s416 + $0x4c] sm:$0xf]
        %v513 = vld [vmem:[%s416 + $0x50] sm:$0xf]
        %v514 = vld [vmem:[%s416 + $0x54] sm:$0xf]
        %v515 = vld [vmem:[%s416 + $0x58] sm:$0xf]
        %v516 = vld [vmem:[%s416 + $0x5c] sm:$0xf]
        %v517 = vld [vmem:[%s416 + $0x60] sm:$0xf]
        %v518 = vld [vmem:[%s416 + $0x64] sm:$0xf]
        %v519 = vld [vmem:[%s416 + $0x68] sm:$0xf]
        %v520 = vld [vmem:[%s416 + $0x6c] sm:$0xf]
        %v521 = vld [vmem:[%s416 + $0x70] sm:$0xf]
        %v522 = vld [vmem:[%s416 + $0x74] sm:$0xf]
        %v523 = vld [vmem:[%s416 + $0x78] sm:$0xf]
        %v524 = vld [vmem:[%s416 + $0x7c] sm:$0xf]
        %v526 = vlaneseq
        %v527 = vshrl.u32 %v526, 7
        %v528 = vsub.s32 0, %v527
        %v529 = vrot.slane %v492, %v528
        %v563 = vunpack.c.l.b16 %v493
        %v564 = vunpack.c.l.b16 %v494
        %v565 = vunpack.c.l.b16 %v495
        %v566 = vunpack.c.l.b16 %v496
        %v567 = vunpack.c.l.b16 %v497
        %v568 = vunpack.c.l.b16 %v498
        %v569 = vunpack.c.l.b16 %v499
        %v570 = vunpack.c.l.b16 %v500
        %v571 = vunpack.c.l.b16 %v501
        %v572 = vunpack.c.l.b16 %v502
        %v573 = vunpack.c.l.b16 %v503
        %v574 = vunpack.c.l.b16 %v504
        %v575 = vunpack.c.l.b16 %v505
        %v576 = vunpack.c.l.b16 %v506
        %v577 = vunpack.c.l.b16 %v507
        %v578 = vunpack.c.l.b16 %v508
        %v579 = vunpack.c.l.b16 %v509
        %v580 = vunpack.c.l.b16 %v510
        %v581 = vunpack.c.l.b16 %v511
        %v582 = vunpack.c.l.b16 %v512
        %v583 = vunpack.c.l.b16 %v513
        %v584 = vunpack.c.l.b16 %v514
        %v585 = vunpack.c.l.b16 %v515
        %v586 = vunpack.c.l.b16 %v516
        %v587 = vunpack.c.l.b16 %v517
        %v588 = vunpack.c.l.b16 %v518
        %v589 = vunpack.c.l.b16 %v519
        %v590 = vunpack.c.l.b16 %v520
        %v591 = vunpack.c.l.b16 %v521
        %v592 = vunpack.c.l.b16 %v522
        %v593 = vunpack.c.l.b16 %v523
        %v594 = vunpack.c.l.b16 %v524
        %v595 = vpack.c.b16 %v564, %v563
        %v596 = vpack.c.b16 %v566, %v565
        %v597 = vpack.c.b16 %v568, %v567
        %v598 = vpack.c.b16 %v570, %v569
        %v599 = vpack.c.b16 %v572, %v571
        %v600 = vpack.c.b16 %v574, %v573
        %v601 = vpack.c.b16 %v576, %v575
        %v602 = vpack.c.b16 %v578, %v577
        %v603 = vpack.c.b16 %v580, %v579
        %v604 = vpack.c.b16 %v582, %v581
        %v605 = vpack.c.b16 %v584, %v583
        %v606 = vpack.c.b16 %v586, %v585
        %v607 = vpack.c.b16 %v588, %v587
        %v608 = vpack.c.b16 %v590, %v589
        %v609 = vpack.c.b16 %v592, %v591
        %v610 = vpack.c.b16 %v594, %v593
        %v613 = vunpack.c.l.b16 %v490
        %v614 = vunpack.c.l.b16 %v491
        %v615 = vpack.c.b16 %v614, %v613
        %vm617 = vcmask 130048
        %v619 = vsel %vm617, %v595, 0
        %v622 = vsel %vm617, %v596, 0
        %v625 = vsel %vm617, %v597, 0
        %v628 = vsel %vm617, %v598, 0
        %v631 = vsel %vm617, %v599, 0
        %v634 = vsel %vm617, %v600, 0
        %v637 = vsel %vm617, %v601, 0
        %v640 = vsel %vm617, %v602, 0
        %v643 = vsel %vm617, %v603, 0
        %v646 = vsel %vm617, %v604, 0
        %v649 = vsel %vm617, %v605, 0
        %v652 = vsel %vm617, %v606, 0
        %v655 = vsel %vm617, %v607, 0
        %v658 = vsel %vm617, %v608, 0
        %v661 = vsel %vm617, %v609, 0
        %v664 = vsel %vm617, %v610, 0
        %666 = vmatprep.subr.bf16.mxu0 0
        %667 = vmatpush1.bf16.msra.mxu0 0
        %668 = vmatprep.subr.bf16.mxu0 0
        %669 = vmatpush1.bf16.msra.mxu0 0
        %670 = vmatprep.subr.bf16.mxu0 0
        %671 = vmatpush1.bf16.msra.mxu0 0
        %672 = vmatprep.subr.bf16.mxu0 0
        %673 = vmatpush1.bf16.msra.mxu0 0
        %674 = vmatprep.subr.bf16.mxu0 0
        %675 = vmatpush1.bf16.msra.mxu0 0
        %676 = vmatprep.subr.bf16.mxu0 0
        %677 = vmatpush1.bf16.msra.mxu0 0
        %678 = vmatprep.subr.bf16.mxu0 0
        %679 = vmatpush1.bf16.msra.mxu0 0
        %680 = vmatprep.subr.bf16.mxu0 0
        %681 = vmatpush1.bf16.msra.mxu0 %v615
        %682 = vmatprep.subr.bf16.mxu0 0
        %683 = vmatpush2.bf16.msra.mxu0 0
        %684 = vmatprep.subr.bf16.mxu0 0
        %685 = vmatpush2.bf16.msra.mxu0 0
        %686 = vmatprep.subr.bf16.mxu0 0
        %687 = vmatpush2.bf16.msra.mxu0 0
        %688 = vmatprep.subr.bf16.mxu0 0
        %689 = vmatpush2.bf16.msra.mxu0 0
        %690 = vmatprep.subr.bf16.mxu0 0
        %691 = vmatpush2.bf16.msra.mxu0 0
        %692 = vmatprep.subr.bf16.mxu0 0
        %693 = vmatpush2.bf16.msra.mxu0 0
        %694 = vmatprep.subr.bf16.mxu0 0
        %695 = vmatpush2.bf16.msra.mxu0 0
        %696 = vmatprep.subr.bf16.mxu0 0
        %697 = vmatpush2.bf16.msra.mxu0 0
        %698 = vmatprep.mubr.bf16.mxu0 0
        %699 = vmatmul.mubr.bf16.gmra.mxu0 %v619
        %v700 = vpop.f32.mrf.mxu0
        %v701 = vadd.f32 %v529, %v700
        %v702 = vpop.f32.mrf.mxu0
        %v703 = vpop.f32.mrf.mxu0
        %v704 = vadd.f32 %v529, %v703
        %v705 = vpop.f32.mrf.mxu0
        %706 = vmatprep.mubr.bf16.mxu0 0
        %707 = vmatmul.mubr.bf16.gmra.mxu0 %v622
        %v708 = vpop.f32.mrf.mxu0
        %v709 = vadd.f32 %v529, %v708
        %v710 = vpop.f32.mrf.mxu0
        %v711 = vpop.f32.mrf.mxu0
        %v712 = vadd.f32 %v529, %v711
        %v713 = vpop.f32.mrf.mxu0
        %714 = vmatprep.mubr.bf16.mxu0 0
        %715 = vmatmul.mubr.bf16.gmra.mxu0 %v625
        %v716 = vpop.f32.mrf.mxu0
        %v717 = vadd.f32 %v529, %v716
        %v718 = vpop.f32.mrf.mxu0
        %v719 = vpop.f32.mrf.mxu0
        %v720 = vadd.f32 %v529, %v719
        %v721 = vpop.f32.mrf.mxu0
        %722 = vmatprep.mubr.bf16.mxu0 0
        %723 = vmatmul.mubr.bf16.gmra.mxu0 %v628
        %v724 = vpop.f32.mrf.mxu0
        %v725 = vadd.f32 %v529, %v724
        %v726 = vpop.f32.mrf.mxu0
        %v727 = vpop.f32.mrf.mxu0
        %v728 = vadd.f32 %v529, %v727
        %v729 = vpop.f32.mrf.mxu0
        %730 = vmatprep.mubr.bf16.mxu0 0
        %731 = vmatmul.mubr.bf16.gmra.mxu0 %v631
        %v732 = vpop.f32.mrf.mxu0
        %v733 = vadd.f32 %v529, %v732
        %v734 = vpop.f32.mrf.mxu0
        %v735 = vpop.f32.mrf.mxu0
        %v736 = vadd.f32 %v529, %v735
        %v737 = vpop.f32.mrf.mxu0
        %738 = vmatprep.mubr.bf16.mxu0 0
        %739 = vmatmul.mubr.bf16.gmra.mxu0 %v634
        %v740 = vpop.f32.mrf.mxu0
        %v741 = vadd.f32 %v529, %v740
        %v742 = vpop.f32.mrf.mxu0
        %v743 = vpop.f32.mrf.mxu0
        %v744 = vadd.f32 %v529, %v743
        %v745 = vpop.f32.mrf.mxu0
        %746 = vmatprep.mubr.bf16.mxu0 0
        %747 = vmatmul.mubr.bf16.gmra.mxu0 %v637
        %v748 = vpop.f32.mrf.mxu0
        %v749 = vadd.f32 %v529, %v748
        %v750 = vpop.f32.mrf.mxu0
        %v751 = vpop.f32.mrf.mxu0
        %v752 = vadd.f32 %v529, %v751
        %v753 = vpop.f32.mrf.mxu0
        %754 = vmatprep.mubr.bf16.mxu0 0
        %755 = vmatmul.mubr.bf16.gmra.mxu0 %v640
        %v756 = vpop.f32.mrf.mxu0
        %v757 = vadd.f32 %v529, %v756
        %v758 = vpop.f32.mrf.mxu0
        %v759 = vpop.f32.mrf.mxu0
        %v760 = vadd.f32 %v529, %v759
        %v761 = vpop.f32.mrf.mxu0
        %762 = vmatprep.mubr.bf16.mxu0 0
        %763 = vmatmul.mubr.bf16.gmra.mxu0 %v643
        %v764 = vpop.f32.mrf.mxu0
        %v765 = vadd.f32 %v529, %v764
        %v766 = vpop.f32.mrf.mxu0
        %v767 = vpop.f32.mrf.mxu0
        %v768 = vadd.f32 %v529, %v767
        %v769 = vpop.f32.mrf.mxu0
        %770 = vmatprep.mubr.bf16.mxu0 0
        %771 = vmatmul.mubr.bf16.gmra.mxu0 %v646
        %v772 = vpop.f32.mrf.mxu0
        %v773 = vadd.f32 %v529, %v772
        %v774 = vpop.f32.mrf.mxu0
        %v775 = vpop.f32.mrf.mxu0
        %v776 = vadd.f32 %v529, %v775
        %v777 = vpop.f32.mrf.mxu0
        %778 = vmatprep.mubr.bf16.mxu0 0
        %779 = vmatmul.mubr.bf16.gmra.mxu0 %v649
        %v780 = vpop.f32.mrf.mxu0
        %v781 = vadd.f32 %v529, %v780
        %v782 = vpop.f32.mrf.mxu0
        %v783 = vpop.f32.mrf.mxu0
        %v784 = vadd.f32 %v529, %v783
        %v785 = vpop.f32.mrf.mxu0
        %786 = vmatprep.mubr.bf16.mxu0 0
        %787 = vmatmul.mubr.bf16.gmra.mxu0 %v652
        %v788 = vpop.f32.mrf.mxu0
        %v789 = vadd.f32 %v529, %v788
        %v790 = vpop.f32.mrf.mxu0
        %v791 = vpop.f32.mrf.mxu0
        %v792 = vadd.f32 %v529, %v791
        %v793 = vpop.f32.mrf.mxu0
        %794 = vmatprep.mubr.bf16.mxu0 0
        %795 = vmatmul.mubr.bf16.gmra.mxu0 %v655
        %v796 = vpop.f32.mrf.mxu0
        %v797 = vadd.f32 %v529, %v796
        %v798 = vpop.f32.mrf.mxu0
        %v799 = vpop.f32.mrf.mxu0
        %v800 = vadd.f32 %v529, %v799
        %v801 = vpop.f32.mrf.mxu0
        %802 = vmatprep.mubr.bf16.mxu0 0
        %803 = vmatmul.mubr.bf16.gmra.mxu0 %v658
        %v804 = vpop.f32.mrf.mxu0
        %v805 = vadd.f32 %v529, %v804
        %v806 = vpop.f32.mrf.mxu0
        %v807 = vpop.f32.mrf.mxu0
        %v808 = vadd.f32 %v529, %v807
        %v809 = vpop.f32.mrf.mxu0
        %810 = vmatprep.mubr.bf16.mxu0 0
        %811 = vmatmul.mubr.bf16.gmra.mxu0 %v661
        %v812 = vpop.f32.mrf.mxu0
        %v813 = vadd.f32 %v529, %v812
        %v814 = vpop.f32.mrf.mxu0
        %v815 = vpop.f32.mrf.mxu0
        %v816 = vadd.f32 %v529, %v815
        %v817 = vpop.f32.mrf.mxu0
        %818 = vmatprep.mubr.bf16.mxu0 0
        %819 = vmatmul.mubr.bf16.gmra.mxu0 %v664
        %v820 = vpop.f32.mrf.mxu0
        %v821 = vadd.f32 %v529, %v820
        %v822 = vpop.f32.mrf.mxu0
        %v823 = vpop.f32.mrf.mxu0
        %v824 = vadd.f32 %v529, %v823
        %v825 = vpop.f32.mrf.mxu0
        %826 = vdwg.mxu0
        %v827 = vmax.f32 %v701, 0.0
        %v828 = vmax.f32 %v704, 0.0
        %v829 = vmax.f32 %v709, 0.0
        %v830 = vmax.f32 %v712, 0.0
        %v831 = vmax.f32 %v717, 0.0
        %v832 = vmax.f32 %v720, 0.0
        %v833 = vmax.f32 %v725, 0.0
        %v834 = vmax.f32 %v728, 0.0
        %v835 = vmax.f32 %v733, 0.0
        %v836 = vmax.f32 %v736, 0.0
        %v837 = vmax.f32 %v741, 0.0
        %v838 = vmax.f32 %v744, 0.0
        %v839 = vmax.f32 %v749, 0.0
        %v840 = vmax.f32 %v752, 0.0
        %v841 = vmax.f32 %v757, 0.0
        %v842 = vmax.f32 %v760, 0.0
        %v843 = vmax.f32 %v765, 0.0
        %v844 = vmax.f32 %v768, 0.0
        %v845 = vmax.f32 %v773, 0.0
        %v846 = vmax.f32 %v776, 0.0
        %v847 = vmax.f32 %v781, 0.0
        %v848 = vmax.f32 %v784, 0.0
        %v849 = vmax.f32 %v789, 0.0
        %v850 = vmax.f32 %v792, 0.0
        %v851 = vmax.f32 %v797, 0.0
        %v852 = vmax.f32 %v800, 0.0
        %v853 = vmax.f32 %v805, 0.0
        %v854 = vmax.f32 %v808, 0.0
        %v855 = vmax.f32 %v813, 0.0
        %v856 = vmax.f32 %v816, 0.0
        %v857 = vmax.f32 %v821, 0.0
        %v858 = vmax.f32 %v824, 0.0
        %v859 = vpack.c.bf16 %v828, %v827
        %v860 = vpack.c.bf16 %v830, %v829
        %v861 = vpack.c.bf16 %v832, %v831
        %v862 = vpack.c.bf16 %v834, %v833
        %v863 = vpack.c.bf16 %v836, %v835
        %v864 = vpack.c.bf16 %v838, %v837
        %v865 = vpack.c.bf16 %v840, %v839
        %v866 = vpack.c.bf16 %v842, %v841
        %v867 = vpack.c.bf16 %v844, %v843
        %v868 = vpack.c.bf16 %v846, %v845
        %v869 = vpack.c.bf16 %v848, %v847
        %v870 = vpack.c.bf16 %v850, %v849
        %v871 = vpack.c.bf16 %v852, %v851
        %v872 = vpack.c.bf16 %v854, %v853
        %v873 = vpack.c.bf16 %v856, %v855
        %v874 = vpack.c.bf16 %v858, %v857
        %p875 = scmp.gt.s32.totalorder %s34, 0
        // Predicated region
        $region69: #{tpu_custom_call.1} parent=55 // pred_check
          %p876 = pneg %p875
        $region70: #{tpu_custom_call.1} parent=55 // pred_check_branch
          %878 = sbr.rel (%p876) target = $region72
        $region71: #{tpu_custom_call.1} parent=55 // pred_region
          %v879 = vld [vmem:[%s425] sm:$0xf]
          %v880 = vld [vmem:[%s425 + $0x4] sm:$0xf]
          %v883 = vunpack.c.l.b16 %v879
          %v884 = vunpack.c.l.b16 %v880
          %v885 = vpack.c.b16 %v884, %v883
          %v887 = vsel %vm617, %v885, 0
          %889 = vmatprep.subr.bf16.mxu0 0
          %890 = vmatpush1.bf16.msra.mxu0 0
          %891 = vmatprep.subr.bf16.mxu0 0
          %892 = vmatpush1.bf16.msra.mxu0 0
          %893 = vmatprep.subr.bf16.mxu0 0
          %894 = vmatpush1.bf16.msra.mxu0 0
          %895 = vmatprep.subr.bf16.mxu0 0
          %896 = vmatpush1.bf16.msra.mxu0 0
          %897 = vmatprep.subr.bf16.mxu0 0
          %898 = vmatpush1.bf16.msra.mxu0 0
          %899 = vmatprep.subr.bf16.mxu0 0
          %900 = vmatpush1.bf16.msra.mxu0 0
          %901 = vmatprep.subr.bf16.mxu0 0
          %902 = vmatpush1.bf16.msra.mxu0 0
          %903 = vmatprep.subr.bf16.mxu0 0
          %904 = vmatpush1.bf16.msra.mxu0 %v615
          %905 = vmatprep.subr.bf16.mxu0 0
          %906 = vmatpush2.bf16.msra.mxu0 0
          %907 = vmatprep.subr.bf16.mxu0 0
          %908 = vmatpush2.bf16.msra.mxu0 0
          %909 = vmatprep.subr.bf16.mxu0 0
          %910 = vmatpush2.bf16.msra.mxu0 0
          %911 = vmatprep.subr.bf16.mxu0 0
          %912 = vmatpush2.bf16.msra.mxu0 0
          %913 = vmatprep.subr.bf16.mxu0 0
          %914 = vmatpush2.bf16.msra.mxu0 0
          %915 = vmatprep.subr.bf16.mxu0 0
          %916 = vmatpush2.bf16.msra.mxu0 0
          %917 = vmatprep.subr.bf16.mxu0 0
          %918 = vmatpush2.bf16.msra.mxu0 0
          %919 = vmatprep.subr.bf16.mxu0 0
          %920 = vmatpush2.bf16.msra.mxu0 0
          %921 = vmatprep.mubr.bf16.mxu0 0
          %922 = vmatmul.mubr.bf16.gmra.mxu0 %v887
          %v923 = vpop.f32.mrf.mxu0
          %v924 = vadd.f32 %v529, %v923
          %v925 = vpop.f32.mrf.mxu0
          %v926 = vpop.f32.mrf.mxu0
          %v927 = vadd.f32 %v529, %v926
          %v928 = vpop.f32.mrf.mxu0
          %929 = vdwg.mxu0
          %v930 = vmax.f32 %v924, 0.0
          %v931 = vmax.f32 %v927, 0.0
          %v932 = vpack.c.bf16 %v931, %v930
          %v934 = vunpack.c.l.b16 %v932
          %v935 = vunpack.c.h.b16 %v932
          %v936 = vpack.c.b16 %v934, %v934
          %v937 = vpack.c.b16 %v935, %v935
          %vm940 = vcmask 27648
          %941 = vst.msk [vmem:[#allocation2] sm:$0xf] %vm940, %v936
          %942 = vst.msk [vmem:[#allocation2 + $0x4] sm:$0xf] %vm940, %v937
        $region72: #{tpu_custom_call.1} parent=55 // pred_fallthru
          _
        %p943 = scmp.eq.s32.totalorder %s34, 0
        // Predicated region
        $region73: #{tpu_custom_call.1} parent=55 // pred_check
          %p944 = pneg %p943
        $region74: #{tpu_custom_call.1} parent=55 // pred_check_branch
          %946 = sbr.rel (%p944) target = $region76
        $region75: #{tpu_custom_call.1} parent=55 // pred_region
          %vm947 = vcmask 27648
          %948 = vst.msk [vmem:[#allocation2] sm:$0xf] %vm947, 0
          %949 = vst.msk [vmem:[#allocation2 + $0x4] sm:$0xf] %vm947, 0
        $region76: #{tpu_custom_call.1} parent=55 // pred_fallthru
          _
        %p950 = scmp.lt.s32.totalorder %s34, 0
        // Predicated region
        $region77: #{tpu_custom_call.1} parent=55 // pred_check
          %p951 = pneg %p950
        $region78: #{tpu_custom_call.1} parent=55 // pred_check_branch
          %953 = sbr.rel (%p951) target = $region80
        $region79: #{tpu_custom_call.1} parent=55 // pred_region
          %v954 = vld [vmem:[%s434] sm:$0xf]
          %v955 = vld [vmem:[%s434 + $0x4] sm:$0xf]
          %v958 = vunpack.c.l.b16 %v954
          %v959 = vunpack.c.l.b16 %v955
          %v960 = vpack.c.b16 %v959, %v958
          %v962 = vsel %vm617, %v960, 0
          %964 = vmatprep.subr.bf16.mxu0 0
          %965 = vmatpush1.bf16.msra.mxu0 0
          %966 = vmatprep.subr.bf16.mxu0 0
          %967 = vmatpush1.bf16.msra.mxu0 0
          %968 = vmatprep.subr.bf16.mxu0 0
          %969 = vmatpush1.bf16.msra.mxu0 0
          %970 = vmatprep.subr.bf16.mxu0 0
          %971 = vmatpush1.bf16.msra.mxu0 0
          %972 = vmatprep.subr.bf16.mxu0 0
          %973 = vmatpush1.bf16.msra.mxu0 0
          %974 = vmatprep.subr.bf16.mxu0 0
          %975 = vmatpush1.bf16.msra.mxu0 0
          %976 = vmatprep.subr.bf16.mxu0 0
          %977 = vmatpush1.bf16.msra.mxu0 0
          %978 = vmatprep.subr.bf16.mxu0 0
          %979 = vmatpush1.bf16.msra.mxu0 %v615
          %980 = vmatprep.subr.bf16.mxu0 0
          %981 = vmatpush2.bf16.msra.mxu0 0
          %982 = vmatprep.subr.bf16.mxu0 0
          %983 = vmatpush2.bf16.msra.mxu0 0
          %984 = vmatprep.subr.bf16.mxu0 0
          %985 = vmatpush2.bf16.msra.mxu0 0
          %986 = vmatprep.subr.bf16.mxu0 0
          %987 = vmatpush2.bf16.msra.mxu0 0
          %988 = vmatprep.subr.bf16.mxu0 0
          %989 = vmatpush2.bf16.msra.mxu0 0
          %990 = vmatprep.subr.bf16.mxu0 0
          %991 = vmatpush2.bf16.msra.mxu0 0
          %992 = vmatprep.subr.bf16.mxu0 0
          %993 = vmatpush2.bf16.msra.mxu0 0
          %994 = vmatprep.subr.bf16.mxu0 0
          %995 = vmatpush2.bf16.msra.mxu0 0
          %996 = vmatprep.mubr.bf16.mxu0 0
          %997 = vmatmul.mubr.bf16.gmra.mxu0 %v962
          %v998 = vpop.f32.mrf.mxu0
          %v999 = vadd.f32 %v529, %v998
          %v1000 = vpop.f32.mrf.mxu0
          %v1001 = vpop.f32.mrf.mxu0
          %v1002 = vadd.f32 %v529, %v1001
          %v1003 = vpop.f32.mrf.mxu0
          %1004 = vdwg.mxu0
          %v1005 = vmax.f32 %v999, 0.0
          %v1006 = vmax.f32 %v1002, 0.0
          %v1007 = vpack.c.bf16 %v1006, %v1005
          %v1009 = vunpack.c.l.b16 %v1007
          %v1010 = vunpack.c.h.b16 %v1007
          %v1011 = vpack.c.b16 %v1009, %v1009
          %v1012 = vpack.c.b16 %v1010, %v1010
          %s1015 = scalar_lea.vmem [#allocation2], 8
          %vm1016 = vcmask 27648
          %1017 = vst.msk [vmem:[%s1015] sm:$0xf] %vm1016, %v1011
          %1018 = vst.msk [vmem:[%s1015 + $0x4] sm:$0xf] %vm1016, %v1012
        $region80: #{tpu_custom_call.1} parent=55 // pred_fallthru
          _
        // Predicated region
        $region81: #{tpu_custom_call.1} parent=55 // pred_check
          %p1019 = pneg %p943
        $region82: #{tpu_custom_call.1} parent=55 // pred_check_branch
          %1021 = sbr.rel (%p1019) target = $region84
        $region83: #{tpu_custom_call.1} parent=55 // pred_region
          %s1022 = scalar_lea.vmem [#allocation2], 8
          %vm1023 = vcmask 27648
          %1024 = vst.msk [vmem:[%s1022] sm:$0xf] %vm1023, 0
          %1025 = vst.msk [vmem:[%s1022 + $0x4] sm:$0xf] %vm1023, 0
        $region84: #{tpu_custom_call.1} parent=55 // pred_fallthru
          _
        %v1026 = vld [vmem:[#allocation2] sm:$0xf]
        %v1027 = vld [vmem:[#allocation2 + $0x4] sm:$0xf]
        %v1028 = vld [vmem:[#allocation2 + $0x8] sm:$0xf]
        %v1029 = vld [vmem:[#allocation2 + $0xc] sm:$0xf]
        %v1046 = vunpack.c.l.b16 %v859
        %v1047 = vunpack.c.h.b16 %v859
        %v1048 = vunpack.c.l.b16 %v860
        %v1049 = vunpack.c.h.b16 %v860
        %v1050 = vunpack.c.l.b16 %v861
        %v1051 = vunpack.c.h.b16 %v861
        %v1052 = vunpack.c.l.b16 %v862
        %v1053 = vunpack.c.h.b16 %v862
        %v1054 = vunpack.c.l.b16 %v863
        %v1055 = vunpack.c.h.b16 %v863
        %v1056 = vunpack.c.l.b16 %v864
        %v1057 = vunpack.c.h.b16 %v864
        %v1058 = vunpack.c.l.b16 %v865
        %v1059 = vunpack.c.h.b16 %v865
        %v1060 = vunpack.c.l.b16 %v866
        %v1061 = vunpack.c.h.b16 %v866
        %v1062 = vunpack.c.l.b16 %v867
        %v1063 = vunpack.c.h.b16 %v867
        %v1064 = vunpack.c.l.b16 %v868
        %v1065 = vunpack.c.h.b16 %v868
        %v1066 = vunpack.c.l.b16 %v869
        %v1067 = vunpack.c.h.b16 %v869
        %v1068 = vunpack.c.l.b16 %v870
        %v1069 = vunpack.c.h.b16 %v870
        %v1070 = vunpack.c.l.b16 %v871
        %v1071 = vunpack.c.h.b16 %v871
        %v1072 = vunpack.c.l.b16 %v872
        %v1073 = vunpack.c.h.b16 %v872
        %v1074 = vunpack.c.l.b16 %v873
        %v1075 = vunpack.c.h.b16 %v873
        %v1076 = vunpack.c.l.b16 %v874
        %v1077 = vunpack.c.h.b16 %v874
        %v1082 = vunpack.c.l.b16 %v1026
        %v1083 = vunpack.c.l.b16 %v1027
        %v1084 = vunpack.c.l.b16 %v1028
        %v1085 = vunpack.c.l.b16 %v1029
        %v1086 = vpack.c.b16 %v1083, %v1082
        %v1087 = vpack.c.b16 %v1047, %v1046
        %v1088 = vpack.c.b16 %v1049, %v1048
        %v1089 = vpack.c.b16 %v1051, %v1050
        %v1090 = vpack.c.b16 %v1053, %v1052
        %v1091 = vpack.c.b16 %v1055, %v1054
        %v1092 = vpack.c.b16 %v1057, %v1056
        %v1093 = vpack.c.b16 %v1059, %v1058
        %v1094 = vpack.c.b16 %v1061, %v1060
        %v1095 = vpack.c.b16 %v1063, %v1062
        %v1096 = vpack.c.b16 %v1065, %v1064
        %v1097 = vpack.c.b16 %v1067, %v1066
        %v1098 = vpack.c.b16 %v1069, %v1068
        %v1099 = vpack.c.b16 %v1071, %v1070
        %v1100 = vpack.c.b16 %v1073, %v1072
        %v1101 = vpack.c.b16 %v1075, %v1074
        %v1102 = vpack.c.b16 %v1077, %v1076
        %v1103 = vpack.c.b16 %v1085, %v1084
        %v1105 = vshrl.u32 %v1086, 16
        %v1107 = vrot.slane %v1105, 7
        %v1108 = vshll.u32 %v1086, 16
        %v1110 = vor.u32 %v1107, %v1108
        %v1112 = vshrl.u32 %v1087, 16
        %v1114 = vrot.slane %v1112, 7
        %v1115 = vshll.u32 %v1087, 16
        %v1117 = vor.u32 %v1114, %v1115
        %v1119 = vshrl.u32 %v1088, 16
        %v1121 = vrot.slane %v1119, 7
        %v1122 = vshll.u32 %v1088, 16
        %v1124 = vor.u32 %v1121, %v1122
        %v1126 = vshrl.u32 %v1089, 16
        %v1128 = vrot.slane %v1126, 7
        %v1129 = vshll.u32 %v1089, 16
        %v1131 = vor.u32 %v1128, %v1129
        %v1133 = vshrl.u32 %v1090, 16
        %v1135 = vrot.slane %v1133, 7
        %v1136 = vshll.u32 %v1090, 16
        %v1138 = vor.u32 %v1135, %v1136
        %v1140 = vshrl.u32 %v1091, 16
        %v1142 = vrot.slane %v1140, 7
        %v1143 = vshll.u32 %v1091, 16
        %v1145 = vor.u32 %v1142, %v1143
        %v1147 = vshrl.u32 %v1092, 16
        %v1149 = vrot.slane %v1147, 7
        %v1150 = vshll.u32 %v1092, 16
        %v1152 = vor.u32 %v1149, %v1150
        %v1154 = vshrl.u32 %v1093, 16
        %v1156 = vrot.slane %v1154, 7
        %v1157 = vshll.u32 %v1093, 16
        %v1159 = vor.u32 %v1156, %v1157
        %v1161 = vshrl.u32 %v1094, 16
        %v1163 = vrot.slane %v1161, 7
        %v1164 = vshll.u32 %v1094, 16
        %v1166 = vor.u32 %v1163, %v1164
        %v1168 = vshrl.u32 %v1095, 16
        %v1170 = vrot.slane %v1168, 7
        %v1171 = vshll.u32 %v1095, 16
        %v1173 = vor.u32 %v1170, %v1171
        %v1175 = vshrl.u32 %v1096, 16
        %v1177 = vrot.slane %v1175, 7
        %v1178 = vshll.u32 %v1096, 16
        %v1180 = vor.u32 %v1177, %v1178
        %v1182 = vshrl.u32 %v1097, 16
        %v1184 = vrot.slane %v1182, 7
        %v1185 = vshll.u32 %v1097, 16
        %v1187 = vor.u32 %v1184, %v1185
        %v1189 = vshrl.u32 %v1098, 16
        %v1191 = vrot.slane %v1189, 7
        %v1192 = vshll.u32 %v1098, 16
        %v1194 = vor.u32 %v1191, %v1192
        %v1196 = vshrl.u32 %v1099, 16
        %v1198 = vrot.slane %v1196, 7
        %v1199 = vshll.u32 %v1099, 16
        %v1201 = vor.u32 %v1198, %v1199
        %v1203 = vshrl.u32 %v1100, 16
        %v1205 = vrot.slane %v1203, 7
        %v1206 = vshll.u32 %v1100, 16
        %v1208 = vor.u32 %v1205, %v1206
        %v1210 = vshrl.u32 %v1101, 16
        %v1212 = vrot.slane %v1210, 7
        %v1213 = vshll.u32 %v1101, 16
        %v1215 = vor.u32 %v1212, %v1213
        %v1217 = vshrl.u32 %v1102, 16
        %v1219 = vrot.slane %v1217, 7
        %v1220 = vshll.u32 %v1102, 16
        %v1222 = vor.u32 %v1219, %v1220
        %v1224 = vshrl.u32 %v1103, 16
        %v1226 = vrot.slane %v1224, 7
        %v1227 = vshll.u32 %v1103, 16
        %v1229 = vor.u32 %v1226, %v1227
        %vm1266 = vcmask 1040384
        %vm1267 = vsmask.f32 256
        %vm1268 = vmand %vm1266, %vm1267
        %v1269 = vsel %vm1268, 0, %v1110
        %v1270 = vsel %vm1268, 0, %v1117
        %v1271 = vsel %vm1268, 0, %v1124
        %v1272 = vsel %vm1268, 0, %v1131
        %v1273 = vsel %vm1268, 0, %v1138
        %v1274 = vsel %vm1268, 0, %v1145
        %v1275 = vsel %vm1268, 0, %v1152
        %v1276 = vsel %vm1268, 0, %v1159
        %v1277 = vsel %vm1268, 0, %v1166
        %v1278 = vsel %vm1268, 0, %v1173
        %v1279 = vsel %vm1268, 0, %v1180
        %v1280 = vsel %vm1268, 0, %v1187
        %v1281 = vsel %vm1268, 0, %v1194
        %v1282 = vsel %vm1268, 0, %v1201
        %v1283 = vsel %vm1268, 0, %v1208
        %v1284 = vsel %vm1268, 0, %v1215
        %v1285 = vsel %vm1268, 0, %v1222
        %v1286 = vsel %vm1268, 0, %v1229
        %v1287 = vsel %vm1268, %v1107, 0
        %v1288 = vsel %vm1268, %v1114, 0
        %v1289 = vsel %vm1268, %v1121, 0
        %v1290 = vsel %vm1268, %v1128, 0
        %v1291 = vsel %vm1268, %v1135, 0
        %v1292 = vsel %vm1268, %v1142, 0
        %v1293 = vsel %vm1268, %v1149, 0
        %v1294 = vsel %vm1268, %v1156, 0
        %v1295 = vsel %vm1268, %v1163, 0
        %v1296 = vsel %vm1268, %v1170, 0
        %v1297 = vsel %vm1268, %v1177, 0
        %v1298 = vsel %vm1268, %v1184, 0
        %v1299 = vsel %vm1268, %v1191, 0
        %v1300 = vsel %vm1268, %v1198, 0
        %v1301 = vsel %vm1268, %v1205, 0
        %v1302 = vsel %vm1268, %v1212, 0
        %v1303 = vsel %vm1268, %v1219, 0
        %v1304 = vsel %vm1268, %v1226, 0
        %v1305 = vld [vmem:[%s5] sm:$0x3]
        %vm1306 = vsmask.f32 7424
        %v1308 = vshrl.u32 %v1269, 16
        %v1310 = vshll.u32 %v1269, 16
        %v1312 = vrot.slane %v1310, 1
        %v1313 = vor.u32 %v1308, %v1312
        %v1315 = vshll.u32 %v1287, 16
        %v1317 = vrot.slane %v1315, 1
        %v1318 = vsel %vm1306, %v1313, %v1317
        %v1320 = vshrl.u32 %v1270, 16
        %v1322 = vshll.u32 %v1270, 16
        %v1324 = vrot.slane %v1322, 1
        %v1325 = vor.u32 %v1320, %v1324
        %v1327 = vshll.u32 %v1288, 16
        %v1329 = vrot.slane %v1327, 1
        %v1330 = vsel %vm1306, %v1325, %v1329
        %v1332 = vshrl.u32 %v1271, 16
        %v1334 = vshll.u32 %v1271, 16
        %v1336 = vrot.slane %v1334, 1
        %v1337 = vor.u32 %v1332, %v1336
        %v1339 = vshll.u32 %v1289, 16
        %v1341 = vrot.slane %v1339, 1
        %v1342 = vsel %vm1306, %v1337, %v1341
        %v1344 = vshrl.u32 %v1272, 16
        %v1346 = vshll.u32 %v1272, 16
        %v1348 = vrot.slane %v1346, 1
        %v1349 = vor.u32 %v1344, %v1348
        %v1351 = vshll.u32 %v1290, 16
        %v1353 = vrot.slane %v1351, 1
        %v1354 = vsel %vm1306, %v1349, %v1353
        %v1356 = vshrl.u32 %v1273, 16
        %v1358 = vshll.u32 %v1273, 16
        %v1360 = vrot.slane %v1358, 1
        %v1361 = vor.u32 %v1356, %v1360
        %v1363 = vshll.u32 %v1291, 16
        %v1365 = vrot.slane %v1363, 1
        %v1366 = vsel %vm1306, %v1361, %v1365
        %v1368 = vshrl.u32 %v1274, 16
        %v1370 = vshll.u32 %v1274, 16
        %v1372 = vrot.slane %v1370, 1
        %v1373 = vor.u32 %v1368, %v1372
        %v1375 = vshll.u32 %v1292, 16
        %v1377 = vrot.slane %v1375, 1
        %v1378 = vsel %vm1306, %v1373, %v1377
        %v1380 = vshrl.u32 %v1275, 16
        %v1382 = vshll.u32 %v1275, 16
        %v1384 = vrot.slane %v1382, 1
        %v1385 = vor.u32 %v1380, %v1384
        %v1387 = vshll.u32 %v1293, 16
        %v1389 = vrot.slane %v1387, 1
        %v1390 = vsel %vm1306, %v1385, %v1389
        %v1392 = vshrl.u32 %v1276, 16
        %v1394 = vshll.u32 %v1276, 16
        %v1396 = vrot.slane %v1394, 1
        %v1397 = vor.u32 %v1392, %v1396
        %v1399 = vshll.u32 %v1294, 16
        %v1401 = vrot.slane %v1399, 1
        %v1402 = vsel %vm1306, %v1397, %v1401
        %v1404 = vshrl.u32 %v1277, 16
        %v1406 = vshll.u32 %v1277, 16
        %v1408 = vrot.slane %v1406, 1
        %v1409 = vor.u32 %v1404, %v1408
        %v1411 = vshll.u32 %v1295, 16
        %v1413 = vrot.slane %v1411, 1
        %v1414 = vsel %vm1306, %v1409, %v1413
        %v1416 = vshrl.u32 %v1278, 16
        %v1418 = vshll.u32 %v1278, 16
        %v1420 = vrot.slane %v1418, 1
        %v1421 = vor.u32 %v1416, %v1420
        %v1423 = vshll.u32 %v1296, 16
        %v1425 = vrot.slane %v1423, 1
        %v1426 = vsel %vm1306, %v1421, %v1425
        %v1428 = vshrl.u32 %v1279, 16
        %v1430 = vshll.u32 %v1279, 16
        %v1432 = vrot.slane %v1430, 1
        %v1433 = vor.u32 %v1428, %v1432
        %v1435 = vshll.u32 %v1297, 16
        %v1437 = vrot.slane %v1435, 1
        %v1438 = vsel %vm1306, %v1433, %v1437
        %v1440 = vshrl.u32 %v1280, 16
        %v1442 = vshll.u32 %v1280, 16
        %v1444 = vrot.slane %v1442, 1
        %v1445 = vor.u32 %v1440, %v1444
        %v1447 = vshll.u32 %v1298, 16
        %v1449 = vrot.slane %v1447, 1
        %v1450 = vsel %vm1306, %v1445, %v1449
        %v1452 = vshrl.u32 %v1281, 16
        %v1454 = vshll.u32 %v1281, 16
        %v1456 = vrot.slane %v1454, 1
        %v1457 = vor.u32 %v1452, %v1456
        %v1459 = vshll.u32 %v1299, 16
        %v1461 = vrot.slane %v1459, 1
        %v1462 = vsel %vm1306, %v1457, %v1461
        %v1464 = vshrl.u32 %v1282, 16
        %v1466 = vshll.u32 %v1282, 16
        %v1468 = vrot.slane %v1466, 1
        %v1469 = vor.u32 %v1464, %v1468
        %v1471 = vshll.u32 %v1300, 16
        %v1473 = vrot.slane %v1471, 1
        %v1474 = vsel %vm1306, %v1469, %v1473
        %v1476 = vshrl.u32 %v1283, 16
        %v1478 = vshll.u32 %v1283, 16
        %v1480 = vrot.slane %v1478, 1
        %v1481 = vor.u32 %v1476, %v1480
        %v1483 = vshll.u32 %v1301, 16
        %v1485 = vrot.slane %v1483, 1
        %v1486 = vsel %vm1306, %v1481, %v1485
        %v1488 = vshrl.u32 %v1284, 16
        %v1490 = vshll.u32 %v1284, 16
        %v1492 = vrot.slane %v1490, 1
        %v1493 = vor.u32 %v1488, %v1492
        %v1495 = vshll.u32 %v1302, 16
        %v1497 = vrot.slane %v1495, 1
        %v1498 = vsel %vm1306, %v1493, %v1497
        %s1499 = scalar_lea.vmem %s5, 2
        %v1500 = vld [vmem:[%s1499] sm:$0x3]
        %vm1501 = vcmask 31744
        %v1503 = vsel %vm1501, %v1318, 0
        %v1506 = vsel %vm1501, %v1330, 0
        %v1509 = vsel %vm1501, %v1342, 0
        %v1512 = vsel %vm1501, %v1354, 0
        %v1515 = vsel %vm1501, %v1366, 0
        %v1518 = vsel %vm1501, %v1378, 0
        %v1521 = vsel %vm1501, %v1390, 0
        %v1524 = vsel %vm1501, %v1402, 0
        %v1527 = vsel %vm1501, %v1414, 0
        %v1530 = vsel %vm1501, %v1426, 0
        %v1533 = vsel %vm1501, %v1438, 0
        %v1536 = vsel %vm1501, %v1450, 0
        %v1539 = vsel %vm1501, %v1462, 0
        %v1542 = vsel %vm1501, %v1474, 0
        %v1545 = vsel %vm1501, %v1486, 0
        %v1548 = vsel %vm1501, %v1498, 0
        %vm1550 = vcmask 1041408
        %v1552 = vsel %vm1550, %v1500, 0
        %1554 = vmatprep.subr.bf16.mxu0 0
        %1555 = vmatpush1.bf16.msra.mxu0 0
        %1556 = vmatprep.subr.bf16.mxu0 0
        %1557 = vmatpush1.bf16.msra.mxu0 0
        %1558 = vmatprep.subr.bf16.mxu0 0
        %1559 = vmatpush1.bf16.msra.mxu0 0
        %1560 = vmatprep.subr.bf16.mxu0 0
        %1561 = vmatpush1.bf16.msra.mxu0 0
        %1562 = vmatprep.subr.bf16.mxu0 0
        %1563 = vmatpush1.bf16.msra.mxu0 0
        %1564 = vmatprep.subr.bf16.mxu0 0
        %1565 = vmatpush1.bf16.msra.mxu0 0
        %1566 = vmatprep.subr.bf16.mxu0 0
        %1567 = vmatpush1.bf16.msra.mxu0 0
        %1568 = vmatprep.subr.bf16.mxu0 0
        %1569 = vmatpush1.bf16.msra.mxu0 %v1552
        %1570 = vmatprep.subr.bf16.mxu0 0
        %1571 = vmatpush2.bf16.msra.mxu0 0
        %1572 = vmatprep.subr.bf16.mxu0 0
        %1573 = vmatpush2.bf16.msra.mxu0 0
        %1574 = vmatprep.subr.bf16.mxu0 0
        %1575 = vmatpush2.bf16.msra.mxu0 0
        %1576 = vmatprep.subr.bf16.mxu0 0
        %1577 = vmatpush2.bf16.msra.mxu0 0
        %1578 = vmatprep.subr.bf16.mxu0 0
        %1579 = vmatpush2.bf16.msra.mxu0 0
        %1580 = vmatprep.subr.bf16.mxu0 0
        %1581 = vmatpush2.bf16.msra.mxu0 0
        %1582 = vmatprep.subr.bf16.mxu0 0
        %1583 = vmatpush2.bf16.msra.mxu0 0
        %1584 = vmatprep.subr.bf16.mxu0 0
        %1585 = vmatpush2.bf16.msra.mxu0 0
        %1586 = vmatprep.mubr.bf16.mxu0 0
        %1587 = vmatmul.mubr.bf16.gmra.mxu0 %v1503
        %v1588 = vpop.f32.mrf.mxu0
        %v1589 = vadd.f32 0.0, %v1588
        %v1590 = vpop.f32.mrf.mxu0
        %v1591 = vpop.f32.mrf.mxu0
        %v1592 = vadd.f32 0.0, %v1591
        %v1593 = vpop.f32.mrf.mxu0
        %1594 = vmatprep.mubr.bf16.mxu0 0
        %1595 = vmatmul.mubr.bf16.gmra.mxu0 %v1506
        %v1596 = vpop.f32.mrf.mxu0
        %v1597 = vadd.f32 0.0, %v1596
        %v1598 = vpop.f32.mrf.mxu0
        %v1599 = vpop.f32.mrf.mxu0
        %v1600 = vadd.f32 0.0, %v1599
        %v1601 = vpop.f32.mrf.mxu0
        %1602 = vmatprep.mubr.bf16.mxu0 0
        %1603 = vmatmul.mubr.bf16.gmra.mxu0 %v1509
        %v1604 = vpop.f32.mrf.mxu0
        %v1605 = vadd.f32 0.0, %v1604
        %v1606 = vpop.f32.mrf.mxu0
        %v1607 = vpop.f32.mrf.mxu0
        %v1608 = vadd.f32 0.0, %v1607
        %v1609 = vpop.f32.mrf.mxu0
        %1610 = vmatprep.mubr.bf16.mxu0 0
        %1611 = vmatmul.mubr.bf16.gmra.mxu0 %v1512
        %v1612 = vpop.f32.mrf.mxu0
        %v1613 = vadd.f32 0.0, %v1612
        %v1614 = vpop.f32.mrf.mxu0
        %v1615 = vpop.f32.mrf.mxu0
        %v1616 = vadd.f32 0.0, %v1615
        %v1617 = vpop.f32.mrf.mxu0
        %1618 = vmatprep.mubr.bf16.mxu0 0
        %1619 = vmatmul.mubr.bf16.gmra.mxu0 %v1515
        %v1620 = vpop.f32.mrf.mxu0
        %v1621 = vadd.f32 0.0, %v1620
        %v1622 = vpop.f32.mrf.mxu0
        %v1623 = vpop.f32.mrf.mxu0
        %v1624 = vadd.f32 0.0, %v1623
        %v1625 = vpop.f32.mrf.mxu0
        %1626 = vmatprep.mubr.bf16.mxu0 0
        %1627 = vmatmul.mubr.bf16.gmra.mxu0 %v1518
        %v1628 = vpop.f32.mrf.mxu0
        %v1629 = vadd.f32 0.0, %v1628
        %v1630 = vpop.f32.mrf.mxu0
        %v1631 = vpop.f32.mrf.mxu0
        %v1632 = vadd.f32 0.0, %v1631
        %v1633 = vpop.f32.mrf.mxu0
        %1634 = vmatprep.mubr.bf16.mxu0 0
        %1635 = vmatmul.mubr.bf16.gmra.mxu0 %v1521
        %v1636 = vpop.f32.mrf.mxu0
        %v1637 = vadd.f32 0.0, %v1636
        %v1638 = vpop.f32.mrf.mxu0
        %v1639 = vpop.f32.mrf.mxu0
        %v1640 = vadd.f32 0.0, %v1639
        %v1641 = vpop.f32.mrf.mxu0
        %1642 = vmatprep.mubr.bf16.mxu0 0
        %1643 = vmatmul.mubr.bf16.gmra.mxu0 %v1524
        %v1644 = vpop.f32.mrf.mxu0
        %v1645 = vadd.f32 0.0, %v1644
        %v1646 = vpop.f32.mrf.mxu0
        %v1647 = vpop.f32.mrf.mxu0
        %v1648 = vadd.f32 0.0, %v1647
        %v1649 = vpop.f32.mrf.mxu0
        %1650 = vmatprep.mubr.bf16.mxu0 0
        %1651 = vmatmul.mubr.bf16.gmra.mxu0 %v1527
        %v1652 = vpop.f32.mrf.mxu0
        %v1653 = vadd.f32 0.0, %v1652
        %v1654 = vpop.f32.mrf.mxu0
        %v1655 = vpop.f32.mrf.mxu0
        %v1656 = vadd.f32 0.0, %v1655
        %v1657 = vpop.f32.mrf.mxu0
        %1658 = vmatprep.mubr.bf16.mxu0 0
        %1659 = vmatmul.mubr.bf16.gmra.mxu0 %v1530
        %v1660 = vpop.f32.mrf.mxu0
        %v1661 = vadd.f32 0.0, %v1660
        %v1662 = vpop.f32.mrf.mxu0
        %v1663 = vpop.f32.mrf.mxu0
        %v1664 = vadd.f32 0.0, %v1663
        %v1665 = vpop.f32.mrf.mxu0
        %1666 = vmatprep.mubr.bf16.mxu0 0
        %1667 = vmatmul.mubr.bf16.gmra.mxu0 %v1533
        %v1668 = vpop.f32.mrf.mxu0
        %v1669 = vadd.f32 0.0, %v1668
        %v1670 = vpop.f32.mrf.mxu0
        %v1671 = vpop.f32.mrf.mxu0
        %v1672 = vadd.f32 0.0, %v1671
        %v1673 = vpop.f32.mrf.mxu0
        %1674 = vmatprep.mubr.bf16.mxu0 0
        %1675 = vmatmul.mubr.bf16.gmra.mxu0 %v1536
        %v1676 = vpop.f32.mrf.mxu0
        %v1677 = vadd.f32 0.0, %v1676
        %v1678 = vpop.f32.mrf.mxu0
        %v1679 = vpop.f32.mrf.mxu0
        %v1680 = vadd.f32 0.0, %v1679
        %v1681 = vpop.f32.mrf.mxu0
        %1682 = vmatprep.mubr.bf16.mxu0 0
        %1683 = vmatmul.mubr.bf16.gmra.mxu0 %v1539
        %v1684 = vpop.f32.mrf.mxu0
        %v1685 = vadd.f32 0.0, %v1684
        %v1686 = vpop.f32.mrf.mxu0
        %v1687 = vpop.f32.mrf.mxu0
        %v1688 = vadd.f32 0.0, %v1687
        %v1689 = vpop.f32.mrf.mxu0
        %1690 = vmatprep.mubr.bf16.mxu0 0
        %1691 = vmatmul.mubr.bf16.gmra.mxu0 %v1542
        %v1692 = vpop.f32.mrf.mxu0
        %v1693 = vadd.f32 0.0, %v1692
        %v1694 = vpop.f32.mrf.mxu0
        %v1695 = vpop.f32.mrf.mxu0
        %v1696 = vadd.f32 0.0, %v1695
        %v1697 = vpop.f32.mrf.mxu0
        %1698 = vmatprep.mubr.bf16.mxu0 0
        %1699 = vmatmul.mubr.bf16.gmra.mxu0 %v1545
        %v1700 = vpop.f32.mrf.mxu0
        %v1701 = vadd.f32 0.0, %v1700
        %v1702 = vpop.f32.mrf.mxu0
        %v1703 = vpop.f32.mrf.mxu0
        %v1704 = vadd.f32 0.0, %v1703
        %v1705 = vpop.f32.mrf.mxu0
        %1706 = vmatprep.mubr.bf16.mxu0 0
        %1707 = vmatmul.mubr.bf16.gmra.mxu0 %v1548
        %v1708 = vpop.f32.mrf.mxu0
        %v1709 = vadd.f32 0.0, %v1708
        %v1710 = vpop.f32.mrf.mxu0
        %v1711 = vpop.f32.mrf.mxu0
        %v1712 = vadd.f32 0.0, %v1711
        %v1713 = vpop.f32.mrf.mxu0
        %1714 = vdwg.mxu0
        %v1715 = vsel %vm1501, %v1269, 0
        %v1717 = vsel %vm1501, %v1270, 0
        %v1719 = vsel %vm1501, %v1271, 0
        %v1721 = vsel %vm1501, %v1272, 0
        %v1723 = vsel %vm1501, %v1273, 0
        %v1725 = vsel %vm1501, %v1274, 0
        %v1727 = vsel %vm1501, %v1275, 0
        %v1729 = vsel %vm1501, %v1276, 0
        %v1731 = vsel %vm1501, %v1277, 0
        %v1733 = vsel %vm1501, %v1278, 0
        %v1735 = vsel %vm1501, %v1279, 0
        %v1737 = vsel %vm1501, %v1280, 0
        %v1739 = vsel %vm1501, %v1281, 0
        %v1741 = vsel %vm1501, %v1282, 0
        %v1743 = vsel %vm1501, %v1283, 0
        %v1745 = vsel %vm1501, %v1284, 0
        %v1748 = vsel %vm1550, %v1305, 0
        %1750 = vmatprep.subr.bf16.mxu0 0
        %1751 = vmatpush1.bf16.msra.mxu0 0
        %1752 = vmatprep.subr.bf16.mxu0 0
        %1753 = vmatpush1.bf16.msra.mxu0 0
        %1754 = vmatprep.subr.bf16.mxu0 0
        %1755 = vmatpush1.bf16.msra.mxu0 0
        %1756 = vmatprep.subr.bf16.mxu0 0
        %1757 = vmatpush1.bf16.msra.mxu0 0
        %1758 = vmatprep.subr.bf16.mxu0 0
        %1759 = vmatpush1.bf16.msra.mxu0 0
        %1760 = vmatprep.subr.bf16.mxu0 0
        %1761 = vmatpush1.bf16.msra.mxu0 0
        %1762 = vmatprep.subr.bf16.mxu0 0
        %1763 = vmatpush1.bf16.msra.mxu0 0
        %1764 = vmatprep.subr.bf16.mxu0 0
        %1765 = vmatpush1.bf16.msra.mxu0 %v1748
        %1766 = vmatprep.subr.bf16.mxu0 0
        %1767 = vmatpush2.bf16.msra.mxu0 0
        %1768 = vmatprep.subr.bf16.mxu0 0
        %1769 = vmatpush2.bf16.msra.mxu0 0
        %1770 = vmatprep.subr.bf16.mxu0 0
        %1771 = vmatpush2.bf16.msra.mxu0 0
        %1772 = vmatprep.subr.bf16.mxu0 0
        %1773 = vmatpush2.bf16.msra.mxu0 0
        %1774 = vmatprep.subr.bf16.mxu0 0
        %1775 = vmatpush2.bf16.msra.mxu0 0
        %1776 = vmatprep.subr.bf16.mxu0 0
        %1777 = vmatpush2.bf16.msra.mxu0 0
        %1778 = vmatprep.subr.bf16.mxu0 0
        %1779 = vmatpush2.bf16.msra.mxu0 0
        %1780 = vmatprep.subr.bf16.mxu0 0
        %1781 = vmatpush2.bf16.msra.mxu0 0
        %1782 = vmatprep.mubr.bf16.mxu0 0
        %1783 = vmatmul.mubr.bf16.gmra.mxu0 %v1715
        %v1784 = vpop.f32.mrf.mxu0
        %v1785 = vadd.f32 %v1589, %v1784
        %v1786 = vpop.f32.mrf.mxu0
        %v1787 = vpop.f32.mrf.mxu0
        %v1788 = vadd.f32 %v1592, %v1787
        %v1789 = vpop.f32.mrf.mxu0
        %1790 = vmatprep.mubr.bf16.mxu0 0
        %1791 = vmatmul.mubr.bf16.gmra.mxu0 %v1717
        %v1792 = vpop.f32.mrf.mxu0
        %v1793 = vadd.f32 %v1597, %v1792
        %v1794 = vpop.f32.mrf.mxu0
        %v1795 = vpop.f32.mrf.mxu0
        %v1796 = vadd.f32 %v1600, %v1795
        %v1797 = vpop.f32.mrf.mxu0
        %1798 = vmatprep.mubr.bf16.mxu0 0
        %1799 = vmatmul.mubr.bf16.gmra.mxu0 %v1719
        %v1800 = vpop.f32.mrf.mxu0
        %v1801 = vadd.f32 %v1605, %v1800
        %v1802 = vpop.f32.mrf.mxu0
        %v1803 = vpop.f32.mrf.mxu0
        %v1804 = vadd.f32 %v1608, %v1803
        %v1805 = vpop.f32.mrf.mxu0
        %1806 = vmatprep.mubr.bf16.mxu0 0
        %1807 = vmatmul.mubr.bf16.gmra.mxu0 %v1721
        %v1808 = vpop.f32.mrf.mxu0
        %v1809 = vadd.f32 %v1613, %v1808
        %v1810 = vpop.f32.mrf.mxu0
        %v1811 = vpop.f32.mrf.mxu0
        %v1812 = vadd.f32 %v1616, %v1811
        %v1813 = vpop.f32.mrf.mxu0
        %1814 = vmatprep.mubr.bf16.mxu0 0
        %1815 = vmatmul.mubr.bf16.gmra.mxu0 %v1723
        %v1816 = vpop.f32.mrf.mxu0
        %v1817 = vadd.f32 %v1621, %v1816
        %v1818 = vpop.f32.mrf.mxu0
        %v1819 = vpop.f32.mrf.mxu0
        %v1820 = vadd.f32 %v1624, %v1819
        %v1821 = vpop.f32.mrf.mxu0
        %1822 = vmatprep.mubr.bf16.mxu0 0
        %1823 = vmatmul.mubr.bf16.gmra.mxu0 %v1725
        %v1824 = vpop.f32.mrf.mxu0
        %v1825 = vadd.f32 %v1629, %v1824
        %v1826 = vpop.f32.mrf.mxu0
        %v1827 = vpop.f32.mrf.mxu0
        %v1828 = vadd.f32 %v1632, %v1827
        %v1829 = vpop.f32.mrf.mxu0
        %1830 = vmatprep.mubr.bf16.mxu0 0
        %1831 = vmatmul.mubr.bf16.gmra.mxu0 %v1727
        %v1832 = vpop.f32.mrf.mxu0
        %v1833 = vadd.f32 %v1637, %v1832
        %v1834 = vpop.f32.mrf.mxu0
        %v1835 = vpop.f32.mrf.mxu0
        %v1836 = vadd.f32 %v1640, %v1835
        %v1837 = vpop.f32.mrf.mxu0
        %1838 = vmatprep.mubr.bf16.mxu0 0
        %1839 = vmatmul.mubr.bf16.gmra.mxu0 %v1729
        %v1840 = vpop.f32.mrf.mxu0
        %v1841 = vadd.f32 %v1645, %v1840
        %v1842 = vpop.f32.mrf.mxu0
        %v1843 = vpop.f32.mrf.mxu0
        %v1844 = vadd.f32 %v1648, %v1843
        %v1845 = vpop.f32.mrf.mxu0
        %1846 = vmatprep.mubr.bf16.mxu0 0
        %1847 = vmatmul.mubr.bf16.gmra.mxu0 %v1731
        %v1848 = vpop.f32.mrf.mxu0
        %v1849 = vadd.f32 %v1653, %v1848
        %v1850 = vpop.f32.mrf.mxu0
        %v1851 = vpop.f32.mrf.mxu0
        %v1852 = vadd.f32 %v1656, %v1851
        %v1853 = vpop.f32.mrf.mxu0
        %1854 = vmatprep.mubr.bf16.mxu0 0
        %1855 = vmatmul.mubr.bf16.gmra.mxu0 %v1733
        %v1856 = vpop.f32.mrf.mxu0
        %v1857 = vadd.f32 %v1661, %v1856
        %v1858 = vpop.f32.mrf.mxu0
        %v1859 = vpop.f32.mrf.mxu0
        %v1860 = vadd.f32 %v1664, %v1859
        %v1861 = vpop.f32.mrf.mxu0
        %1862 = vmatprep.mubr.bf16.mxu0 0
        %1863 = vmatmul.mubr.bf16.gmra.mxu0 %v1735
        %v1864 = vpop.f32.mrf.mxu0
        %v1865 = vadd.f32 %v1669, %v1864
        %v1866 = vpop.f32.mrf.mxu0
        %v1867 = vpop.f32.mrf.mxu0
        %v1868 = vadd.f32 %v1672, %v1867
        %v1869 = vpop.f32.mrf.mxu0
        %1870 = vmatprep.mubr.bf16.mxu0 0
        %1871 = vmatmul.mubr.bf16.gmra.mxu0 %v1737
        %v1872 = vpop.f32.mrf.mxu0
        %v1873 = vadd.f32 %v1677, %v1872
        %v1874 = vpop.f32.mrf.mxu0
        %v1875 = vpop.f32.mrf.mxu0
        %v1876 = vadd.f32 %v1680, %v1875
        %v1877 = vpop.f32.mrf.mxu0
        %1878 = vmatprep.mubr.bf16.mxu0 0
        %1879 = vmatmul.mubr.bf16.gmra.mxu0 %v1739
        %v1880 = vpop.f32.mrf.mxu0
        %v1881 = vadd.f32 %v1685, %v1880
        %v1882 = vpop.f32.mrf.mxu0
        %v1883 = vpop.f32.mrf.mxu0
        %v1884 = vadd.f32 %v1688, %v1883
        %v1885 = vpop.f32.mrf.mxu0
        %1886 = vmatprep.mubr.bf16.mxu0 0
        %1887 = vmatmul.mubr.bf16.gmra.mxu0 %v1741
        %v1888 = vpop.f32.mrf.mxu0
        %v1889 = vadd.f32 %v1693, %v1888
        %v1890 = vpop.f32.mrf.mxu0
        %v1891 = vpop.f32.mrf.mxu0
        %v1892 = vadd.f32 %v1696, %v1891
        %v1893 = vpop.f32.mrf.mxu0
        %1894 = vmatprep.mubr.bf16.mxu0 0
        %1895 = vmatmul.mubr.bf16.gmra.mxu0 %v1743
        %v1896 = vpop.f32.mrf.mxu0
        %v1897 = vadd.f32 %v1701, %v1896
        %v1898 = vpop.f32.mrf.mxu0
        %v1899 = vpop.f32.mrf.mxu0
        %v1900 = vadd.f32 %v1704, %v1899
        %v1901 = vpop.f32.mrf.mxu0
        %1902 = vmatprep.mubr.bf16.mxu0 0
        %1903 = vmatmul.mubr.bf16.gmra.mxu0 %v1745
        %v1904 = vpop.f32.mrf.mxu0
        %v1905 = vadd.f32 %v1709, %v1904
        %v1906 = vpop.f32.mrf.mxu0
        %v1907 = vpop.f32.mrf.mxu0
        %v1908 = vadd.f32 %v1712, %v1907
        %v1909 = vpop.f32.mrf.mxu0
        %1910 = vdwg.mxu0
        %vm1943 = vcmask 1046528
        %v1944 = vrot.slane %v1269, 1
        %v1945 = vrot.slane %v1287, 1
        %v1946 = vsel %vm1943, %v1944, %v1945
        %v1947 = vrot.slane %v1270, 1
        %v1948 = vrot.slane %v1288, 1
        %v1949 = vsel %vm1943, %v1947, %v1948
        %v1950 = vrot.slane %v1271, 1
        %v1951 = vrot.slane %v1289, 1
        %v1952 = vsel %vm1943, %v1950, %v1951
        %v1953 = vrot.slane %v1272, 1
        %v1954 = vrot.slane %v1290, 1
        %v1955 = vsel %vm1943, %v1953, %v1954
        %v1956 = vrot.slane %v1273, 1
        %v1957 = vrot.slane %v1291, 1
        %v1958 = vsel %vm1943, %v1956, %v1957
        %v1959 = vrot.slane %v1274, 1
        %v1960 = vrot.slane %v1292, 1
        %v1961 = vsel %vm1943, %v1959, %v1960
        %v1962 = vrot.slane %v1275, 1
        %v1963 = vrot.slane %v1293, 1
        %v1964 = vsel %vm1943, %v1962, %v1963
        %v1965 = vrot.slane %v1276, 1
        %v1966 = vrot.slane %v1294, 1
        %v1967 = vsel %vm1943, %v1965, %v1966
        %v1968 = vrot.slane %v1277, 1
        %v1969 = vrot.slane %v1295, 1
        %v1970 = vsel %vm1943, %v1968, %v1969
        %v1971 = vrot.slane %v1278, 1
        %v1972 = vrot.slane %v1296, 1
        %v1973 = vsel %vm1943, %v1971, %v1972
        %v1974 = vrot.slane %v1279, 1
        %v1975 = vrot.slane %v1297, 1
        %v1976 = vsel %vm1943, %v1974, %v1975
        %v1977 = vrot.slane %v1280, 1
        %v1978 = vrot.slane %v1298, 1
        %v1979 = vsel %vm1943, %v1977, %v1978
        %v1980 = vrot.slane %v1281, 1
        %v1981 = vrot.slane %v1299, 1
        %v1982 = vsel %vm1943, %v1980, %v1981
        %v1983 = vrot.slane %v1282, 1
        %v1984 = vrot.slane %v1300, 1
        %v1985 = vsel %vm1943, %v1983, %v1984
        %v1986 = vrot.slane %v1283, 1
        %v1987 = vrot.slane %v1301, 1
        %v1988 = vsel %vm1943, %v1986, %v1987
        %v1989 = vrot.slane %v1284, 1
        %v1990 = vrot.slane %v1302, 1
        %v1991 = vsel %vm1943, %v1989, %v1990
        %s1992 = scalar_lea.vmem %s5, 4
        %v1993 = vld [vmem:[%s1992] sm:$0x3]
        %v1995 = vsel %vm1501, %v1946, 0
        %v1998 = vsel %vm1501, %v1949, 0
        %v2001 = vsel %vm1501, %v1952, 0
        %v2004 = vsel %vm1501, %v1955, 0
        %v2007 = vsel %vm1501, %v1958, 0
        %v2010 = vsel %vm1501, %v1961, 0
        %v2013 = vsel %vm1501, %v1964, 0
        %v2016 = vsel %vm1501, %v1967, 0
        %v2019 = vsel %vm1501, %v1970, 0
        %v2022 = vsel %vm1501, %v1973, 0
        %v2025 = vsel %vm1501, %v1976, 0
        %v2028 = vsel %vm1501, %v1979, 0
        %v2031 = vsel %vm1501, %v1982, 0
        %v2034 = vsel %vm1501, %v1985, 0
        %v2037 = vsel %vm1501, %v1988, 0
        %v2040 = vsel %vm1501, %v1991, 0
        %v2043 = vsel %vm1550, %v1993, 0
        %2045 = vmatprep.subr.bf16.mxu0 0
        %2046 = vmatpush1.bf16.msra.mxu0 0
        %2047 = vmatprep.subr.bf16.mxu0 0
        %2048 = vmatpush1.bf16.msra.mxu0 0
        %2049 = vmatprep.subr.bf16.mxu0 0
        %2050 = vmatpush1.bf16.msra.mxu0 0
        %2051 = vmatprep.subr.bf16.mxu0 0
        %2052 = vmatpush1.bf16.msra.mxu0 0
        %2053 = vmatprep.subr.bf16.mxu0 0
        %2054 = vmatpush1.bf16.msra.mxu0 0
        %2055 = vmatprep.subr.bf16.mxu0 0
        %2056 = vmatpush1.bf16.msra.mxu0 0
        %2057 = vmatprep.subr.bf16.mxu0 0
        %2058 = vmatpush1.bf16.msra.mxu0 0
        %2059 = vmatprep.subr.bf16.mxu0 0
        %2060 = vmatpush1.bf16.msra.mxu0 %v2043
        %2061 = vmatprep.subr.bf16.mxu0 0
        %2062 = vmatpush2.bf16.msra.mxu0 0
        %2063 = vmatprep.subr.bf16.mxu0 0
        %2064 = vmatpush2.bf16.msra.mxu0 0
        %2065 = vmatprep.subr.bf16.mxu0 0
        %2066 = vmatpush2.bf16.msra.mxu0 0
        %2067 = vmatprep.subr.bf16.mxu0 0
        %2068 = vmatpush2.bf16.msra.mxu0 0
        %2069 = vmatprep.subr.bf16.mxu0 0
        %2070 = vmatpush2.bf16.msra.mxu0 0
        %2071 = vmatprep.subr.bf16.mxu0 0
        %2072 = vmatpush2.bf16.msra.mxu0 0
        %2073 = vmatprep.subr.bf16.mxu0 0
        %2074 = vmatpush2.bf16.msra.mxu0 0
        %2075 = vmatprep.subr.bf16.mxu0 0
        %2076 = vmatpush2.bf16.msra.mxu0 0
        %2077 = vmatprep.mubr.bf16.mxu0 0
        %2078 = vmatmul.mubr.bf16.gmra.mxu0 %v1995
        %v2079 = vpop.f32.mrf.mxu0
        %v2080 = vadd.f32 0.0, %v2079
        %v2081 = vpop.f32.mrf.mxu0
        %v2082 = vpop.f32.mrf.mxu0
        %v2083 = vadd.f32 0.0, %v2082
        %v2084 = vpop.f32.mrf.mxu0
        %2085 = vmatprep.mubr.bf16.mxu0 0
        %2086 = vmatmul.mubr.bf16.gmra.mxu0 %v1998
        %v2087 = vpop.f32.mrf.mxu0
        %v2088 = vadd.f32 0.0, %v2087
        %v2089 = vpop.f32.mrf.mxu0
        %v2090 = vpop.f32.mrf.mxu0
        %v2091 = vadd.f32 0.0, %v2090
        %v2092 = vpop.f32.mrf.mxu0
        %2093 = vmatprep.mubr.bf16.mxu0 0
        %2094 = vmatmul.mubr.bf16.gmra.mxu0 %v2001
        %v2095 = vpop.f32.mrf.mxu0
        %v2096 = vadd.f32 0.0, %v2095
        %v2097 = vpop.f32.mrf.mxu0
        %v2098 = vpop.f32.mrf.mxu0
        %v2099 = vadd.f32 0.0, %v2098
        %v2100 = vpop.f32.mrf.mxu0
        %2101 = vmatprep.mubr.bf16.mxu0 0
        %2102 = vmatmul.mubr.bf16.gmra.mxu0 %v2004
        %v2103 = vpop.f32.mrf.mxu0
        %v2104 = vadd.f32 0.0, %v2103
        %v2105 = vpop.f32.mrf.mxu0
        %v2106 = vpop.f32.mrf.mxu0
        %v2107 = vadd.f32 0.0, %v2106
        %v2108 = vpop.f32.mrf.mxu0
        %2109 = vmatprep.mubr.bf16.mxu0 0
        %2110 = vmatmul.mubr.bf16.gmra.mxu0 %v2007
        %v2111 = vpop.f32.mrf.mxu0
        %v2112 = vadd.f32 0.0, %v2111
        %v2113 = vpop.f32.mrf.mxu0
        %v2114 = vpop.f32.mrf.mxu0
        %v2115 = vadd.f32 0.0, %v2114
        %v2116 = vpop.f32.mrf.mxu0
        %2117 = vmatprep.mubr.bf16.mxu0 0
        %2118 = vmatmul.mubr.bf16.gmra.mxu0 %v2010
        %v2119 = vpop.f32.mrf.mxu0
        %v2120 = vadd.f32 0.0, %v2119
        %v2121 = vpop.f32.mrf.mxu0
        %v2122 = vpop.f32.mrf.mxu0
        %v2123 = vadd.f32 0.0, %v2122
        %v2124 = vpop.f32.mrf.mxu0
        %2125 = vmatprep.mubr.bf16.mxu0 0
        %2126 = vmatmul.mubr.bf16.gmra.mxu0 %v2013
        %v2127 = vpop.f32.mrf.mxu0
        %v2128 = vadd.f32 0.0, %v2127
        %v2129 = vpop.f32.mrf.mxu0
        %v2130 = vpop.f32.mrf.mxu0
        %v2131 = vadd.f32 0.0, %v2130
        %v2132 = vpop.f32.mrf.mxu0
        %2133 = vmatprep.mubr.bf16.mxu0 0
        %2134 = vmatmul.mubr.bf16.gmra.mxu0 %v2016
        %v2135 = vpop.f32.mrf.mxu0
        %v2136 = vadd.f32 0.0, %v2135
        %v2137 = vpop.f32.mrf.mxu0
        %v2138 = vpop.f32.mrf.mxu0
        %v2139 = vadd.f32 0.0, %v2138
        %v2140 = vpop.f32.mrf.mxu0
        %2141 = vmatprep.mubr.bf16.mxu0 0
        %2142 = vmatmul.mubr.bf16.gmra.mxu0 %v2019
        %v2143 = vpop.f32.mrf.mxu0
        %v2144 = vadd.f32 0.0, %v2143
        %v2145 = vpop.f32.mrf.mxu0
        %v2146 = vpop.f32.mrf.mxu0
        %v2147 = vadd.f32 0.0, %v2146
        %v2148 = vpop.f32.mrf.mxu0
        %2149 = vmatprep.mubr.bf16.mxu0 0
        %2150 = vmatmul.mubr.bf16.gmra.mxu0 %v2022
        %v2151 = vpop.f32.mrf.mxu0
        %v2152 = vadd.f32 0.0, %v2151
        %v2153 = vpop.f32.mrf.mxu0
        %v2154 = vpop.f32.mrf.mxu0
        %v2155 = vadd.f32 0.0, %v2154
        %v2156 = vpop.f32.mrf.mxu0
        %2157 = vmatprep.mubr.bf16.mxu0 0
        %2158 = vmatmul.mubr.bf16.gmra.mxu0 %v2025
        %v2159 = vpop.f32.mrf.mxu0
        %v2160 = vadd.f32 0.0, %v2159
        %v2161 = vpop.f32.mrf.mxu0
        %v2162 = vpop.f32.mrf.mxu0
        %v2163 = vadd.f32 0.0, %v2162
        %v2164 = vpop.f32.mrf.mxu0
        %2165 = vmatprep.mubr.bf16.mxu0 0
        %2166 = vmatmul.mubr.bf16.gmra.mxu0 %v2028
        %v2167 = vpop.f32.mrf.mxu0
        %v2168 = vadd.f32 0.0, %v2167
        %v2169 = vpop.f32.mrf.mxu0
        %v2170 = vpop.f32.mrf.mxu0
        %v2171 = vadd.f32 0.0, %v2170
        %v2172 = vpop.f32.mrf.mxu0
        %2173 = vmatprep.mubr.bf16.mxu0 0
        %2174 = vmatmul.mubr.bf16.gmra.mxu0 %v2031
        %v2175 = vpop.f32.mrf.mxu0
        %v2176 = vadd.f32 0.0, %v2175
        %v2177 = vpop.f32.mrf.mxu0
        %v2178 = vpop.f32.mrf.mxu0
        %v2179 = vadd.f32 0.0, %v2178
        %v2180 = vpop.f32.mrf.mxu0
        %2181 = vmatprep.mubr.bf16.mxu0 0
        %2182 = vmatmul.mubr.bf16.gmra.mxu0 %v2034
        %v2183 = vpop.f32.mrf.mxu0
        %v2184 = vadd.f32 0.0, %v2183
        %v2185 = vpop.f32.mrf.mxu0
        %v2186 = vpop.f32.mrf.mxu0
        %v2187 = vadd.f32 0.0, %v2186
        %v2188 = vpop.f32.mrf.mxu0
        %2189 = vmatprep.mubr.bf16.mxu0 0
        %2190 = vmatmul.mubr.bf16.gmra.mxu0 %v2037
        %v2191 = vpop.f32.mrf.mxu0
        %v2192 = vadd.f32 0.0, %v2191
        %v2193 = vpop.f32.mrf.mxu0
        %v2194 = vpop.f32.mrf.mxu0
        %v2195 = vadd.f32 0.0, %v2194
        %v2196 = vpop.f32.mrf.mxu0
        %2197 = vmatprep.mubr.bf16.mxu0 0
        %2198 = vmatmul.mubr.bf16.gmra.mxu0 %v2040
        %v2199 = vpop.f32.mrf.mxu0
        %v2200 = vadd.f32 0.0, %v2199
        %v2201 = vpop.f32.mrf.mxu0
        %v2202 = vpop.f32.mrf.mxu0
        %v2203 = vadd.f32 0.0, %v2202
        %v2204 = vpop.f32.mrf.mxu0
        %2205 = vdwg.mxu0
        %v2206 = vadd.f32 %v1785, %v2080
        %v2207 = vadd.f32 %v1788, %v2083
        %v2208 = vadd.f32 %v1793, %v2088
        %v2209 = vadd.f32 %v1796, %v2091
        %v2210 = vadd.f32 %v1801, %v2096
        %v2211 = vadd.f32 %v1804, %v2099
        %v2212 = vadd.f32 %v1809, %v2104
        %v2213 = vadd.f32 %v1812, %v2107
        %v2214 = vadd.f32 %v1817, %v2112
        %v2215 = vadd.f32 %v1820, %v2115
        %v2216 = vadd.f32 %v1825, %v2120
        %v2217 = vadd.f32 %v1828, %v2123
        %v2218 = vadd.f32 %v1833, %v2128
        %v2219 = vadd.f32 %v1836, %v2131
        %v2220 = vadd.f32 %v1841, %v2136
        %v2221 = vadd.f32 %v1844, %v2139
        %v2222 = vadd.f32 %v1849, %v2144
        %v2223 = vadd.f32 %v1852, %v2147
        %v2224 = vadd.f32 %v1857, %v2152
        %v2225 = vadd.f32 %v1860, %v2155
        %v2226 = vadd.f32 %v1865, %v2160
        %v2227 = vadd.f32 %v1868, %v2163
        %v2228 = vadd.f32 %v1873, %v2168
        %v2229 = vadd.f32 %v1876, %v2171
        %v2230 = vadd.f32 %v1881, %v2176
        %v2231 = vadd.f32 %v1884, %v2179
        %v2232 = vadd.f32 %v1889, %v2184
        %v2233 = vadd.f32 %v1892, %v2187
        %v2234 = vadd.f32 %v1897, %v2192
        %v2235 = vadd.f32 %v1900, %v2195
        %v2236 = vadd.f32 %v1905, %v2200
        %v2237 = vadd.f32 %v1908, %v2203
        %s2238 = scalar_lea.vmem %s5, 6
        %v2239 = vld [vmem:[%s2238] sm:$0x3]
        %v2241 = vsel %vm1501, %v1285, 0
        %v2244 = vsel %vm1550, %v2239, 0
        %2246 = vmatprep.subr.bf16.mxu0 0
        %2247 = vmatpush1.bf16.msra.mxu0 0
        %2248 = vmatprep.subr.bf16.mxu0 0
        %2249 = vmatpush1.bf16.msra.mxu0 0
        %2250 = vmatprep.subr.bf16.mxu0 0
        %2251 = vmatpush1.bf16.msra.mxu0 0
        %2252 = vmatprep.subr.bf16.mxu0 0
        %2253 = vmatpush1.bf16.msra.mxu0 0
        %2254 = vmatprep.subr.bf16.mxu0 0
        %2255 = vmatpush1.bf16.msra.mxu0 0
        %2256 = vmatprep.subr.bf16.mxu0 0
        %2257 = vmatpush1.bf16.msra.mxu0 0
        %2258 = vmatprep.subr.bf16.mxu0 0
        %2259 = vmatpush1.bf16.msra.mxu0 0
        %2260 = vmatprep.subr.bf16.mxu0 0
        %2261 = vmatpush1.bf16.msra.mxu0 %v2244
        %2262 = vmatprep.subr.bf16.mxu0 0
        %2263 = vmatpush2.bf16.msra.mxu0 0
        %2264 = vmatprep.subr.bf16.mxu0 0
        %2265 = vmatpush2.bf16.msra.mxu0 0
        %2266 = vmatprep.subr.bf16.mxu0 0
        %2267 = vmatpush2.bf16.msra.mxu0 0
        %2268 = vmatprep.subr.bf16.mxu0 0
        %2269 = vmatpush2.bf16.msra.mxu0 0
        %2270 = vmatprep.subr.bf16.mxu0 0
        %2271 = vmatpush2.bf16.msra.mxu0 0
        %2272 = vmatprep.subr.bf16.mxu0 0
        %2273 = vmatpush2.bf16.msra.mxu0 0
        %2274 = vmatprep.subr.bf16.mxu0 0
        %2275 = vmatpush2.bf16.msra.mxu0 0
        %2276 = vmatprep.subr.bf16.mxu0 0
        %2277 = vmatpush2.bf16.msra.mxu0 0
        %2278 = vmatprep.mubr.bf16.mxu0 0
        %2279 = vmatmul.mubr.bf16.gmra.mxu0 %v1717
        %v2280 = vpop.f32.mrf.mxu0
        %v2281 = vadd.f32 0.0, %v2280
        %v2282 = vpop.f32.mrf.mxu0
        %v2283 = vpop.f32.mrf.mxu0
        %v2284 = vadd.f32 0.0, %v2283
        %v2285 = vpop.f32.mrf.mxu0
        %2286 = vmatprep.mubr.bf16.mxu0 0
        %2287 = vmatmul.mubr.bf16.gmra.mxu0 %v1719
        %v2288 = vpop.f32.mrf.mxu0
        %v2289 = vadd.f32 0.0, %v2288
        %v2290 = vpop.f32.mrf.mxu0
        %v2291 = vpop.f32.mrf.mxu0
        %v2292 = vadd.f32 0.0, %v2291
        %v2293 = vpop.f32.mrf.mxu0
        %2294 = vmatprep.mubr.bf16.mxu0 0
        %2295 = vmatmul.mubr.bf16.gmra.mxu0 %v1721
        %v2296 = vpop.f32.mrf.mxu0
        %v2297 = vadd.f32 0.0, %v2296
        %v2298 = vpop.f32.mrf.mxu0
        %v2299 = vpop.f32.mrf.mxu0
        %v2300 = vadd.f32 0.0, %v2299
        %v2301 = vpop.f32.mrf.mxu0
        %2302 = vmatprep.mubr.bf16.mxu0 0
        %2303 = vmatmul.mubr.bf16.gmra.mxu0 %v1723
        %v2304 = vpop.f32.mrf.mxu0
        %v2305 = vadd.f32 0.0, %v2304
        %v2306 = vpop.f32.mrf.mxu0
        %v2307 = vpop.f32.mrf.mxu0
        %v2308 = vadd.f32 0.0, %v2307
        %v2309 = vpop.f32.mrf.mxu0
        %2310 = vmatprep.mubr.bf16.mxu0 0
        %2311 = vmatmul.mubr.bf16.gmra.mxu0 %v1725
        %v2312 = vpop.f32.mrf.mxu0
        %v2313 = vadd.f32 0.0, %v2312
        %v2314 = vpop.f32.mrf.mxu0
        %v2315 = vpop.f32.mrf.mxu0
        %v2316 = vadd.f32 0.0, %v2315
        %v2317 = vpop.f32.mrf.mxu0
        %2318 = vmatprep.mubr.bf16.mxu0 0
        %2319 = vmatmul.mubr.bf16.gmra.mxu0 %v1727
        %v2320 = vpop.f32.mrf.mxu0
        %v2321 = vadd.f32 0.0, %v2320
        %v2322 = vpop.f32.mrf.mxu0
        %v2323 = vpop.f32.mrf.mxu0
        %v2324 = vadd.f32 0.0, %v2323
        %v2325 = vpop.f32.mrf.mxu0
        %2326 = vmatprep.mubr.bf16.mxu0 0
        %2327 = vmatmul.mubr.bf16.gmra.mxu0 %v1729
        %v2328 = vpop.f32.mrf.mxu0
        %v2329 = vadd.f32 0.0, %v2328
        %v2330 = vpop.f32.mrf.mxu0
        %v2331 = vpop.f32.mrf.mxu0
        %v2332 = vadd.f32 0.0, %v2331
        %v2333 = vpop.f32.mrf.mxu0
        %2334 = vmatprep.mubr.bf16.mxu0 0
        %2335 = vmatmul.mubr.bf16.gmra.mxu0 %v1731
        %v2336 = vpop.f32.mrf.mxu0
        %v2337 = vadd.f32 0.0, %v2336
        %v2338 = vpop.f32.mrf.mxu0
        %v2339 = vpop.f32.mrf.mxu0
        %v2340 = vadd.f32 0.0, %v2339
        %v2341 = vpop.f32.mrf.mxu0
        %2342 = vmatprep.mubr.bf16.mxu0 0
        %2343 = vmatmul.mubr.bf16.gmra.mxu0 %v1733
        %v2344 = vpop.f32.mrf.mxu0
        %v2345 = vadd.f32 0.0, %v2344
        %v2346 = vpop.f32.mrf.mxu0
        %v2347 = vpop.f32.mrf.mxu0
        %v2348 = vadd.f32 0.0, %v2347
        %v2349 = vpop.f32.mrf.mxu0
        %2350 = vmatprep.mubr.bf16.mxu0 0
        %2351 = vmatmul.mubr.bf16.gmra.mxu0 %v1735
        %v2352 = vpop.f32.mrf.mxu0
        %v2353 = vadd.f32 0.0, %v2352
        %v2354 = vpop.f32.mrf.mxu0
        %v2355 = vpop.f32.mrf.mxu0
        %v2356 = vadd.f32 0.0, %v2355
        %v2357 = vpop.f32.mrf.mxu0
        %2358 = vmatprep.mubr.bf16.mxu0 0
        %2359 = vmatmul.mubr.bf16.gmra.mxu0 %v1737
        %v2360 = vpop.f32.mrf.mxu0
        %v2361 = vadd.f32 0.0, %v2360
        %v2362 = vpop.f32.mrf.mxu0
        %v2363 = vpop.f32.mrf.mxu0
        %v2364 = vadd.f32 0.0, %v2363
        %v2365 = vpop.f32.mrf.mxu0
        %2366 = vmatprep.mubr.bf16.mxu0 0
        %2367 = vmatmul.mubr.bf16.gmra.mxu0 %v1739
        %v2368 = vpop.f32.mrf.mxu0
        %v2369 = vadd.f32 0.0, %v2368
        %v2370 = vpop.f32.mrf.mxu0
        %v2371 = vpop.f32.mrf.mxu0
        %v2372 = vadd.f32 0.0, %v2371
        %v2373 = vpop.f32.mrf.mxu0
        %2374 = vmatprep.mubr.bf16.mxu0 0
        %2375 = vmatmul.mubr.bf16.gmra.mxu0 %v1741
        %v2376 = vpop.f32.mrf.mxu0
        %v2377 = vadd.f32 0.0, %v2376
        %v2378 = vpop.f32.mrf.mxu0
        %v2379 = vpop.f32.mrf.mxu0
        %v2380 = vadd.f32 0.0, %v2379
        %v2381 = vpop.f32.mrf.mxu0
        %2382 = vmatprep.mubr.bf16.mxu0 0
        %2383 = vmatmul.mubr.bf16.gmra.mxu0 %v1743
        %v2384 = vpop.f32.mrf.mxu0
        %v2385 = vadd.f32 0.0, %v2384
        %v2386 = vpop.f32.mrf.mxu0
        %v2387 = vpop.f32.mrf.mxu0
        %v2388 = vadd.f32 0.0, %v2387
        %v2389 = vpop.f32.mrf.mxu0
        %2390 = vmatprep.mubr.bf16.mxu0 0
        %2391 = vmatmul.mubr.bf16.gmra.mxu0 %v1745
        %v2392 = vpop.f32.mrf.mxu0
        %v2393 = vadd.f32 0.0, %v2392
        %v2394 = vpop.f32.mrf.mxu0
        %v2395 = vpop.f32.mrf.mxu0
        %v2396 = vadd.f32 0.0, %v2395
        %v2397 = vpop.f32.mrf.mxu0
        %2398 = vmatprep.mubr.bf16.mxu0 0
        %2399 = vmatmul.mubr.bf16.gmra.mxu0 %v2241
        %v2400 = vpop.f32.mrf.mxu0
        %v2401 = vadd.f32 0.0, %v2400
        %v2402 = vpop.f32.mrf.mxu0
        %v2403 = vpop.f32.mrf.mxu0
        %v2404 = vadd.f32 0.0, %v2403
        %v2405 = vpop.f32.mrf.mxu0
        %2406 = vdwg.mxu0
        %v2407 = vadd.f32 %v2206, %v2281
        %v2408 = vadd.f32 %v2207, %v2284
        %v2409 = vadd.f32 %v2208, %v2289
        %v2410 = vadd.f32 %v2209, %v2292
        %v2411 = vadd.f32 %v2210, %v2297
        %v2412 = vadd.f32 %v2211, %v2300
        %v2413 = vadd.f32 %v2212, %v2305
        %v2414 = vadd.f32 %v2213, %v2308
        %v2415 = vadd.f32 %v2214, %v2313
        %v2416 = vadd.f32 %v2215, %v2316
        %v2417 = vadd.f32 %v2216, %v2321
        %v2418 = vadd.f32 %v2217, %v2324
        %v2419 = vadd.f32 %v2218, %v2329
        %v2420 = vadd.f32 %v2219, %v2332
        %v2421 = vadd.f32 %v2220, %v2337
        %v2422 = vadd.f32 %v2221, %v2340
        %v2423 = vadd.f32 %v2222, %v2345
        %v2424 = vadd.f32 %v2223, %v2348
        %v2425 = vadd.f32 %v2224, %v2353
        %v2426 = vadd.f32 %v2225, %v2356
        %v2427 = vadd.f32 %v2226, %v2361
        %v2428 = vadd.f32 %v2227, %v2364
        %v2429 = vadd.f32 %v2228, %v2369
        %v2430 = vadd.f32 %v2229, %v2372
        %v2431 = vadd.f32 %v2230, %v2377
        %v2432 = vadd.f32 %v2231, %v2380
        %v2433 = vadd.f32 %v2232, %v2385
        %v2434 = vadd.f32 %v2233, %v2388
        %v2435 = vadd.f32 %v2234, %v2393
        %v2436 = vadd.f32 %v2235, %v2396
        %v2437 = vadd.f32 %v2236, %v2401
        %v2438 = vadd.f32 %v2237, %v2404
        %v2439 = vshrl.u32 %v1285, 16
        %v2441 = vshll.u32 %v1285, 16
        %v2443 = vrot.slane %v2441, 1
        %v2444 = vor.u32 %v2439, %v2443
        %v2446 = vshll.u32 %v1303, 16
        %v2448 = vrot.slane %v2446, 1
        %v2449 = vsel %vm1306, %v2444, %v2448
        %s2450 = scalar_lea.vmem %s5, 8
        %v2451 = vld [vmem:[%s2450] sm:$0x3]
        %v2453 = vsel %vm1501, %v2449, 0
        %v2456 = vsel %vm1550, %v2451, 0
        %2458 = vmatprep.subr.bf16.mxu0 0
        %2459 = vmatpush1.bf16.msra.mxu0 0
        %2460 = vmatprep.subr.bf16.mxu0 0
        %2461 = vmatpush1.bf16.msra.mxu0 0
        %2462 = vmatprep.subr.bf16.mxu0 0
        %2463 = vmatpush1.bf16.msra.mxu0 0
        %2464 = vmatprep.subr.bf16.mxu0 0
        %2465 = vmatpush1.bf16.msra.mxu0 0
        %2466 = vmatprep.subr.bf16.mxu0 0
        %2467 = vmatpush1.bf16.msra.mxu0 0
        %2468 = vmatprep.subr.bf16.mxu0 0
        %2469 = vmatpush1.bf16.msra.mxu0 0
        %2470 = vmatprep.subr.bf16.mxu0 0
        %2471 = vmatpush1.bf16.msra.mxu0 0
        %2472 = vmatprep.subr.bf16.mxu0 0
        %2473 = vmatpush1.bf16.msra.mxu0 %v2456
        %2474 = vmatprep.subr.bf16.mxu0 0
        %2475 = vmatpush2.bf16.msra.mxu0 0
        %2476 = vmatprep.subr.bf16.mxu0 0
        %2477 = vmatpush2.bf16.msra.mxu0 0
        %2478 = vmatprep.subr.bf16.mxu0 0
        %2479 = vmatpush2.bf16.msra.mxu0 0
        %2480 = vmatprep.subr.bf16.mxu0 0
        %2481 = vmatpush2.bf16.msra.mxu0 0
        %2482 = vmatprep.subr.bf16.mxu0 0
        %2483 = vmatpush2.bf16.msra.mxu0 0
        %2484 = vmatprep.subr.bf16.mxu0 0
        %2485 = vmatpush2.bf16.msra.mxu0 0
        %2486 = vmatprep.subr.bf16.mxu0 0
        %2487 = vmatpush2.bf16.msra.mxu0 0
        %2488 = vmatprep.subr.bf16.mxu0 0
        %2489 = vmatpush2.bf16.msra.mxu0 0
        %2490 = vmatprep.mubr.bf16.mxu0 0
        %2491 = vmatmul.mubr.bf16.gmra.mxu0 %v1506
        %v2492 = vpop.f32.mrf.mxu0
        %v2493 = vadd.f32 0.0, %v2492
        %v2494 = vpop.f32.mrf.mxu0
        %v2495 = vpop.f32.mrf.mxu0
        %v2496 = vadd.f32 0.0, %v2495
        %v2497 = vpop.f32.mrf.mxu0
        %2498 = vmatprep.mubr.bf16.mxu0 0
        %2499 = vmatmul.mubr.bf16.gmra.mxu0 %v1509
        %v2500 = vpop.f32.mrf.mxu0
        %v2501 = vadd.f32 0.0, %v2500
        %v2502 = vpop.f32.mrf.mxu0
        %v2503 = vpop.f32.mrf.mxu0
        %v2504 = vadd.f32 0.0, %v2503
        %v2505 = vpop.f32.mrf.mxu0
        %2506 = vmatprep.mubr.bf16.mxu0 0
        %2507 = vmatmul.mubr.bf16.gmra.mxu0 %v1512
        %v2508 = vpop.f32.mrf.mxu0
        %v2509 = vadd.f32 0.0, %v2508
        %v2510 = vpop.f32.mrf.mxu0
        %v2511 = vpop.f32.mrf.mxu0
        %v2512 = vadd.f32 0.0, %v2511
        %v2513 = vpop.f32.mrf.mxu0
        %2514 = vmatprep.mubr.bf16.mxu0 0
        %2515 = vmatmul.mubr.bf16.gmra.mxu0 %v1515
        %v2516 = vpop.f32.mrf.mxu0
        %v2517 = vadd.f32 0.0, %v2516
        %v2518 = vpop.f32.mrf.mxu0
        %v2519 = vpop.f32.mrf.mxu0
        %v2520 = vadd.f32 0.0, %v2519
        %v2521 = vpop.f32.mrf.mxu0
        %2522 = vmatprep.mubr.bf16.mxu0 0
        %2523 = vmatmul.mubr.bf16.gmra.mxu0 %v1518
        %v2524 = vpop.f32.mrf.mxu0
        %v2525 = vadd.f32 0.0, %v2524
        %v2526 = vpop.f32.mrf.mxu0
        %v2527 = vpop.f32.mrf.mxu0
        %v2528 = vadd.f32 0.0, %v2527
        %v2529 = vpop.f32.mrf.mxu0
        %2530 = vmatprep.mubr.bf16.mxu0 0
        %2531 = vmatmul.mubr.bf16.gmra.mxu0 %v1521
        %v2532 = vpop.f32.mrf.mxu0
        %v2533 = vadd.f32 0.0, %v2532
        %v2534 = vpop.f32.mrf.mxu0
        %v2535 = vpop.f32.mrf.mxu0
        %v2536 = vadd.f32 0.0, %v2535
        %v2537 = vpop.f32.mrf.mxu0
        %2538 = vmatprep.mubr.bf16.mxu0 0
        %2539 = vmatmul.mubr.bf16.gmra.mxu0 %v1524
        %v2540 = vpop.f32.mrf.mxu0
        %v2541 = vadd.f32 0.0, %v2540
        %v2542 = vpop.f32.mrf.mxu0
        %v2543 = vpop.f32.mrf.mxu0
        %v2544 = vadd.f32 0.0, %v2543
        %v2545 = vpop.f32.mrf.mxu0
        %2546 = vmatprep.mubr.bf16.mxu0 0
        %2547 = vmatmul.mubr.bf16.gmra.mxu0 %v1527
        %v2548 = vpop.f32.mrf.mxu0
        %v2549 = vadd.f32 0.0, %v2548
        %v2550 = vpop.f32.mrf.mxu0
        %v2551 = vpop.f32.mrf.mxu0
        %v2552 = vadd.f32 0.0, %v2551
        %v2553 = vpop.f32.mrf.mxu0
        %2554 = vmatprep.mubr.bf16.mxu0 0
        %2555 = vmatmul.mubr.bf16.gmra.mxu0 %v1530
        %v2556 = vpop.f32.mrf.mxu0
        %v2557 = vadd.f32 0.0, %v2556
        %v2558 = vpop.f32.mrf.mxu0
        %v2559 = vpop.f32.mrf.mxu0
        %v2560 = vadd.f32 0.0, %v2559
        %v2561 = vpop.f32.mrf.mxu0
        %2562 = vmatprep.mubr.bf16.mxu0 0
        %2563 = vmatmul.mubr.bf16.gmra.mxu0 %v1533
        %v2564 = vpop.f32.mrf.mxu0
        %v2565 = vadd.f32 0.0, %v2564
        %v2566 = vpop.f32.mrf.mxu0
        %v2567 = vpop.f32.mrf.mxu0
        %v2568 = vadd.f32 0.0, %v2567
        %v2569 = vpop.f32.mrf.mxu0
        %2570 = vmatprep.mubr.bf16.mxu0 0
        %2571 = vmatmul.mubr.bf16.gmra.mxu0 %v1536
        %v2572 = vpop.f32.mrf.mxu0
        %v2573 = vadd.f32 0.0, %v2572
        %v2574 = vpop.f32.mrf.mxu0
        %v2575 = vpop.f32.mrf.mxu0
        %v2576 = vadd.f32 0.0, %v2575
        %v2577 = vpop.f32.mrf.mxu0
        %2578 = vmatprep.mubr.bf16.mxu0 0
        %2579 = vmatmul.mubr.bf16.gmra.mxu0 %v1539
        %v2580 = vpop.f32.mrf.mxu0
        %v2581 = vadd.f32 0.0, %v2580
        %v2582 = vpop.f32.mrf.mxu0
        %v2583 = vpop.f32.mrf.mxu0
        %v2584 = vadd.f32 0.0, %v2583
        %v2585 = vpop.f32.mrf.mxu0
        %2586 = vmatprep.mubr.bf16.mxu0 0
        %2587 = vmatmul.mubr.bf16.gmra.mxu0 %v1542
        %v2588 = vpop.f32.mrf.mxu0
        %v2589 = vadd.f32 0.0, %v2588
        %v2590 = vpop.f32.mrf.mxu0
        %v2591 = vpop.f32.mrf.mxu0
        %v2592 = vadd.f32 0.0, %v2591
        %v2593 = vpop.f32.mrf.mxu0
        %2594 = vmatprep.mubr.bf16.mxu0 0
        %2595 = vmatmul.mubr.bf16.gmra.mxu0 %v1545
        %v2596 = vpop.f32.mrf.mxu0
        %v2597 = vadd.f32 0.0, %v2596
        %v2598 = vpop.f32.mrf.mxu0
        %v2599 = vpop.f32.mrf.mxu0
        %v2600 = vadd.f32 0.0, %v2599
        %v2601 = vpop.f32.mrf.mxu0
        %2602 = vmatprep.mubr.bf16.mxu0 0
        %2603 = vmatmul.mubr.bf16.gmra.mxu0 %v1548
        %v2604 = vpop.f32.mrf.mxu0
        %v2605 = vadd.f32 0.0, %v2604
        %v2606 = vpop.f32.mrf.mxu0
        %v2607 = vpop.f32.mrf.mxu0
        %v2608 = vadd.f32 0.0, %v2607
        %v2609 = vpop.f32.mrf.mxu0
        %2610 = vmatprep.mubr.bf16.mxu0 0
        %2611 = vmatmul.mubr.bf16.gmra.mxu0 %v2453
        %v2612 = vpop.f32.mrf.mxu0
        %v2613 = vadd.f32 0.0, %v2612
        %v2614 = vpop.f32.mrf.mxu0
        %v2615 = vpop.f32.mrf.mxu0
        %v2616 = vadd.f32 0.0, %v2615
        %v2617 = vpop.f32.mrf.mxu0
        %2618 = vdwg.mxu0
        %v2619 = vadd.f32 %v2407, %v2493
        %v2620 = vadd.f32 %v2408, %v2496
        %v2621 = vadd.f32 %v2409, %v2501
        %v2622 = vadd.f32 %v2410, %v2504
        %v2623 = vadd.f32 %v2411, %v2509
        %v2624 = vadd.f32 %v2412, %v2512
        %v2625 = vadd.f32 %v2413, %v2517
        %v2626 = vadd.f32 %v2414, %v2520
        %v2627 = vadd.f32 %v2415, %v2525
        %v2628 = vadd.f32 %v2416, %v2528
        %v2629 = vadd.f32 %v2417, %v2533
        %v2630 = vadd.f32 %v2418, %v2536
        %v2631 = vadd.f32 %v2419, %v2541
        %v2632 = vadd.f32 %v2420, %v2544
        %v2633 = vadd.f32 %v2421, %v2549
        %v2634 = vadd.f32 %v2422, %v2552
        %v2635 = vadd.f32 %v2423, %v2557
        %v2636 = vadd.f32 %v2424, %v2560
        %v2637 = vadd.f32 %v2425, %v2565
        %v2638 = vadd.f32 %v2426, %v2568
        %v2639 = vadd.f32 %v2427, %v2573
        %v2640 = vadd.f32 %v2428, %v2576
        %v2641 = vadd.f32 %v2429, %v2581
        %v2642 = vadd.f32 %v2430, %v2584
        %v2643 = vadd.f32 %v2431, %v2589
        %v2644 = vadd.f32 %v2432, %v2592
        %v2645 = vadd.f32 %v2433, %v2597
        %v2646 = vadd.f32 %v2434, %v2600
        %v2647 = vadd.f32 %v2435, %v2605
        %v2648 = vadd.f32 %v2436, %v2608
        %v2649 = vadd.f32 %v2437, %v2613
        %v2650 = vadd.f32 %v2438, %v2616
        %v2653 = vrot.slane %v1285, 1
        %v2654 = vrot.slane %v1303, 1
        %v2655 = vsel %vm1943, %v2653, %v2654
        %s2656 = scalar_lea.vmem %s5, 10
        %v2657 = vld [vmem:[%s2656] sm:$0x3]
        %v2659 = vsel %vm1501, %v2655, 0
        %v2662 = vsel %vm1550, %v2657, 0
        %2664 = vmatprep.subr.bf16.mxu0 0
        %2665 = vmatpush1.bf16.msra.mxu0 0
        %2666 = vmatprep.subr.bf16.mxu0 0
        %2667 = vmatpush1.bf16.msra.mxu0 0
        %2668 = vmatprep.subr.bf16.mxu0 0
        %2669 = vmatpush1.bf16.msra.mxu0 0
        %2670 = vmatprep.subr.bf16.mxu0 0
        %2671 = vmatpush1.bf16.msra.mxu0 0
        %2672 = vmatprep.subr.bf16.mxu0 0
        %2673 = vmatpush1.bf16.msra.mxu0 0
        %2674 = vmatprep.subr.bf16.mxu0 0
        %2675 = vmatpush1.bf16.msra.mxu0 0
        %2676 = vmatprep.subr.bf16.mxu0 0
        %2677 = vmatpush1.bf16.msra.mxu0 0
        %2678 = vmatprep.subr.bf16.mxu0 0
        %2679 = vmatpush1.bf16.msra.mxu0 %v2662
        %2680 = vmatprep.subr.bf16.mxu0 0
        %2681 = vmatpush2.bf16.msra.mxu0 0
        %2682 = vmatprep.subr.bf16.mxu0 0
        %2683 = vmatpush2.bf16.msra.mxu0 0
        %2684 = vmatprep.subr.bf16.mxu0 0
        %2685 = vmatpush2.bf16.msra.mxu0 0
        %2686 = vmatprep.subr.bf16.mxu0 0
        %2687 = vmatpush2.bf16.msra.mxu0 0
        %2688 = vmatprep.subr.bf16.mxu0 0
        %2689 = vmatpush2.bf16.msra.mxu0 0
        %2690 = vmatprep.subr.bf16.mxu0 0
        %2691 = vmatpush2.bf16.msra.mxu0 0
        %2692 = vmatprep.subr.bf16.mxu0 0
        %2693 = vmatpush2.bf16.msra.mxu0 0
        %2694 = vmatprep.subr.bf16.mxu0 0
        %2695 = vmatpush2.bf16.msra.mxu0 0
        %2696 = vmatprep.mubr.bf16.mxu0 0
        %2697 = vmatmul.mubr.bf16.gmra.mxu0 %v1998
        %v2698 = vpop.f32.mrf.mxu0
        %v2699 = vadd.f32 0.0, %v2698
        %v2700 = vpop.f32.mrf.mxu0
        %v2701 = vpop.f32.mrf.mxu0
        %v2702 = vadd.f32 0.0, %v2701
        %v2703 = vpop.f32.mrf.mxu0
        %2704 = vmatprep.mubr.bf16.mxu0 0
        %2705 = vmatmul.mubr.bf16.gmra.mxu0 %v2001
        %v2706 = vpop.f32.mrf.mxu0
        %v2707 = vadd.f32 0.0, %v2706
        %v2708 = vpop.f32.mrf.mxu0
        %v2709 = vpop.f32.mrf.mxu0
        %v2710 = vadd.f32 0.0, %v2709
        %v2711 = vpop.f32.mrf.mxu0
        %2712 = vmatprep.mubr.bf16.mxu0 0
        %2713 = vmatmul.mubr.bf16.gmra.mxu0 %v2004
        %v2714 = vpop.f32.mrf.mxu0
        %v2715 = vadd.f32 0.0, %v2714
        %v2716 = vpop.f32.mrf.mxu0
        %v2717 = vpop.f32.mrf.mxu0
        %v2718 = vadd.f32 0.0, %v2717
        %v2719 = vpop.f32.mrf.mxu0
        %2720 = vmatprep.mubr.bf16.mxu0 0
        %2721 = vmatmul.mubr.bf16.gmra.mxu0 %v2007
        %v2722 = vpop.f32.mrf.mxu0
        %v2723 = vadd.f32 0.0, %v2722
        %v2724 = vpop.f32.mrf.mxu0
        %v2725 = vpop.f32.mrf.mxu0
        %v2726 = vadd.f32 0.0, %v2725
        %v2727 = vpop.f32.mrf.mxu0
        %2728 = vmatprep.mubr.bf16.mxu0 0
        %2729 = vmatmul.mubr.bf16.gmra.mxu0 %v2010
        %v2730 = vpop.f32.mrf.mxu0
        %v2731 = vadd.f32 0.0, %v2730
        %v2732 = vpop.f32.mrf.mxu0
        %v2733 = vpop.f32.mrf.mxu0
        %v2734 = vadd.f32 0.0, %v2733
        %v2735 = vpop.f32.mrf.mxu0
        %2736 = vmatprep.mubr.bf16.mxu0 0
        %2737 = vmatmul.mubr.bf16.gmra.mxu0 %v2013
        %v2738 = vpop.f32.mrf.mxu0
        %v2739 = vadd.f32 0.0, %v2738
        %v2740 = vpop.f32.mrf.mxu0
        %v2741 = vpop.f32.mrf.mxu0
        %v2742 = vadd.f32 0.0, %v2741
        %v2743 = vpop.f32.mrf.mxu0
        %2744 = vmatprep.mubr.bf16.mxu0 0
        %2745 = vmatmul.mubr.bf16.gmra.mxu0 %v2016
        %v2746 = vpop.f32.mrf.mxu0
        %v2747 = vadd.f32 0.0, %v2746
        %v2748 = vpop.f32.mrf.mxu0
        %v2749 = vpop.f32.mrf.mxu0
        %v2750 = vadd.f32 0.0, %v2749
        %v2751 = vpop.f32.mrf.mxu0
        %2752 = vmatprep.mubr.bf16.mxu0 0
        %2753 = vmatmul.mubr.bf16.gmra.mxu0 %v2019
        %v2754 = vpop.f32.mrf.mxu0
        %v2755 = vadd.f32 0.0, %v2754
        %v2756 = vpop.f32.mrf.mxu0
        %v2757 = vpop.f32.mrf.mxu0
        %v2758 = vadd.f32 0.0, %v2757
        %v2759 = vpop.f32.mrf.mxu0
        %2760 = vmatprep.mubr.bf16.mxu0 0
        %2761 = vmatmul.mubr.bf16.gmra.mxu0 %v2022
        %v2762 = vpop.f32.mrf.mxu0
        %v2763 = vadd.f32 0.0, %v2762
        %v2764 = vpop.f32.mrf.mxu0
        %v2765 = vpop.f32.mrf.mxu0
        %v2766 = vadd.f32 0.0, %v2765
        %v2767 = vpop.f32.mrf.mxu0
        %2768 = vmatprep.mubr.bf16.mxu0 0
        %2769 = vmatmul.mubr.bf16.gmra.mxu0 %v2025
        %v2770 = vpop.f32.mrf.mxu0
        %v2771 = vadd.f32 0.0, %v2770
        %v2772 = vpop.f32.mrf.mxu0
        %v2773 = vpop.f32.mrf.mxu0
        %v2774 = vadd.f32 0.0, %v2773
        %v2775 = vpop.f32.mrf.mxu0
        %2776 = vmatprep.mubr.bf16.mxu0 0
        %2777 = vmatmul.mubr.bf16.gmra.mxu0 %v2028
        %v2778 = vpop.f32.mrf.mxu0
        %v2779 = vadd.f32 0.0, %v2778
        %v2780 = vpop.f32.mrf.mxu0
        %v2781 = vpop.f32.mrf.mxu0
        %v2782 = vadd.f32 0.0, %v2781
        %v2783 = vpop.f32.mrf.mxu0
        %2784 = vmatprep.mubr.bf16.mxu0 0
        %2785 = vmatmul.mubr.bf16.gmra.mxu0 %v2031
        %v2786 = vpop.f32.mrf.mxu0
        %v2787 = vadd.f32 0.0, %v2786
        %v2788 = vpop.f32.mrf.mxu0
        %v2789 = vpop.f32.mrf.mxu0
        %v2790 = vadd.f32 0.0, %v2789
        %v2791 = vpop.f32.mrf.mxu0
        %2792 = vmatprep.mubr.bf16.mxu0 0
        %2793 = vmatmul.mubr.bf16.gmra.mxu0 %v2034
        %v2794 = vpop.f32.mrf.mxu0
        %v2795 = vadd.f32 0.0, %v2794
        %v2796 = vpop.f32.mrf.mxu0
        %v2797 = vpop.f32.mrf.mxu0
        %v2798 = vadd.f32 0.0, %v2797
        %v2799 = vpop.f32.mrf.mxu0
        %2800 = vmatprep.mubr.bf16.mxu0 0
        %2801 = vmatmul.mubr.bf16.gmra.mxu0 %v2037
        %v2802 = vpop.f32.mrf.mxu0
        %v2803 = vadd.f32 0.0, %v2802
        %v2804 = vpop.f32.mrf.mxu0
        %v2805 = vpop.f32.mrf.mxu0
        %v2806 = vadd.f32 0.0, %v2805
        %v2807 = vpop.f32.mrf.mxu0
        %2808 = vmatprep.mubr.bf16.mxu0 0
        %2809 = vmatmul.mubr.bf16.gmra.mxu0 %v2040
        %v2810 = vpop.f32.mrf.mxu0
        %v2811 = vadd.f32 0.0, %v2810
        %v2812 = vpop.f32.mrf.mxu0
        %v2813 = vpop.f32.mrf.mxu0
        %v2814 = vadd.f32 0.0, %v2813
        %v2815 = vpop.f32.mrf.mxu0
        %2816 = vmatprep.mubr.bf16.mxu0 0
        %2817 = vmatmul.mubr.bf16.gmra.mxu0 %v2659
        %v2818 = vpop.f32.mrf.mxu0
        %v2819 = vadd.f32 0.0, %v2818
        %v2820 = vpop.f32.mrf.mxu0
        %v2821 = vpop.f32.mrf.mxu0
        %v2822 = vadd.f32 0.0, %v2821
        %v2823 = vpop.f32.mrf.mxu0
        %2824 = vdwg.mxu0
        %v2825 = vadd.f32 %v2619, %v2699
        %v2826 = vadd.f32 %v2620, %v2702
        %v2827 = vadd.f32 %v2621, %v2707
        %v2828 = vadd.f32 %v2622, %v2710
        %v2829 = vadd.f32 %v2623, %v2715
        %v2830 = vadd.f32 %v2624, %v2718
        %v2831 = vadd.f32 %v2625, %v2723
        %v2832 = vadd.f32 %v2626, %v2726
        %v2833 = vadd.f32 %v2627, %v2731
        %v2834 = vadd.f32 %v2628, %v2734
        %v2835 = vadd.f32 %v2629, %v2739
        %v2836 = vadd.f32 %v2630, %v2742
        %v2837 = vadd.f32 %v2631, %v2747
        %v2838 = vadd.f32 %v2632, %v2750
        %v2839 = vadd.f32 %v2633, %v2755
        %v2840 = vadd.f32 %v2634, %v2758
        %v2841 = vadd.f32 %v2635, %v2763
        %v2842 = vadd.f32 %v2636, %v2766
        %v2843 = vadd.f32 %v2637, %v2771
        %v2844 = vadd.f32 %v2638, %v2774
        %v2845 = vadd.f32 %v2639, %v2779
        %v2846 = vadd.f32 %v2640, %v2782
        %v2847 = vadd.f32 %v2641, %v2787
        %v2848 = vadd.f32 %v2642, %v2790
        %v2849 = vadd.f32 %v2643, %v2795
        %v2850 = vadd.f32 %v2644, %v2798
        %v2851 = vadd.f32 %v2645, %v2803
        %v2852 = vadd.f32 %v2646, %v2806
        %v2853 = vadd.f32 %v2647, %v2811
        %v2854 = vadd.f32 %v2648, %v2814
        %v2855 = vadd.f32 %v2649, %v2819
        %v2856 = vadd.f32 %v2650, %v2822
        %s2857 = scalar_lea.vmem %s5, 12
        %v2858 = vld [vmem:[%s2857] sm:$0x3]
        %v2860 = vsel %vm1501, %v1286, 0
        %v2863 = vsel %vm1550, %v2858, 0
        %2865 = vmatprep.subr.bf16.mxu0 0
        %2866 = vmatpush1.bf16.msra.mxu0 0
        %2867 = vmatprep.subr.bf16.mxu0 0
        %2868 = vmatpush1.bf16.msra.mxu0 0
        %2869 = vmatprep.subr.bf16.mxu0 0
        %2870 = vmatpush1.bf16.msra.mxu0 0
        %2871 = vmatprep.subr.bf16.mxu0 0
        %2872 = vmatpush1.bf16.msra.mxu0 0
        %2873 = vmatprep.subr.bf16.mxu0 0
        %2874 = vmatpush1.bf16.msra.mxu0 0
        %2875 = vmatprep.subr.bf16.mxu0 0
        %2876 = vmatpush1.bf16.msra.mxu0 0
        %2877 = vmatprep.subr.bf16.mxu0 0
        %2878 = vmatpush1.bf16.msra.mxu0 0
        %2879 = vmatprep.subr.bf16.mxu0 0
        %2880 = vmatpush1.bf16.msra.mxu0 %v2863
        %2881 = vmatprep.subr.bf16.mxu0 0
        %2882 = vmatpush2.bf16.msra.mxu0 0
        %2883 = vmatprep.subr.bf16.mxu0 0
        %2884 = vmatpush2.bf16.msra.mxu0 0
        %2885 = vmatprep.subr.bf16.mxu0 0
        %2886 = vmatpush2.bf16.msra.mxu0 0
        %2887 = vmatprep.subr.bf16.mxu0 0
        %2888 = vmatpush2.bf16.msra.mxu0 0
        %2889 = vmatprep.subr.bf16.mxu0 0
        %2890 = vmatpush2.bf16.msra.mxu0 0
        %2891 = vmatprep.subr.bf16.mxu0 0
        %2892 = vmatpush2.bf16.msra.mxu0 0
        %2893 = vmatprep.subr.bf16.mxu0 0
        %2894 = vmatpush2.bf16.msra.mxu0 0
        %2895 = vmatprep.subr.bf16.mxu0 0
        %2896 = vmatpush2.bf16.msra.mxu0 0
        %2897 = vmatprep.mubr.bf16.mxu0 0
        %2898 = vmatmul.mubr.bf16.gmra.mxu0 %v1719
        %v2899 = vpop.f32.mrf.mxu0
        %v2900 = vadd.f32 0.0, %v2899
        %v2901 = vpop.f32.mrf.mxu0
        %v2902 = vpop.f32.mrf.mxu0
        %v2903 = vadd.f32 0.0, %v2902
        %v2904 = vpop.f32.mrf.mxu0
        %2905 = vmatprep.mubr.bf16.mxu0 0
        %2906 = vmatmul.mubr.bf16.gmra.mxu0 %v1721
        %v2907 = vpop.f32.mrf.mxu0
        %v2908 = vadd.f32 0.0, %v2907
        %v2909 = vpop.f32.mrf.mxu0
        %v2910 = vpop.f32.mrf.mxu0
        %v2911 = vadd.f32 0.0, %v2910
        %v2912 = vpop.f32.mrf.mxu0
        %2913 = vmatprep.mubr.bf16.mxu0 0
        %2914 = vmatmul.mubr.bf16.gmra.mxu0 %v1723
        %v2915 = vpop.f32.mrf.mxu0
        %v2916 = vadd.f32 0.0, %v2915
        %v2917 = vpop.f32.mrf.mxu0
        %v2918 = vpop.f32.mrf.mxu0
        %v2919 = vadd.f32 0.0, %v2918
        %v2920 = vpop.f32.mrf.mxu0
        %2921 = vmatprep.mubr.bf16.mxu0 0
        %2922 = vmatmul.mubr.bf16.gmra.mxu0 %v1725
        %v2923 = vpop.f32.mrf.mxu0
        %v2924 = vadd.f32 0.0, %v2923
        %v2925 = vpop.f32.mrf.mxu0
        %v2926 = vpop.f32.mrf.mxu0
        %v2927 = vadd.f32 0.0, %v2926
        %v2928 = vpop.f32.mrf.mxu0
        %2929 = vmatprep.mubr.bf16.mxu0 0
        %2930 = vmatmul.mubr.bf16.gmra.mxu0 %v1727
        %v2931 = vpop.f32.mrf.mxu0
        %v2932 = vadd.f32 0.0, %v2931
        %v2933 = vpop.f32.mrf.mxu0
        %v2934 = vpop.f32.mrf.mxu0
        %v2935 = vadd.f32 0.0, %v2934
        %v2936 = vpop.f32.mrf.mxu0
        %2937 = vmatprep.mubr.bf16.mxu0 0
        %2938 = vmatmul.mubr.bf16.gmra.mxu0 %v1729
        %v2939 = vpop.f32.mrf.mxu0
        %v2940 = vadd.f32 0.0, %v2939
        %v2941 = vpop.f32.mrf.mxu0
        %v2942 = vpop.f32.mrf.mxu0
        %v2943 = vadd.f32 0.0, %v2942
        %v2944 = vpop.f32.mrf.mxu0
        %2945 = vmatprep.mubr.bf16.mxu0 0
        %2946 = vmatmul.mubr.bf16.gmra.mxu0 %v1731
        %v2947 = vpop.f32.mrf.mxu0
        %v2948 = vadd.f32 0.0, %v2947
        %v2949 = vpop.f32.mrf.mxu0
        %v2950 = vpop.f32.mrf.mxu0
        %v2951 = vadd.f32 0.0, %v2950
        %v2952 = vpop.f32.mrf.mxu0
        %2953 = vmatprep.mubr.bf16.mxu0 0
        %2954 = vmatmul.mubr.bf16.gmra.mxu0 %v1733
        %v2955 = vpop.f32.mrf.mxu0
        %v2956 = vadd.f32 0.0, %v2955
        %v2957 = vpop.f32.mrf.mxu0
        %v2958 = vpop.f32.mrf.mxu0
        %v2959 = vadd.f32 0.0, %v2958
        %v2960 = vpop.f32.mrf.mxu0
        %2961 = vmatprep.mubr.bf16.mxu0 0
        %2962 = vmatmul.mubr.bf16.gmra.mxu0 %v1735
        %v2963 = vpop.f32.mrf.mxu0
        %v2964 = vadd.f32 0.0, %v2963
        %v2965 = vpop.f32.mrf.mxu0
        %v2966 = vpop.f32.mrf.mxu0
        %v2967 = vadd.f32 0.0, %v2966
        %v2968 = vpop.f32.mrf.mxu0
        %2969 = vmatprep.mubr.bf16.mxu0 0
        %2970 = vmatmul.mubr.bf16.gmra.mxu0 %v1737
        %v2971 = vpop.f32.mrf.mxu0
        %v2972 = vadd.f32 0.0, %v2971
        %v2973 = vpop.f32.mrf.mxu0
        %v2974 = vpop.f32.mrf.mxu0
        %v2975 = vadd.f32 0.0, %v2974
        %v2976 = vpop.f32.mrf.mxu0
        %2977 = vmatprep.mubr.bf16.mxu0 0
        %2978 = vmatmul.mubr.bf16.gmra.mxu0 %v1739
        %v2979 = vpop.f32.mrf.mxu0
        %v2980 = vadd.f32 0.0, %v2979
        %v2981 = vpop.f32.mrf.mxu0
        %v2982 = vpop.f32.mrf.mxu0
        %v2983 = vadd.f32 0.0, %v2982
        %v2984 = vpop.f32.mrf.mxu0
        %2985 = vmatprep.mubr.bf16.mxu0 0
        %2986 = vmatmul.mubr.bf16.gmra.mxu0 %v1741
        %v2987 = vpop.f32.mrf.mxu0
        %v2988 = vadd.f32 0.0, %v2987
        %v2989 = vpop.f32.mrf.mxu0
        %v2990 = vpop.f32.mrf.mxu0
        %v2991 = vadd.f32 0.0, %v2990
        %v2992 = vpop.f32.mrf.mxu0
        %2993 = vmatprep.mubr.bf16.mxu0 0
        %2994 = vmatmul.mubr.bf16.gmra.mxu0 %v1743
        %v2995 = vpop.f32.mrf.mxu0
        %v2996 = vadd.f32 0.0, %v2995
        %v2997 = vpop.f32.mrf.mxu0
        %v2998 = vpop.f32.mrf.mxu0
        %v2999 = vadd.f32 0.0, %v2998
        %v3000 = vpop.f32.mrf.mxu0
        %3001 = vmatprep.mubr.bf16.mxu0 0
        %3002 = vmatmul.mubr.bf16.gmra.mxu0 %v1745
        %v3003 = vpop.f32.mrf.mxu0
        %v3004 = vadd.f32 0.0, %v3003
        %v3005 = vpop.f32.mrf.mxu0
        %v3006 = vpop.f32.mrf.mxu0
        %v3007 = vadd.f32 0.0, %v3006
        %v3008 = vpop.f32.mrf.mxu0
        %3009 = vmatprep.mubr.bf16.mxu0 0
        %3010 = vmatmul.mubr.bf16.gmra.mxu0 %v2241
        %v3011 = vpop.f32.mrf.mxu0
        %v3012 = vadd.f32 0.0, %v3011
        %v3013 = vpop.f32.mrf.mxu0
        %v3014 = vpop.f32.mrf.mxu0
        %v3015 = vadd.f32 0.0, %v3014
        %v3016 = vpop.f32.mrf.mxu0
        %3017 = vmatprep.mubr.bf16.mxu0 0
        %3018 = vmatmul.mubr.bf16.gmra.mxu0 %v2860
        %v3019 = vpop.f32.mrf.mxu0
        %v3020 = vadd.f32 0.0, %v3019
        %v3021 = vpop.f32.mrf.mxu0
        %v3022 = vpop.f32.mrf.mxu0
        %v3023 = vadd.f32 0.0, %v3022
        %v3024 = vpop.f32.mrf.mxu0
        %3025 = vdwg.mxu0
        %v3026 = vadd.f32 %v2825, %v2900
        %v3027 = vadd.f32 %v2826, %v2903
        %v3028 = vadd.f32 %v2827, %v2908
        %v3029 = vadd.f32 %v2828, %v2911
        %v3030 = vadd.f32 %v2829, %v2916
        %v3031 = vadd.f32 %v2830, %v2919
        %v3032 = vadd.f32 %v2831, %v2924
        %v3033 = vadd.f32 %v2832, %v2927
        %v3034 = vadd.f32 %v2833, %v2932
        %v3035 = vadd.f32 %v2834, %v2935
        %v3036 = vadd.f32 %v2835, %v2940
        %v3037 = vadd.f32 %v2836, %v2943
        %v3038 = vadd.f32 %v2837, %v2948
        %v3039 = vadd.f32 %v2838, %v2951
        %v3040 = vadd.f32 %v2839, %v2956
        %v3041 = vadd.f32 %v2840, %v2959
        %v3042 = vadd.f32 %v2841, %v2964
        %v3043 = vadd.f32 %v2842, %v2967
        %v3044 = vadd.f32 %v2843, %v2972
        %v3045 = vadd.f32 %v2844, %v2975
        %v3046 = vadd.f32 %v2845, %v2980
        %v3047 = vadd.f32 %v2846, %v2983
        %v3048 = vadd.f32 %v2847, %v2988
        %v3049 = vadd.f32 %v2848, %v2991
        %v3050 = vadd.f32 %v2849, %v2996
        %v3051 = vadd.f32 %v2850, %v2999
        %v3052 = vadd.f32 %v2851, %v3004
        %v3053 = vadd.f32 %v2852, %v3007
        %v3054 = vadd.f32 %v2853, %v3012
        %v3055 = vadd.f32 %v2854, %v3015
        %v3056 = vadd.f32 %v2855, %v3020
        %v3057 = vadd.f32 %v2856, %v3023
        %v3058 = vshrl.u32 %v1286, 16
        %v3060 = vshll.u32 %v1286, 16
        %v3062 = vrot.slane %v3060, 1
        %v3063 = vor.u32 %v3058, %v3062
        %v3065 = vshll.u32 %v1304, 16
        %v3067 = vrot.slane %v3065, 1
        %v3068 = vsel %vm1306, %v3063, %v3067
        %s3069 = scalar_lea.vmem %s5, 14
        %v3070 = vld [vmem:[%s3069] sm:$0x3]
        %v3072 = vsel %vm1501, %v3068, 0
        %v3075 = vsel %vm1550, %v3070, 0
        %3077 = vmatprep.subr.bf16.mxu0 0
        %3078 = vmatpush1.bf16.msra.mxu0 0
        %3079 = vmatprep.subr.bf16.mxu0 0
        %3080 = vmatpush1.bf16.msra.mxu0 0
        %3081 = vmatprep.subr.bf16.mxu0 0
        %3082 = vmatpush1.bf16.msra.mxu0 0
        %3083 = vmatprep.subr.bf16.mxu0 0
        %3084 = vmatpush1.bf16.msra.mxu0 0
        %3085 = vmatprep.subr.bf16.mxu0 0
        %3086 = vmatpush1.bf16.msra.mxu0 0
        %3087 = vmatprep.subr.bf16.mxu0 0
        %3088 = vmatpush1.bf16.msra.mxu0 0
        %3089 = vmatprep.subr.bf16.mxu0 0
        %3090 = vmatpush1.bf16.msra.mxu0 0
        %3091 = vmatprep.subr.bf16.mxu0 0
        %3092 = vmatpush1.bf16.msra.mxu0 %v3075
        %3093 = vmatprep.subr.bf16.mxu0 0
        %3094 = vmatpush2.bf16.msra.mxu0 0
        %3095 = vmatprep.subr.bf16.mxu0 0
        %3096 = vmatpush2.bf16.msra.mxu0 0
        %3097 = vmatprep.subr.bf16.mxu0 0
        %3098 = vmatpush2.bf16.msra.mxu0 0
        %3099 = vmatprep.subr.bf16.mxu0 0
        %3100 = vmatpush2.bf16.msra.mxu0 0
        %3101 = vmatprep.subr.bf16.mxu0 0
        %3102 = vmatpush2.bf16.msra.mxu0 0
        %3103 = vmatprep.subr.bf16.mxu0 0
        %3104 = vmatpush2.bf16.msra.mxu0 0
        %3105 = vmatprep.subr.bf16.mxu0 0
        %3106 = vmatpush2.bf16.msra.mxu0 0
        %3107 = vmatprep.subr.bf16.mxu0 0
        %3108 = vmatpush2.bf16.msra.mxu0 0
        %3109 = vmatprep.mubr.bf16.mxu0 0
        %3110 = vmatmul.mubr.bf16.gmra.mxu0 %v1509
        %v3111 = vpop.f32.mrf.mxu0
        %v3112 = vadd.f32 0.0, %v3111
        %v3113 = vpop.f32.mrf.mxu0
        %v3114 = vpop.f32.mrf.mxu0
        %v3115 = vadd.f32 0.0, %v3114
        %v3116 = vpop.f32.mrf.mxu0
        %3117 = vmatprep.mubr.bf16.mxu0 0
        %3118 = vmatmul.mubr.bf16.gmra.mxu0 %v1512
        %v3119 = vpop.f32.mrf.mxu0
        %v3120 = vadd.f32 0.0, %v3119
        %v3121 = vpop.f32.mrf.mxu0
        %v3122 = vpop.f32.mrf.mxu0
        %v3123 = vadd.f32 0.0, %v3122
        %v3124 = vpop.f32.mrf.mxu0
        %3125 = vmatprep.mubr.bf16.mxu0 0
        %3126 = vmatmul.mubr.bf16.gmra.mxu0 %v1515
        %v3127 = vpop.f32.mrf.mxu0
        %v3128 = vadd.f32 0.0, %v3127
        %v3129 = vpop.f32.mrf.mxu0
        %v3130 = vpop.f32.mrf.mxu0
        %v3131 = vadd.f32 0.0, %v3130
        %v3132 = vpop.f32.mrf.mxu0
        %3133 = vmatprep.mubr.bf16.mxu0 0
        %3134 = vmatmul.mubr.bf16.gmra.mxu0 %v1518
        %v3135 = vpop.f32.mrf.mxu0
        %v3136 = vadd.f32 0.0, %v3135
        %v3137 = vpop.f32.mrf.mxu0
        %v3138 = vpop.f32.mrf.mxu0
        %v3139 = vadd.f32 0.0, %v3138
        %v3140 = vpop.f32.mrf.mxu0
        %3141 = vmatprep.mubr.bf16.mxu0 0
        %3142 = vmatmul.mubr.bf16.gmra.mxu0 %v1521
        %v3143 = vpop.f32.mrf.mxu0
        %v3144 = vadd.f32 0.0, %v3143
        %v3145 = vpop.f32.mrf.mxu0
        %v3146 = vpop.f32.mrf.mxu0
        %v3147 = vadd.f32 0.0, %v3146
        %v3148 = vpop.f32.mrf.mxu0
        %3149 = vmatprep.mubr.bf16.mxu0 0
        %3150 = vmatmul.mubr.bf16.gmra.mxu0 %v1524
        %v3151 = vpop.f32.mrf.mxu0
        %v3152 = vadd.f32 0.0, %v3151
        %v3153 = vpop.f32.mrf.mxu0
        %v3154 = vpop.f32.mrf.mxu0
        %v3155 = vadd.f32 0.0, %v3154
        %v3156 = vpop.f32.mrf.mxu0
        %3157 = vmatprep.mubr.bf16.mxu0 0
        %3158 = vmatmul.mubr.bf16.gmra.mxu0 %v1527
        %v3159 = vpop.f32.mrf.mxu0
        %v3160 = vadd.f32 0.0, %v3159
        %v3161 = vpop.f32.mrf.mxu0
        %v3162 = vpop.f32.mrf.mxu0
        %v3163 = vadd.f32 0.0, %v3162
        %v3164 = vpop.f32.mrf.mxu0
        %3165 = vmatprep.mubr.bf16.mxu0 0
        %3166 = vmatmul.mubr.bf16.gmra.mxu0 %v1530
        %v3167 = vpop.f32.mrf.mxu0
        %v3168 = vadd.f32 0.0, %v3167
        %v3169 = vpop.f32.mrf.mxu0
        %v3170 = vpop.f32.mrf.mxu0
        %v3171 = vadd.f32 0.0, %v3170
        %v3172 = vpop.f32.mrf.mxu0
        %3173 = vmatprep.mubr.bf16.mxu0 0
        %3174 = vmatmul.mubr.bf16.gmra.mxu0 %v1533
        %v3175 = vpop.f32.mrf.mxu0
        %v3176 = vadd.f32 0.0, %v3175
        %v3177 = vpop.f32.mrf.mxu0
        %v3178 = vpop.f32.mrf.mxu0
        %v3179 = vadd.f32 0.0, %v3178
        %v3180 = vpop.f32.mrf.mxu0
        %3181 = vmatprep.mubr.bf16.mxu0 0
        %3182 = vmatmul.mubr.bf16.gmra.mxu0 %v1536
        %v3183 = vpop.f32.mrf.mxu0
        %v3184 = vadd.f32 0.0, %v3183
        %v3185 = vpop.f32.mrf.mxu0
        %v3186 = vpop.f32.mrf.mxu0
        %v3187 = vadd.f32 0.0, %v3186
        %v3188 = vpop.f32.mrf.mxu0
        %3189 = vmatprep.mubr.bf16.mxu0 0
        %3190 = vmatmul.mubr.bf16.gmra.mxu0 %v1539
        %v3191 = vpop.f32.mrf.mxu0
        %v3192 = vadd.f32 0.0, %v3191
        %v3193 = vpop.f32.mrf.mxu0
        %v3194 = vpop.f32.mrf.mxu0
        %v3195 = vadd.f32 0.0, %v3194
        %v3196 = vpop.f32.mrf.mxu0
        %3197 = vmatprep.mubr.bf16.mxu0 0
        %3198 = vmatmul.mubr.bf16.gmra.mxu0 %v1542
        %v3199 = vpop.f32.mrf.mxu0
        %v3200 = vadd.f32 0.0, %v3199
        %v3201 = vpop.f32.mrf.mxu0
        %v3202 = vpop.f32.mrf.mxu0
        %v3203 = vadd.f32 0.0, %v3202
        %v3204 = vpop.f32.mrf.mxu0
        %3205 = vmatprep.mubr.bf16.mxu0 0
        %3206 = vmatmul.mubr.bf16.gmra.mxu0 %v1545
        %v3207 = vpop.f32.mrf.mxu0
        %v3208 = vadd.f32 0.0, %v3207
        %v3209 = vpop.f32.mrf.mxu0
        %v3210 = vpop.f32.mrf.mxu0
        %v3211 = vadd.f32 0.0, %v3210
        %v3212 = vpop.f32.mrf.mxu0
        %3213 = vmatprep.mubr.bf16.mxu0 0
        %3214 = vmatmul.mubr.bf16.gmra.mxu0 %v1548
        %v3215 = vpop.f32.mrf.mxu0
        %v3216 = vadd.f32 0.0, %v3215
        %v3217 = vpop.f32.mrf.mxu0
        %v3218 = vpop.f32.mrf.mxu0
        %v3219 = vadd.f32 0.0, %v3218
        %v3220 = vpop.f32.mrf.mxu0
        %3221 = vmatprep.mubr.bf16.mxu0 0
        %3222 = vmatmul.mubr.bf16.gmra.mxu0 %v2453
        %v3223 = vpop.f32.mrf.mxu0
        %v3224 = vadd.f32 0.0, %v3223
        %v3225 = vpop.f32.mrf.mxu0
        %v3226 = vpop.f32.mrf.mxu0
        %v3227 = vadd.f32 0.0, %v3226
        %v3228 = vpop.f32.mrf.mxu0
        %3229 = vmatprep.mubr.bf16.mxu0 0
        %3230 = vmatmul.mubr.bf16.gmra.mxu0 %v3072
        %v3231 = vpop.f32.mrf.mxu0
        %v3232 = vadd.f32 0.0, %v3231
        %v3233 = vpop.f32.mrf.mxu0
        %v3234 = vpop.f32.mrf.mxu0
        %v3235 = vadd.f32 0.0, %v3234
        %v3236 = vpop.f32.mrf.mxu0
        %3237 = vdwg.mxu0
        %v3238 = vadd.f32 %v3026, %v3112
        %v3239 = vadd.f32 %v3027, %v3115
        %v3240 = vadd.f32 %v3028, %v3120
        %v3241 = vadd.f32 %v3029, %v3123
        %v3242 = vadd.f32 %v3030, %v3128
        %v3243 = vadd.f32 %v3031, %v3131
        %v3244 = vadd.f32 %v3032, %v3136
        %v3245 = vadd.f32 %v3033, %v3139
        %v3246 = vadd.f32 %v3034, %v3144
        %v3247 = vadd.f32 %v3035, %v3147
        %v3248 = vadd.f32 %v3036, %v3152
        %v3249 = vadd.f32 %v3037, %v3155
        %v3250 = vadd.f32 %v3038, %v3160
        %v3251 = vadd.f32 %v3039, %v3163
        %v3252 = vadd.f32 %v3040, %v3168
        %v3253 = vadd.f32 %v3041, %v3171
        %v3254 = vadd.f32 %v3042, %v3176
        %v3255 = vadd.f32 %v3043, %v3179
        %v3256 = vadd.f32 %v3044, %v3184
        %v3257 = vadd.f32 %v3045, %v3187
        %v3258 = vadd.f32 %v3046, %v3192
        %v3259 = vadd.f32 %v3047, %v3195
        %v3260 = vadd.f32 %v3048, %v3200
        %v3261 = vadd.f32 %v3049, %v3203
        %v3262 = vadd.f32 %v3050, %v3208
        %v3263 = vadd.f32 %v3051, %v3211
        %v3264 = vadd.f32 %v3052, %v3216
        %v3265 = vadd.f32 %v3053, %v3219
        %v3266 = vadd.f32 %v3054, %v3224
        %v3267 = vadd.f32 %v3055, %v3227
        %v3268 = vadd.f32 %v3056, %v3232
        %v3269 = vadd.f32 %v3057, %v3235
        %v3272 = vrot.slane %v1286, 1
        %v3273 = vrot.slane %v1304, 1
        %v3274 = vsel %vm1943, %v3272, %v3273
        %s3275 = scalar_lea.vmem %s5, 16
        %v3276 = vld [vmem:[%s3275] sm:$0x3]
        %v3278 = vsel %vm1501, %v3274, 0
        %v3281 = vsel %vm1550, %v3276, 0
        %3283 = vmatprep.subr.bf16.mxu0 0
        %3284 = vmatpush1.bf16.msra.mxu0 0
        %3285 = vmatprep.subr.bf16.mxu0 0
        %3286 = vmatpush1.bf16.msra.mxu0 0
        %3287 = vmatprep.subr.bf16.mxu0 0
        %3288 = vmatpush1.bf16.msra.mxu0 0
        %3289 = vmatprep.subr.bf16.mxu0 0
        %3290 = vmatpush1.bf16.msra.mxu0 0
        %3291 = vmatprep.subr.bf16.mxu0 0
        %3292 = vmatpush1.bf16.msra.mxu0 0
        %3293 = vmatprep.subr.bf16.mxu0 0
        %3294 = vmatpush1.bf16.msra.mxu0 0
        %3295 = vmatprep.subr.bf16.mxu0 0
        %3296 = vmatpush1.bf16.msra.mxu0 0
        %3297 = vmatprep.subr.bf16.mxu0 0
        %3298 = vmatpush1.bf16.msra.mxu0 %v3281
        %3299 = vmatprep.subr.bf16.mxu0 0
        %3300 = vmatpush2.bf16.msra.mxu0 0
        %3301 = vmatprep.subr.bf16.mxu0 0
        %3302 = vmatpush2.bf16.msra.mxu0 0
        %3303 = vmatprep.subr.bf16.mxu0 0
        %3304 = vmatpush2.bf16.msra.mxu0 0
        %3305 = vmatprep.subr.bf16.mxu0 0
        %3306 = vmatpush2.bf16.msra.mxu0 0
        %3307 = vmatprep.subr.bf16.mxu0 0
        %3308 = vmatpush2.bf16.msra.mxu0 0
        %3309 = vmatprep.subr.bf16.mxu0 0
        %3310 = vmatpush2.bf16.msra.mxu0 0
        %3311 = vmatprep.subr.bf16.mxu0 0
        %3312 = vmatpush2.bf16.msra.mxu0 0
        %3313 = vmatprep.subr.bf16.mxu0 0
        %3314 = vmatpush2.bf16.msra.mxu0 0
        %3315 = vmatprep.mubr.bf16.mxu0 0
        %3316 = vmatmul.mubr.bf16.gmra.mxu0 %v2001
        %v3317 = vpop.f32.mrf.mxu0
        %v3318 = vadd.f32 0.0, %v3317
        %v3319 = vpop.f32.mrf.mxu0
        %v3320 = vpop.f32.mrf.mxu0
        %v3321 = vadd.f32 0.0, %v3320
        %v3322 = vpop.f32.mrf.mxu0
        %3323 = vmatprep.mubr.bf16.mxu0 0
        %3324 = vmatmul.mubr.bf16.gmra.mxu0 %v2004
        %v3325 = vpop.f32.mrf.mxu0
        %v3326 = vadd.f32 0.0, %v3325
        %v3327 = vpop.f32.mrf.mxu0
        %v3328 = vpop.f32.mrf.mxu0
        %v3329 = vadd.f32 0.0, %v3328
        %v3330 = vpop.f32.mrf.mxu0
        %3331 = vmatprep.mubr.bf16.mxu0 0
        %3332 = vmatmul.mubr.bf16.gmra.mxu0 %v2007
        %v3333 = vpop.f32.mrf.mxu0
        %v3334 = vadd.f32 0.0, %v3333
        %v3335 = vpop.f32.mrf.mxu0
        %v3336 = vpop.f32.mrf.mxu0
        %v3337 = vadd.f32 0.0, %v3336
        %v3338 = vpop.f32.mrf.mxu0
        %3339 = vmatprep.mubr.bf16.mxu0 0
        %3340 = vmatmul.mubr.bf16.gmra.mxu0 %v2010
        %v3341 = vpop.f32.mrf.mxu0
        %v3342 = vadd.f32 0.0, %v3341
        %v3343 = vpop.f32.mrf.mxu0
        %v3344 = vpop.f32.mrf.mxu0
        %v3345 = vadd.f32 0.0, %v3344
        %v3346 = vpop.f32.mrf.mxu0
        %3347 = vmatprep.mubr.bf16.mxu0 0
        %3348 = vmatmul.mubr.bf16.gmra.mxu0 %v2013
        %v3349 = vpop.f32.mrf.mxu0
        %v3350 = vadd.f32 0.0, %v3349
        %v3351 = vpop.f32.mrf.mxu0
        %v3352 = vpop.f32.mrf.mxu0
        %v3353 = vadd.f32 0.0, %v3352
        %v3354 = vpop.f32.mrf.mxu0
        %3355 = vmatprep.mubr.bf16.mxu0 0
        %3356 = vmatmul.mubr.bf16.gmra.mxu0 %v2016
        %v3357 = vpop.f32.mrf.mxu0
        %v3358 = vadd.f32 0.0, %v3357
        %v3359 = vpop.f32.mrf.mxu0
        %v3360 = vpop.f32.mrf.mxu0
        %v3361 = vadd.f32 0.0, %v3360
        %v3362 = vpop.f32.mrf.mxu0
        %3363 = vmatprep.mubr.bf16.mxu0 0
        %3364 = vmatmul.mubr.bf16.gmra.mxu0 %v2019
        %v3365 = vpop.f32.mrf.mxu0
        %v3366 = vadd.f32 0.0, %v3365
        %v3367 = vpop.f32.mrf.mxu0
        %v3368 = vpop.f32.mrf.mxu0
        %v3369 = vadd.f32 0.0, %v3368
        %v3370 = vpop.f32.mrf.mxu0
        %3371 = vmatprep.mubr.bf16.mxu0 0
        %3372 = vmatmul.mubr.bf16.gmra.mxu0 %v2022
        %v3373 = vpop.f32.mrf.mxu0
        %v3374 = vadd.f32 0.0, %v3373
        %v3375 = vpop.f32.mrf.mxu0
        %v3376 = vpop.f32.mrf.mxu0
        %v3377 = vadd.f32 0.0, %v3376
        %v3378 = vpop.f32.mrf.mxu0
        %3379 = vmatprep.mubr.bf16.mxu0 0
        %3380 = vmatmul.mubr.bf16.gmra.mxu0 %v2025
        %v3381 = vpop.f32.mrf.mxu0
        %v3382 = vadd.f32 0.0, %v3381
        %v3383 = vpop.f32.mrf.mxu0
        %v3384 = vpop.f32.mrf.mxu0
        %v3385 = vadd.f32 0.0, %v3384
        %v3386 = vpop.f32.mrf.mxu0
        %3387 = vmatprep.mubr.bf16.mxu0 0
        %3388 = vmatmul.mubr.bf16.gmra.mxu0 %v2028
        %v3389 = vpop.f32.mrf.mxu0
        %v3390 = vadd.f32 0.0, %v3389
        %v3391 = vpop.f32.mrf.mxu0
        %v3392 = vpop.f32.mrf.mxu0
        %v3393 = vadd.f32 0.0, %v3392
        %v3394 = vpop.f32.mrf.mxu0
        %3395 = vmatprep.mubr.bf16.mxu0 0
        %3396 = vmatmul.mubr.bf16.gmra.mxu0 %v2031
        %v3397 = vpop.f32.mrf.mxu0
        %v3398 = vadd.f32 0.0, %v3397
        %v3399 = vpop.f32.mrf.mxu0
        %v3400 = vpop.f32.mrf.mxu0
        %v3401 = vadd.f32 0.0, %v3400
        %v3402 = vpop.f32.mrf.mxu0
        %3403 = vmatprep.mubr.bf16.mxu0 0
        %3404 = vmatmul.mubr.bf16.gmra.mxu0 %v2034
        %v3405 = vpop.f32.mrf.mxu0
        %v3406 = vadd.f32 0.0, %v3405
        %v3407 = vpop.f32.mrf.mxu0
        %v3408 = vpop.f32.mrf.mxu0
        %v3409 = vadd.f32 0.0, %v3408
        %v3410 = vpop.f32.mrf.mxu0
        %3411 = vmatprep.mubr.bf16.mxu0 0
        %3412 = vmatmul.mubr.bf16.gmra.mxu0 %v2037
        %v3413 = vpop.f32.mrf.mxu0
        %v3414 = vadd.f32 0.0, %v3413
        %v3415 = vpop.f32.mrf.mxu0
        %v3416 = vpop.f32.mrf.mxu0
        %v3417 = vadd.f32 0.0, %v3416
        %v3418 = vpop.f32.mrf.mxu0
        %3419 = vmatprep.mubr.bf16.mxu0 0
        %3420 = vmatmul.mubr.bf16.gmra.mxu0 %v2040
        %v3421 = vpop.f32.mrf.mxu0
        %v3422 = vadd.f32 0.0, %v3421
        %v3423 = vpop.f32.mrf.mxu0
        %v3424 = vpop.f32.mrf.mxu0
        %v3425 = vadd.f32 0.0, %v3424
        %v3426 = vpop.f32.mrf.mxu0
        %3427 = vmatprep.mubr.bf16.mxu0 0
        %3428 = vmatmul.mubr.bf16.gmra.mxu0 %v2659
        %v3429 = vpop.f32.mrf.mxu0
        %v3430 = vadd.f32 0.0, %v3429
        %v3431 = vpop.f32.mrf.mxu0
        %v3432 = vpop.f32.mrf.mxu0
        %v3433 = vadd.f32 0.0, %v3432
        %v3434 = vpop.f32.mrf.mxu0
        %3435 = vmatprep.mubr.bf16.mxu0 0
        %3436 = vmatmul.mubr.bf16.gmra.mxu0 %v3278
        %v3437 = vpop.f32.mrf.mxu0
        %v3438 = vadd.f32 0.0, %v3437
        %v3439 = vpop.f32.mrf.mxu0
        %v3440 = vpop.f32.mrf.mxu0
        %v3441 = vadd.f32 0.0, %v3440
        %v3442 = vpop.f32.mrf.mxu0
        %3443 = vdwg.mxu0
        %v3444 = vadd.f32 %v3238, %v3318
        %v3445 = vadd.f32 %v3239, %v3321
        %v3446 = vadd.f32 %v3240, %v3326
        %v3447 = vadd.f32 %v3241, %v3329
        %v3448 = vadd.f32 %v3242, %v3334
        %v3449 = vadd.f32 %v3243, %v3337
        %v3450 = vadd.f32 %v3244, %v3342
        %v3451 = vadd.f32 %v3245, %v3345
        %v3452 = vadd.f32 %v3246, %v3350
        %v3453 = vadd.f32 %v3247, %v3353
        %v3454 = vadd.f32 %v3248, %v3358
        %v3455 = vadd.f32 %v3249, %v3361
        %v3456 = vadd.f32 %v3250, %v3366
        %v3457 = vadd.f32 %v3251, %v3369
        %v3458 = vadd.f32 %v3252, %v3374
        %v3459 = vadd.f32 %v3253, %v3377
        %v3460 = vadd.f32 %v3254, %v3382
        %v3461 = vadd.f32 %v3255, %v3385
        %v3462 = vadd.f32 %v3256, %v3390
        %v3463 = vadd.f32 %v3257, %v3393
        %v3464 = vadd.f32 %v3258, %v3398
        %v3465 = vadd.f32 %v3259, %v3401
        %v3466 = vadd.f32 %v3260, %v3406
        %v3467 = vadd.f32 %v3261, %v3409
        %v3468 = vadd.f32 %v3262, %v3414
        %v3469 = vadd.f32 %v3263, %v3417
        %v3470 = vadd.f32 %v3264, %v3422
        %v3471 = vadd.f32 %v3265, %v3425
        %v3472 = vadd.f32 %v3266, %v3430
        %v3473 = vadd.f32 %v3267, %v3433
        %v3474 = vadd.f32 %v3268, %v3438
        %v3475 = vadd.f32 %v3269, %v3441
        %v3476 = vld [vmem:[%s6] sm:$0x1]
        %v3478 = vlaneseq
        %v3479 = vshrl.u32 %v3478, 7
        %v3480 = vsub.s32 0, %v3479
        %v3481 = vrot.slane %v3476, %v3480
        %v3483 = vadd.f32 %v3444, %v3481
        %v3484 = vadd.f32 %v3445, %v3481
        %v3485 = vadd.f32 %v3446, %v3481
        %v3486 = vadd.f32 %v3447, %v3481
        %v3487 = vadd.f32 %v3448, %v3481
        %v3488 = vadd.f32 %v3449, %v3481
        %v3489 = vadd.f32 %v3450, %v3481
        %v3490 = vadd.f32 %v3451, %v3481
        %v3491 = vadd.f32 %v3452, %v3481
        %v3492 = vadd.f32 %v3453, %v3481
        %v3493 = vadd.f32 %v3454, %v3481
        %v3494 = vadd.f32 %v3455, %v3481
        %v3495 = vadd.f32 %v3456, %v3481
        %v3496 = vadd.f32 %v3457, %v3481
        %v3497 = vadd.f32 %v3458, %v3481
        %v3498 = vadd.f32 %v3459, %v3481
        %v3499 = vadd.f32 %v3460, %v3481
        %v3500 = vadd.f32 %v3461, %v3481
        %v3501 = vadd.f32 %v3462, %v3481
        %v3502 = vadd.f32 %v3463, %v3481
        %v3503 = vadd.f32 %v3464, %v3481
        %v3504 = vadd.f32 %v3465, %v3481
        %v3505 = vadd.f32 %v3466, %v3481
        %v3506 = vadd.f32 %v3467, %v3481
        %v3507 = vadd.f32 %v3468, %v3481
        %v3508 = vadd.f32 %v3469, %v3481
        %v3509 = vadd.f32 %v3470, %v3481
        %v3510 = vadd.f32 %v3471, %v3481
        %v3511 = vadd.f32 %v3472, %v3481
        %v3512 = vadd.f32 %v3473, %v3481
        %v3513 = vadd.f32 %v3474, %v3481
        %v3514 = vadd.f32 %v3475, %v3481
        %v3515 = vmax.f32 %v3483, 0.0
        %v3516 = vmax.f32 %v3484, 0.0
        %v3517 = vmax.f32 %v3485, 0.0
        %v3518 = vmax.f32 %v3486, 0.0
        %v3519 = vmax.f32 %v3487, 0.0
        %v3520 = vmax.f32 %v3488, 0.0
        %v3521 = vmax.f32 %v3489, 0.0
        %v3522 = vmax.f32 %v3490, 0.0
        %v3523 = vmax.f32 %v3491, 0.0
        %v3524 = vmax.f32 %v3492, 0.0
        %v3525 = vmax.f32 %v3493, 0.0
        %v3526 = vmax.f32 %v3494, 0.0
        %v3527 = vmax.f32 %v3495, 0.0
        %v3528 = vmax.f32 %v3496, 0.0
        %v3529 = vmax.f32 %v3497, 0.0
        %v3530 = vmax.f32 %v3498, 0.0
        %v3531 = vmax.f32 %v3499, 0.0
        %v3532 = vmax.f32 %v3500, 0.0
        %v3533 = vmax.f32 %v3501, 0.0
        %v3534 = vmax.f32 %v3502, 0.0
        %v3535 = vmax.f32 %v3503, 0.0
        %v3536 = vmax.f32 %v3504, 0.0
        %v3537 = vmax.f32 %v3505, 0.0
        %v3538 = vmax.f32 %v3506, 0.0
        %v3539 = vmax.f32 %v3507, 0.0
        %v3540 = vmax.f32 %v3508, 0.0
        %v3541 = vmax.f32 %v3509, 0.0
        %v3542 = vmax.f32 %v3510, 0.0
        %v3543 = vmax.f32 %v3511, 0.0
        %v3544 = vmax.f32 %v3512, 0.0
        %v3545 = vmax.f32 %v3513, 0.0
        %v3546 = vmax.f32 %v3514, 0.0
        %v3547 = vpack.c.bf16 %v3516, %v3515
        %v3548 = vpack.c.bf16 %v3518, %v3517
        %v3549 = vpack.c.bf16 %v3520, %v3519
        %v3550 = vpack.c.bf16 %v3522, %v3521
        %v3551 = vpack.c.bf16 %v3524, %v3523
        %v3552 = vpack.c.bf16 %v3526, %v3525
        %v3553 = vpack.c.bf16 %v3528, %v3527
        %v3554 = vpack.c.bf16 %v3530, %v3529
        %v3555 = vpack.c.bf16 %v3532, %v3531
        %v3556 = vpack.c.bf16 %v3534, %v3533
        %v3557 = vpack.c.bf16 %v3536, %v3535
        %v3558 = vpack.c.bf16 %v3538, %v3537
        %v3559 = vpack.c.bf16 %v3540, %v3539
        %v3560 = vpack.c.bf16 %v3542, %v3541
        %v3561 = vpack.c.bf16 %v3544, %v3543
        %v3562 = vpack.c.bf16 %v3546, %v3545
        %v3563 = vld [vmem:[%s7] sm:$0x3]
        %v3564 = vld [vmem:[%s8] sm:$0x1]
        %v3566 = vlaneseq
        %v3567 = vshrl.u32 %v3566, 7
        %v3568 = vsub.s32 0, %v3567
        %v3569 = vrot.slane %v3564, %v3568
        %v3572 = vsel %vm1501, %v3547, 0
        %v3575 = vsel %vm1501, %v3548, 0
        %v3578 = vsel %vm1501, %v3549, 0
        %v3581 = vsel %vm1501, %v3550, 0
        %v3584 = vsel %vm1501, %v3551, 0
        %v3587 = vsel %vm1501, %v3552, 0
        %v3590 = vsel %vm1501, %v3553, 0
        %v3593 = vsel %vm1501, %v3554, 0
        %v3596 = vsel %vm1501, %v3555, 0
        %v3599 = vsel %vm1501, %v3556, 0
        %v3602 = vsel %vm1501, %v3557, 0
        %v3605 = vsel %vm1501, %v3558, 0
        %v3608 = vsel %vm1501, %v3559, 0
        %v3611 = vsel %vm1501, %v3560, 0
        %v3614 = vsel %vm1501, %v3561, 0
        %v3617 = vsel %vm1501, %v3562, 0
        %v3620 = vsel %vm1550, %v3563, 0
        %3622 = vmatprep.subr.bf16.mxu0 0
        %3623 = vmatpush1.bf16.msra.mxu0 0
        %3624 = vmatprep.subr.bf16.mxu0 0
        %3625 = vmatpush1.bf16.msra.mxu0 0
        %3626 = vmatprep.subr.bf16.mxu0 0
        %3627 = vmatpush1.bf16.msra.mxu0 0
        %3628 = vmatprep.subr.bf16.mxu0 0
        %3629 = vmatpush1.bf16.msra.mxu0 0
        %3630 = vmatprep.subr.bf16.mxu0 0
        %3631 = vmatpush1.bf16.msra.mxu0 0
        %3632 = vmatprep.subr.bf16.mxu0 0
        %3633 = vmatpush1.bf16.msra.mxu0 0
        %3634 = vmatprep.subr.bf16.mxu0 0
        %3635 = vmatpush1.bf16.msra.mxu0 0
        %3636 = vmatprep.subr.bf16.mxu0 0
        %3637 = vmatpush1.bf16.msra.mxu0 %v3620
        %3638 = vmatprep.subr.bf16.mxu0 0
        %3639 = vmatpush2.bf16.msra.mxu0 0
        %3640 = vmatprep.subr.bf16.mxu0 0
        %3641 = vmatpush2.bf16.msra.mxu0 0
        %3642 = vmatprep.subr.bf16.mxu0 0
        %3643 = vmatpush2.bf16.msra.mxu0 0
        %3644 = vmatprep.subr.bf16.mxu0 0
        %3645 = vmatpush2.bf16.msra.mxu0 0
        %3646 = vmatprep.subr.bf16.mxu0 0
        %3647 = vmatpush2.bf16.msra.mxu0 0
        %3648 = vmatprep.subr.bf16.mxu0 0
        %3649 = vmatpush2.bf16.msra.mxu0 0
        %3650 = vmatprep.subr.bf16.mxu0 0
        %3651 = vmatpush2.bf16.msra.mxu0 0
        %3652 = vmatprep.subr.bf16.mxu0 0
        %3653 = vmatpush2.bf16.msra.mxu0 0
        %3654 = vmatprep.mubr.bf16.mxu0 0
        %3655 = vmatmul.mubr.bf16.gmra.mxu0 %v3572
        %v3656 = vpop.f32.mrf.mxu0
        %v3657 = vadd.f32 %v3569, %v3656
        %v3658 = vpop.f32.mrf.mxu0
        %v3659 = vpop.f32.mrf.mxu0
        %v3660 = vadd.f32 %v3569, %v3659
        %v3661 = vpop.f32.mrf.mxu0
        %3662 = vmatprep.mubr.bf16.mxu0 0
        %3663 = vmatmul.mubr.bf16.gmra.mxu0 %v3575
        %v3664 = vpop.f32.mrf.mxu0
        %v3665 = vadd.f32 %v3569, %v3664
        %v3666 = vpop.f32.mrf.mxu0
        %v3667 = vpop.f32.mrf.mxu0
        %v3668 = vadd.f32 %v3569, %v3667
        %v3669 = vpop.f32.mrf.mxu0
        %3670 = vmatprep.mubr.bf16.mxu0 0
        %3671 = vmatmul.mubr.bf16.gmra.mxu0 %v3578
        %v3672 = vpop.f32.mrf.mxu0
        %v3673 = vadd.f32 %v3569, %v3672
        %v3674 = vpop.f32.mrf.mxu0
        %v3675 = vpop.f32.mrf.mxu0
        %v3676 = vadd.f32 %v3569, %v3675
        %v3677 = vpop.f32.mrf.mxu0
        %3678 = vmatprep.mubr.bf16.mxu0 0
        %3679 = vmatmul.mubr.bf16.gmra.mxu0 %v3581
        %v3680 = vpop.f32.mrf.mxu0
        %v3681 = vadd.f32 %v3569, %v3680
        %v3682 = vpop.f32.mrf.mxu0
        %v3683 = vpop.f32.mrf.mxu0
        %v3684 = vadd.f32 %v3569, %v3683
        %v3685 = vpop.f32.mrf.mxu0
        %3686 = vmatprep.mubr.bf16.mxu0 0
        %3687 = vmatmul.mubr.bf16.gmra.mxu0 %v3584
        %v3688 = vpop.f32.mrf.mxu0
        %v3689 = vadd.f32 %v3569, %v3688
        %v3690 = vpop.f32.mrf.mxu0
        %v3691 = vpop.f32.mrf.mxu0
        %v3692 = vadd.f32 %v3569, %v3691
        %v3693 = vpop.f32.mrf.mxu0
        %3694 = vmatprep.mubr.bf16.mxu0 0
        %3695 = vmatmul.mubr.bf16.gmra.mxu0 %v3587
        %v3696 = vpop.f32.mrf.mxu0
        %v3697 = vadd.f32 %v3569, %v3696
        %v3698 = vpop.f32.mrf.mxu0
        %v3699 = vpop.f32.mrf.mxu0
        %v3700 = vadd.f32 %v3569, %v3699
        %v3701 = vpop.f32.mrf.mxu0
        %3702 = vmatprep.mubr.bf16.mxu0 0
        %3703 = vmatmul.mubr.bf16.gmra.mxu0 %v3590
        %v3704 = vpop.f32.mrf.mxu0
        %v3705 = vadd.f32 %v3569, %v3704
        %v3706 = vpop.f32.mrf.mxu0
        %v3707 = vpop.f32.mrf.mxu0
        %v3708 = vadd.f32 %v3569, %v3707
        %v3709 = vpop.f32.mrf.mxu0
        %3710 = vmatprep.mubr.bf16.mxu0 0
        %3711 = vmatmul.mubr.bf16.gmra.mxu0 %v3593
        %v3712 = vpop.f32.mrf.mxu0
        %v3713 = vadd.f32 %v3569, %v3712
        %v3714 = vpop.f32.mrf.mxu0
        %v3715 = vpop.f32.mrf.mxu0
        %v3716 = vadd.f32 %v3569, %v3715
        %v3717 = vpop.f32.mrf.mxu0
        %3718 = vmatprep.mubr.bf16.mxu0 0
        %3719 = vmatmul.mubr.bf16.gmra.mxu0 %v3596
        %v3720 = vpop.f32.mrf.mxu0
        %v3721 = vadd.f32 %v3569, %v3720
        %v3722 = vpop.f32.mrf.mxu0
        %v3723 = vpop.f32.mrf.mxu0
        %v3724 = vadd.f32 %v3569, %v3723
        %v3725 = vpop.f32.mrf.mxu0
        %3726 = vmatprep.mubr.bf16.mxu0 0
        %3727 = vmatmul.mubr.bf16.gmra.mxu0 %v3599
        %v3728 = vpop.f32.mrf.mxu0
        %v3729 = vadd.f32 %v3569, %v3728
        %v3730 = vpop.f32.mrf.mxu0
        %v3731 = vpop.f32.mrf.mxu0
        %v3732 = vadd.f32 %v3569, %v3731
        %v3733 = vpop.f32.mrf.mxu0
        %3734 = vmatprep.mubr.bf16.mxu0 0
        %3735 = vmatmul.mubr.bf16.gmra.mxu0 %v3602
        %v3736 = vpop.f32.mrf.mxu0
        %v3737 = vadd.f32 %v3569, %v3736
        %v3738 = vpop.f32.mrf.mxu0
        %v3739 = vpop.f32.mrf.mxu0
        %v3740 = vadd.f32 %v3569, %v3739
        %v3741 = vpop.f32.mrf.mxu0
        %3742 = vmatprep.mubr.bf16.mxu0 0
        %3743 = vmatmul.mubr.bf16.gmra.mxu0 %v3605
        %v3744 = vpop.f32.mrf.mxu0
        %v3745 = vadd.f32 %v3569, %v3744
        %v3746 = vpop.f32.mrf.mxu0
        %v3747 = vpop.f32.mrf.mxu0
        %v3748 = vadd.f32 %v3569, %v3747
        %v3749 = vpop.f32.mrf.mxu0
        %3750 = vmatprep.mubr.bf16.mxu0 0
        %3751 = vmatmul.mubr.bf16.gmra.mxu0 %v3608
        %v3752 = vpop.f32.mrf.mxu0
        %v3753 = vadd.f32 %v3569, %v3752
        %v3754 = vpop.f32.mrf.mxu0
        %v3755 = vpop.f32.mrf.mxu0
        %v3756 = vadd.f32 %v3569, %v3755
        %v3757 = vpop.f32.mrf.mxu0
        %3758 = vmatprep.mubr.bf16.mxu0 0
        %3759 = vmatmul.mubr.bf16.gmra.mxu0 %v3611
        %v3760 = vpop.f32.mrf.mxu0
        %v3761 = vadd.f32 %v3569, %v3760
        %v3762 = vpop.f32.mrf.mxu0
        %v3763 = vpop.f32.mrf.mxu0
        %v3764 = vadd.f32 %v3569, %v3763
        %v3765 = vpop.f32.mrf.mxu0
        %3766 = vmatprep.mubr.bf16.mxu0 0
        %3767 = vmatmul.mubr.bf16.gmra.mxu0 %v3614
        %v3768 = vpop.f32.mrf.mxu0
        %v3769 = vadd.f32 %v3569, %v3768
        %v3770 = vpop.f32.mrf.mxu0
        %v3771 = vpop.f32.mrf.mxu0
        %v3772 = vadd.f32 %v3569, %v3771
        %v3773 = vpop.f32.mrf.mxu0
        %3774 = vmatprep.mubr.bf16.mxu0 0
        %3775 = vmatmul.mubr.bf16.gmra.mxu0 %v3617
        %v3776 = vpop.f32.mrf.mxu0
        %v3777 = vadd.f32 %v3569, %v3776
        %v3778 = vpop.f32.mrf.mxu0
        %v3779 = vpop.f32.mrf.mxu0
        %v3780 = vadd.f32 %v3569, %v3779
        %v3781 = vpop.f32.mrf.mxu0
        %3782 = vdwg.mxu0
        %v3783 = vld [vmem:[%s416] sm:$0xf]
        %v3784 = vld [vmem:[%s416 + $0x4] sm:$0xf]
        %v3785 = vld [vmem:[%s416 + $0x8] sm:$0xf]
        %v3786 = vld [vmem:[%s416 + $0xc] sm:$0xf]
        %v3787 = vld [vmem:[%s416 + $0x10] sm:$0xf]
        %v3788 = vld [vmem:[%s416 + $0x14] sm:$0xf]
        %v3789 = vld [vmem:[%s416 + $0x18] sm:$0xf]
        %v3790 = vld [vmem:[%s416 + $0x1c] sm:$0xf]
        %v3791 = vld [vmem:[%s416 + $0x20] sm:$0xf]
        %v3792 = vld [vmem:[%s416 + $0x24] sm:$0xf]
        %v3793 = vld [vmem:[%s416 + $0x28] sm:$0xf]
        %v3794 = vld [vmem:[%s416 + $0x2c] sm:$0xf]
        %v3795 = vld [vmem:[%s416 + $0x30] sm:$0xf]
        %v3796 = vld [vmem:[%s416 + $0x34] sm:$0xf]
        %v3797 = vld [vmem:[%s416 + $0x38] sm:$0xf]
        %v3798 = vld [vmem:[%s416 + $0x3c] sm:$0xf]
        %v3799 = vld [vmem:[%s416 + $0x40] sm:$0xf]
        %v3800 = vld [vmem:[%s416 + $0x44] sm:$0xf]
        %v3801 = vld [vmem:[%s416 + $0x48] sm:$0xf]
        %v3802 = vld [vmem:[%s416 + $0x4c] sm:$0xf]
        %v3803 = vld [vmem:[%s416 + $0x50] sm:$0xf]
        %v3804 = vld [vmem:[%s416 + $0x54] sm:$0xf]
        %v3805 = vld [vmem:[%s416 + $0x58] sm:$0xf]
        %v3806 = vld [vmem:[%s416 + $0x5c] sm:$0xf]
        %v3807 = vld [vmem:[%s416 + $0x60] sm:$0xf]
        %v3808 = vld [vmem:[%s416 + $0x64] sm:$0xf]
        %v3809 = vld [vmem:[%s416 + $0x68] sm:$0xf]
        %v3810 = vld [vmem:[%s416 + $0x6c] sm:$0xf]
        %v3811 = vld [vmem:[%s416 + $0x70] sm:$0xf]
        %v3812 = vld [vmem:[%s416 + $0x74] sm:$0xf]
        %v3813 = vld [vmem:[%s416 + $0x78] sm:$0xf]
        %v3814 = vld [vmem:[%s416 + $0x7c] sm:$0xf]
        %v3815 = vunpack.c.l.bf16 %v3783
        %v3816 = vunpack.c.l.bf16 %v3784
        %v3817 = vunpack.c.l.bf16 %v3785
        %v3818 = vunpack.c.l.bf16 %v3786
        %v3819 = vunpack.c.l.bf16 %v3787
        %v3820 = vunpack.c.l.bf16 %v3788
        %v3821 = vunpack.c.l.bf16 %v3789
        %v3822 = vunpack.c.l.bf16 %v3790
        %v3823 = vunpack.c.l.bf16 %v3791
        %v3824 = vunpack.c.l.bf16 %v3792
        %v3825 = vunpack.c.l.bf16 %v3793
        %v3826 = vunpack.c.l.bf16 %v3794
        %v3827 = vunpack.c.l.bf16 %v3795
        %v3828 = vunpack.c.l.bf16 %v3796
        %v3829 = vunpack.c.l.bf16 %v3797
        %v3830 = vunpack.c.l.bf16 %v3798
        %v3831 = vunpack.c.l.bf16 %v3799
        %v3832 = vunpack.c.l.bf16 %v3800
        %v3833 = vunpack.c.l.bf16 %v3801
        %v3834 = vunpack.c.l.bf16 %v3802
        %v3835 = vunpack.c.l.bf16 %v3803
        %v3836 = vunpack.c.l.bf16 %v3804
        %v3837 = vunpack.c.l.bf16 %v3805
        %v3838 = vunpack.c.l.bf16 %v3806
        %v3839 = vunpack.c.l.bf16 %v3807
        %v3840 = vunpack.c.l.bf16 %v3808
        %v3841 = vunpack.c.l.bf16 %v3809
        %v3842 = vunpack.c.l.bf16 %v3810
        %v3843 = vunpack.c.l.bf16 %v3811
        %v3844 = vunpack.c.l.bf16 %v3812
        %v3845 = vunpack.c.l.bf16 %v3813
        %v3846 = vunpack.c.l.bf16 %v3814
        %v3847 = vadd.f32 %v3657, %v3815
        %v3848 = vadd.f32 %v3660, %v3816
        %v3849 = vadd.f32 %v3665, %v3817
        %v3850 = vadd.f32 %v3668, %v3818
        %v3851 = vadd.f32 %v3673, %v3819
        %v3852 = vadd.f32 %v3676, %v3820
        %v3853 = vadd.f32 %v3681, %v3821
        %v3854 = vadd.f32 %v3684, %v3822
        %v3855 = vadd.f32 %v3689, %v3823
        %v3856 = vadd.f32 %v3692, %v3824
        %v3857 = vadd.f32 %v3697, %v3825
        %v3858 = vadd.f32 %v3700, %v3826
        %v3859 = vadd.f32 %v3705, %v3827
        %v3860 = vadd.f32 %v3708, %v3828
        %v3861 = vadd.f32 %v3713, %v3829
        %v3862 = vadd.f32 %v3716, %v3830
        %v3863 = vadd.f32 %v3721, %v3831
        %v3864 = vadd.f32 %v3724, %v3832
        %v3865 = vadd.f32 %v3729, %v3833
        %v3866 = vadd.f32 %v3732, %v3834
        %v3867 = vadd.f32 %v3737, %v3835
        %v3868 = vadd.f32 %v3740, %v3836
        %v3869 = vadd.f32 %v3745, %v3837
        %v3870 = vadd.f32 %v3748, %v3838
        %v3871 = vadd.f32 %v3753, %v3839
        %v3872 = vadd.f32 %v3756, %v3840
        %v3873 = vadd.f32 %v3761, %v3841
        %v3874 = vadd.f32 %v3764, %v3842
        %v3875 = vadd.f32 %v3769, %v3843
        %v3876 = vadd.f32 %v3772, %v3844
        %v3877 = vadd.f32 %v3777, %v3845
        %v3878 = vadd.f32 %v3780, %v3846
        %v3879 = vmax.f32 %v3847, 0.0
        %v3880 = vmax.f32 %v3848, 0.0
        %v3881 = vmax.f32 %v3849, 0.0
        %v3882 = vmax.f32 %v3850, 0.0
        %v3883 = vmax.f32 %v3851, 0.0
        %v3884 = vmax.f32 %v3852, 0.0
        %v3885 = vmax.f32 %v3853, 0.0
        %v3886 = vmax.f32 %v3854, 0.0
        %v3887 = vmax.f32 %v3855, 0.0
        %v3888 = vmax.f32 %v3856, 0.0
        %v3889 = vmax.f32 %v3857, 0.0
        %v3890 = vmax.f32 %v3858, 0.0
        %v3891 = vmax.f32 %v3859, 0.0
        %v3892 = vmax.f32 %v3860, 0.0
        %v3893 = vmax.f32 %v3861, 0.0
        %v3894 = vmax.f32 %v3862, 0.0
        %v3895 = vmax.f32 %v3863, 0.0
        %v3896 = vmax.f32 %v3864, 0.0
        %v3897 = vmax.f32 %v3865, 0.0
        %v3898 = vmax.f32 %v3866, 0.0
        %v3899 = vmax.f32 %v3867, 0.0
        %v3900 = vmax.f32 %v3868, 0.0
        %v3901 = vmax.f32 %v3869, 0.0
        %v3902 = vmax.f32 %v3870, 0.0
        %v3903 = vmax.f32 %v3871, 0.0
        %v3904 = vmax.f32 %v3872, 0.0
        %v3905 = vmax.f32 %v3873, 0.0
        %v3906 = vmax.f32 %v3874, 0.0
        %v3907 = vmax.f32 %v3875, 0.0
        %v3908 = vmax.f32 %v3876, 0.0
        %v3909 = vmax.f32 %v3877, 0.0
        %v3910 = vmax.f32 %v3878, 0.0
        %v3911 = vpack.c.bf16 %v3880, %v3879
        %v3912 = vpack.c.bf16 %v3882, %v3881
        %v3913 = vpack.c.bf16 %v3884, %v3883
        %v3914 = vpack.c.bf16 %v3886, %v3885
        %v3915 = vpack.c.bf16 %v3888, %v3887
        %v3916 = vpack.c.bf16 %v3890, %v3889
        %v3917 = vpack.c.bf16 %v3892, %v3891
        %v3918 = vpack.c.bf16 %v3894, %v3893
        %v3919 = vpack.c.bf16 %v3896, %v3895
        %v3920 = vpack.c.bf16 %v3898, %v3897
        %v3921 = vpack.c.bf16 %v3900, %v3899
        %v3922 = vpack.c.bf16 %v3902, %v3901
        %v3923 = vpack.c.bf16 %v3904, %v3903
        %v3924 = vpack.c.bf16 %v3906, %v3905
        %v3925 = vpack.c.bf16 %v3908, %v3907
        %v3926 = vpack.c.bf16 %v3910, %v3909
        %v3943 = vunpack.c.l.b16 %v3911
        %v3944 = vunpack.c.h.b16 %v3911
        %v3945 = vunpack.c.l.b16 %v3912
        %v3946 = vunpack.c.h.b16 %v3912
        %v3947 = vunpack.c.l.b16 %v3913
        %v3948 = vunpack.c.h.b16 %v3913
        %v3949 = vunpack.c.l.b16 %v3914
        %v3950 = vunpack.c.h.b16 %v3914
        %v3951 = vunpack.c.l.b16 %v3915
        %v3952 = vunpack.c.h.b16 %v3915
        %v3953 = vunpack.c.l.b16 %v3916
        %v3954 = vunpack.c.h.b16 %v3916
        %v3955 = vunpack.c.l.b16 %v3917
        %v3956 = vunpack.c.h.b16 %v3917
        %v3957 = vunpack.c.l.b16 %v3918
        %v3958 = vunpack.c.h.b16 %v3918
        %v3959 = vunpack.c.l.b16 %v3919
        %v3960 = vunpack.c.h.b16 %v3919
        %v3961 = vunpack.c.l.b16 %v3920
        %v3962 = vunpack.c.h.b16 %v3920
        %v3963 = vunpack.c.l.b16 %v3921
        %v3964 = vunpack.c.h.b16 %v3921
        %v3965 = vunpack.c.l.b16 %v3922
        %v3966 = vunpack.c.h.b16 %v3922
        %v3967 = vunpack.c.l.b16 %v3923
        %v3968 = vunpack.c.h.b16 %v3923
        %v3969 = vunpack.c.l.b16 %v3924
        %v3970 = vunpack.c.h.b16 %v3924
        %v3971 = vunpack.c.l.b16 %v3925
        %v3972 = vunpack.c.h.b16 %v3925
        %v3973 = vunpack.c.l.b16 %v3926
        %v3974 = vunpack.c.h.b16 %v3926
        %v3975 = vpack.c.b16 %v3943, %v3943
        %v3976 = vpack.c.b16 %v3944, %v3944
        %v3977 = vpack.c.b16 %v3945, %v3945
        %v3978 = vpack.c.b16 %v3946, %v3946
        %v3979 = vpack.c.b16 %v3947, %v3947
        %v3980 = vpack.c.b16 %v3948, %v3948
        %v3981 = vpack.c.b16 %v3949, %v3949
        %v3982 = vpack.c.b16 %v3950, %v3950
        %v3983 = vpack.c.b16 %v3951, %v3951
        %v3984 = vpack.c.b16 %v3952, %v3952
        %v3985 = vpack.c.b16 %v3953, %v3953
        %v3986 = vpack.c.b16 %v3954, %v3954
        %v3987 = vpack.c.b16 %v3955, %v3955
        %v3988 = vpack.c.b16 %v3956, %v3956
        %v3989 = vpack.c.b16 %v3957, %v3957
        %v3990 = vpack.c.b16 %v3958, %v3958
        %v3991 = vpack.c.b16 %v3959, %v3959
        %v3992 = vpack.c.b16 %v3960, %v3960
        %v3993 = vpack.c.b16 %v3961, %v3961
        %v3994 = vpack.c.b16 %v3962, %v3962
        %v3995 = vpack.c.b16 %v3963, %v3963
        %v3996 = vpack.c.b16 %v3964, %v3964
        %v3997 = vpack.c.b16 %v3965, %v3965
        %v3998 = vpack.c.b16 %v3966, %v3966
        %v3999 = vpack.c.b16 %v3967, %v3967
        %v4000 = vpack.c.b16 %v3968, %v3968
        %v4001 = vpack.c.b16 %v3969, %v3969
        %v4002 = vpack.c.b16 %v3970, %v3970
        %v4003 = vpack.c.b16 %v3971, %v3971
        %v4004 = vpack.c.b16 %v3972, %v3972
        %v4005 = vpack.c.b16 %v3973, %v3973
        %v4006 = vpack.c.b16 %v3974, %v3974
        %vm4039 = vcmask 125952
        %4040 = vst.msk [vmem:[%s478] sm:$0xf] %vm4039, %v3975
        %4041 = vst.msk [vmem:[%s478 + $0x4] sm:$0xf] %vm4039, %v3976
        %4042 = vst.msk [vmem:[%s478 + $0x8] sm:$0xf] %vm4039, %v3977
        %4043 = vst.msk [vmem:[%s478 + $0xc] sm:$0xf] %vm4039, %v3978
        %4044 = vst.msk [vmem:[%s478 + $0x10] sm:$0xf] %vm4039, %v3979
        %4045 = vst.msk [vmem:[%s478 + $0x14] sm:$0xf] %vm4039, %v3980
        %4046 = vst.msk [vmem:[%s478 + $0x18] sm:$0xf] %vm4039, %v3981
        %4047 = vst.msk [vmem:[%s478 + $0x1c] sm:$0xf] %vm4039, %v3982
        %4048 = vst.msk [vmem:[%s478 + $0x20] sm:$0xf] %vm4039, %v3983
        %4049 = vst.msk [vmem:[%s478 + $0x24] sm:$0xf] %vm4039, %v3984
        %4050 = vst.msk [vmem:[%s478 + $0x28] sm:$0xf] %vm4039, %v3985
        %4051 = vst.msk [vmem:[%s478 + $0x2c] sm:$0xf] %vm4039, %v3986
        %4052 = vst.msk [vmem:[%s478 + $0x30] sm:$0xf] %vm4039, %v3987
        %4053 = vst.msk [vmem:[%s478 + $0x34] sm:$0xf] %vm4039, %v3988
        %4054 = vst.msk [vmem:[%s478 + $0x38] sm:$0xf] %vm4039, %v3989
        %4055 = vst.msk [vmem:[%s478 + $0x3c] sm:$0xf] %vm4039, %v3990
        %4056 = vst.msk [vmem:[%s478 + $0x40] sm:$0xf] %vm4039, %v3991
        %4057 = vst.msk [vmem:[%s478 + $0x44] sm:$0xf] %vm4039, %v3992
        %4058 = vst.msk [vmem:[%s478 + $0x48] sm:$0xf] %vm4039, %v3993
        %4059 = vst.msk [vmem:[%s478 + $0x4c] sm:$0xf] %vm4039, %v3994
        %4060 = vst.msk [vmem:[%s478 + $0x50] sm:$0xf] %vm4039, %v3995
        %4061 = vst.msk [vmem:[%s478 + $0x54] sm:$0xf] %vm4039, %v3996
        %4062 = vst.msk [vmem:[%s478 + $0x58] sm:$0xf] %vm4039, %v3997
        %4063 = vst.msk [vmem:[%s478 + $0x5c] sm:$0xf] %vm4039, %v3998
        %4064 = vst.msk [vmem:[%s478 + $0x60] sm:$0xf] %vm4039, %v3999
        %4065 = vst.msk [vmem:[%s478 + $0x64] sm:$0xf] %vm4039, %v4000
        %4066 = vst.msk [vmem:[%s478 + $0x68] sm:$0xf] %vm4039, %v4001
        %4067 = vst.msk [vmem:[%s478 + $0x6c] sm:$0xf] %vm4039, %v4002
        %4068 = vst.msk [vmem:[%s478 + $0x70] sm:$0xf] %vm4039, %v4003
        %4069 = vst.msk [vmem:[%s478 + $0x74] sm:$0xf] %vm4039, %v4004
        %4070 = vst.msk [vmem:[%s478 + $0x78] sm:$0xf] %vm4039, %v4005
        %4071 = vst.msk [vmem:[%s478 + $0x7c] sm:$0xf] %vm4039, %v4006
        %s4072 = sand.u32 %s277, 1
        %s4073 = scalar_lea.sflag [#allocation5], %s4072
        %s4074 = sand.u32 %s277, 1
        %s4075 = smul.addr %s4074, 128
        %s4076 = scalar_lea.vmem [#allocation9], %s4075
        // Predicated region
        $region85: #{tpu_custom_call.1} parent=55 // pred_check
          %p4077 = pneg %p287
        $region86: #{tpu_custom_call.1} parent=55 // pred_check_branch
          %4079 = sbr.rel (%p4077) target = $region88
        $region87: #{tpu_custom_call.1} parent=55 // pred_region
          %s4080 = smul.u32 16, %s34
          %s4082 = ssub.s32 2048, 2048
          %4083 = vsyncadd %s4073, %s4082
          %s4084 = smul.addr %s4080, 2
          %s4085 = smul.addr %s33, 32
          %s4086 = sadd.s32 %s4084, %s4085
          %s4087 = smul.addr %s4086, 64
          %s4088 = scalar_lea.hbm %s9, %s4087
          %s4089 = sshll.u32 %s4076, 4
          %s4090 = int_to_ptr.vmem [resolvable:$true] %s4089
          %4095 = dma.vmem_to_hbm [thread:$0]  %s4090, 2048, %s4088, %s4073, 64, 64, 4
        $region88: #{tpu_custom_call.1} parent=55 // pred_fallthru
          _
      $region56: #{tpu_custom_call.1} parent=5 // pred_fallthru
        _
      %p4096 = scmp.le.s32.totalorder 2, %s24
      // Predicated region
      $region89: #{tpu_custom_call.1} parent=5 // pred_check
        %p4097 = pneg %p4096
      $region90: #{tpu_custom_call.1} parent=5 // pred_check_branch
        %4099 = sbr.rel (%p4097) target = $region92
      $region91: #{tpu_custom_call.1} parent=5 // pred_region
        %s4100 = ssub.s32 %s24, 2
        // Predicated region
        $region93: #{tpu_custom_call.1} parent=91 // pred_check
          %p4101 = pneg %p293
        $region94: #{tpu_custom_call.1} parent=91 // pred_check_branch
          %4103 = sbr.rel (%p4101) target = $region96
        $region95: #{tpu_custom_call.1} parent=91 // pred_region
          %s4104 = sand.u32 %s278, 1
          %s4105 = scalar_lea.sflag [#allocation5], %s4104
          %s4106 = sand.u32 %s278, 1
          %s4107 = smul.addr %s4106, 128
          %s4108 = scalar_lea.vmem [#allocation9], %s4107
          %4109 = dma.done %s4105, 2048
        $region96: #{tpu_custom_call.1} parent=91 // pred_fallthru
          _
      $region92: #{tpu_custom_call.1} parent=5 // pred_fallthru
        _
    $region6: #{tpu_custom_call.1} parent=1 // loop_footer
      %s28 = sadd.s32 1, %s24
    $region7: #{tpu_custom_call.1} parent=1 // loop_footer_branch
      %23 = sbr.rel target = $region3
    $region8: #{tpu_custom_call.1} parent=1 // loop_exit
      _
    %4110 = vsyncpa [#allocation4], 1
    %s4111 = scalar_lea.sflag [#allocation4], 1
    %4112 = vsyncpa %s4111, 1
    %4113 = vsyncpa [#allocation7], 1
    %s4114 = scalar_lea.sflag [#allocation7], 1
    %4115 = vsyncpa %s4114, 1
    %4116 = vsyncpa [#allocation5], 1
    %s4117 = scalar_lea.sflag [#allocation5], 1
    %4118 = vsyncpa %s4117, 1

</llo_original>
